<compile_context>
chip_gen: v7x
topology: tpu7x:2x2x1
jax: 0.10.0
libtpu: 0.0.40
codegen_flags: <defaults>
</compile_context>

<pallas_src>
import functools
import math

import jax
import jax.numpy as jnp
from jax.experimental import pallas as pl
from jax.experimental.pallas import tpu as pltpu

# ---------------- hyper-params ("args") ----------------
N_AGENTS = 3
RNN_HIDDEN_DIM = 32
NN_HIDDEN_DIM = 32
AWARENESS_DIM = 8          # == d_model of the attention
VAR_FLOOR = 0.002
N_ACTIONS = 5
INPUT_SHAPE = 16
N_HEAD = 4
D_K = 32
D_V = 32
LATENT = N_AGENTS * AWARENESS_DIM      # 24
LOGF = math.log(VAR_FLOOR)

TB_MAX = 128               # max batch samples per grid step (rows = 3*TB)


# ---------------- the fused kernel ----------------
def _fused_kernel(*refs, compute_kld, tb):
    if compute_kld:
        (x_ref, hprev_ref, noise_ref,
         w1_ref, b1_ref, wxg_ref, bxg_ref, whg_ref, bhg_ref,
         hw_ref, hb_ref, aw2_ref, ab2_ref,
         wqkv_ref, sel3_ref, expm3_ref, wfcb_ref, g8_ref, gma_ref, bta_ref,
         w2b_ref, b2_ref, iw2b_ref, ib2b_ref,
         slab_ref, kld_ref) = refs
    else:
        (x_ref, hprev_ref, noise_ref,
         w1_ref, b1_ref, wxg_ref, bxg_ref, whg_ref, bhg_ref,
         hw_ref, hb_ref, aw2_ref, ab2_ref,
         wqkv_ref, sel3_ref, expm3_ref, wfcb_ref, g8_ref, gma_ref, bta_ref,
         w2b_ref, b2_ref,
         slab_ref, kld_ref) = refs

    f32 = jnp.float32
    H = RNN_HIDDEN_DIM

    # ---- mlp1 + ReLU ----
    x = jnp.dot(x_ref[...], w1_ref[...], preferred_element_type=f32) + b1_ref[...]
    x = jnp.maximum(x, 0.0)

    # ---- GRUCell (gate order r, z, n); no concat, two lane-dense matmuls ----
    h_prev = hprev_ref[...]
    xg = jnp.dot(x, wxg_ref[...], preferred_element_type=f32) + bxg_ref[...]
    hg = jnp.dot(h_prev, whg_ref[...], preferred_element_type=f32) + bhg_ref[...]
    r = jax.nn.sigmoid(xg[:, :H] + hg[:, :H])
    z = jax.nn.sigmoid(xg[:, H:2 * H] + hg[:, H:2 * H])
    n = jnp.tanh(xg[:, 2 * H:] + r * hg[:, 2 * H:])
    h = (1.0 - z) * n + z * h_prev

    # ---- every matmul consuming h as LHS fused into one 128-wide matmul ----
    # layout: [aw1(32) | w2a(5) | iwl(32, +infer b1) | iwr(32) | pad]
    hc = jnp.dot(h, hw_ref[...], preferred_element_type=f32) + hb_ref[...]
    a1 = hc[:, :H]
    qh = hc[:, H:H + N_ACTIONS]

    # ---- awareness encoder: (BN-folded) Linear -> LeakyReLU -> Linear ----
    a1 = jnp.where(a1 > 0, a1, 0.01 * a1)
    ap = jnp.dot(a1, aw2_ref[...], preferred_element_type=f32) + ab2_ref[...]
    a_mean = ap[:, :LATENT]
    lv1 = jnp.maximum(ap[:, LATENT:], LOGF)          # log(clamp(exp(x), floor))
    std1 = jnp.exp(0.5 * lv1)
    awareness = a_mean + std1 * noise_ref[...]       # Normal rsample

    # ---- multi-head self-attention, fully batched over (j, i, head) ----
    WREP = N_AGENTS * N_AGENTS * N_HEAD * D_K        # 1152
    DH3 = N_AGENTS * N_HEAD * D_V                    # 384
    NL = N_AGENTS * N_HEAD                           # 12
    qkv = jnp.dot(awareness, wqkv_ref[...], preferred_element_type=f32)  # (R, 3456)
    prod = qkv[:, :WREP] * qkv[:, WREP:2 * WREP]     # q_{i,h,d} * k_{j,h,d}
    logits = jnp.dot(prod, sel3_ref[...], preferred_element_type=f32)    # (R, 36)
    mx = jnp.maximum(jnp.maximum(logits[:, :NL], logits[:, NL:2 * NL]),
                     logits[:, 2 * NL:])
    e = jnp.exp(logits - jnp.concatenate([mx] * N_AGENTS, axis=1))
    denom = e[:, :NL] + e[:, NL:2 * NL] + e[:, 2 * NL:]
    inv = pl.reciprocal(denom, approx=True)
    probs = e * jnp.concatenate([inv] * N_AGENTS, axis=1)                # (R, 36)
    p_rep = jnp.dot(probs, expm3_ref[...], preferred_element_type=f32)   # (R, 1152)
    o_rep = p_rep * qkv[:, 2 * WREP:]
    o = o_rep[:, :DH3] + o_rep[:, DH3:2 * DH3] + o_rep[:, 2 * DH3:]      # (R, 384)

    fc = jnp.dot(o, wfcb_ref[...], preferred_element_type=f32)           # (R, 24)
    res = fc + awareness                                                 # residual
    mu = jnp.dot(res, g8_ref[...], preferred_element_type=f32)           # token mean
    cen = res - mu
    var = jnp.dot(cen * cen, g8_ref[...], preferred_element_type=f32)
    atten_out = cen * jax.lax.rsqrt(var + 1e-6) * gma_ref[...] + bta_ref[...]

    # ---- final Q head ----
    q = qh + jnp.dot(atten_out, w2b_ref[...], preferred_element_type=f32) + b2_ref[...]

    # ---- lane-dense output slab: [h(32) | q(5) | zeros] -> unmasked stores ----
    rows = x.shape[0]
    slab_ref[...] = jnp.concatenate(
        [h, q, jnp.zeros((rows, 128 - H - N_ACTIONS), f32)], axis=1)

    # ---- infer net + closed-form diagonal-Gaussian KLD (training mode) ----
    if compute_kld:
        hl = hc[:, H + N_ACTIONS:2 * H + N_ACTIONS]        # iwl . h  (+ infer b1)
        hr = hc[:, 2 * H + N_ACTIONS:3 * H + N_ACTIONS]    # iwr . h
        # rows are agent-major (a*tb + b): partner block j is contiguous.
        hrc = jnp.concatenate([hr[j * tb:(j + 1) * tb] for j in range(N_AGENTS)],
                              axis=1)                      # (tb, 96)
        pre = (jnp.concatenate([hl] * N_AGENTS, axis=1)
               + jnp.concatenate([hrc] * N_AGENTS, axis=0))            # (R, 96)
        act = jnp.where(pre > 0, pre, 0.01 * pre)
        ip = jnp.dot(act, iw2b_ref[...], preferred_element_type=f32) + ib2b_ref[...]
        mu2 = ip[:, :LATENT]
        lv2 = jnp.maximum(ip[:, LATENT:], LOGF)
        var1 = std1 * std1
        kterm = (0.5 * (lv2 - lv1)
                 + 0.5 * (var1 + (a_mean - mu2) ** 2) * jnp.exp(-lv2) - 0.5)
        ks = kterm[:tb] + kterm[tb:2 * tb] + kterm[2 * tb:]            # sum over i
        kld = jnp.sum(ks, axis=-1, keepdims=True) * (1.0 / (N_AGENTS * LATENT))
        kld_ref[...] = jnp.broadcast_to(kld, (tb, 128))
    else:
        kld_ref[...] = jnp.zeros(kld_ref.shape, kld_ref.dtype)


# ---------------- parameter construction / packing ----------------
def init_params(key):
    ks = jax.random.split(key, 24)
    f32 = jnp.float32

    def w(k, shape, scale=0.1):
        return (scale * jax.random.normal(k, shape)).astype(f32)

    p = {}
    p["mlp1_w"] = w(ks[0], (INPUT_SHAPE, RNN_HIDDEN_DIM))
    p["mlp1_b"] = w(ks[1], (1, RNN_HIDDEN_DIM))
    p["gru_wih"] = w(ks[2], (RNN_HIDDEN_DIM, 3 * RNN_HIDDEN_DIM))
    p["gru_bih"] = w(ks[3], (1, 3 * RNN_HIDDEN_DIM))
    p["gru_whh"] = w(ks[4], (RNN_HIDDEN_DIM, 3 * RNN_HIDDEN_DIM))
    p["gru_bhh"] = w(ks[5], (1, 3 * RNN_HIDDEN_DIM))
    p["ae_w1"] = w(ks[6], (RNN_HIDDEN_DIM, NN_HIDDEN_DIM))
    p["ae_b1"] = w(ks[7], (1, NN_HIDDEN_DIM))
    p["ae_w2"] = w(ks[8], (NN_HIDDEN_DIM, 2 * LATENT))
    p["ae_b2"] = w(ks[9], (1, 2 * LATENT))
    p["in_w1"] = w(ks[10], (2 * RNN_HIDDEN_DIM, NN_HIDDEN_DIM))
    p["in_b1"] = w(ks[11], (1, NN_HIDDEN_DIM))
    p["in_w2"] = w(ks[12], (NN_HIDDEN_DIM, 2 * AWARENESS_DIM))
    p["in_b2"] = w(ks[13], (1, 2 * AWARENESS_DIM))
    p["mlp2_w"] = w(ks[14], (RNN_HIDDEN_DIM + LATENT, N_ACTIONS))
    p["mlp2_b"] = w(ks[15], (1, N_ACTIONS))
    p["wq"] = w(ks[16], (AWARENESS_DIM, N_HEAD * D_K))
    p["wk"] = w(ks[17], (AWARENESS_DIM, N_HEAD * D_K))
    p["wv"] = w(ks[18], (AWARENESS_DIM, N_HEAD * D_V))
    p["wfc"] = w(ks[19], (N_HEAD * D_V, AWARENESS_DIM))
    p["ln_gamma"] = jnp.ones((1, AWARENESS_DIM), f32)
    p["ln_beta"] = jnp.zeros((1, AWARENESS_DIM), f32)
    for pref in ("ae_bn", "in_bn"):
        p[pref + "_gamma"] = jnp.ones((NN_HIDDEN_DIM,), f32)
        p[pref + "_beta"] = jnp.zeros((NN_HIDDEN_DIM,), f32)
        p[pref + "_mean"] = jnp.zeros((NN_HIDDEN_DIM,), f32)
        p[pref + "_var"] = jnp.ones((NN_HIDDEN_DIM,), f32)
    return p


def _fold_bn(wt, b, gamma, beta, mean, var, eps=1e-5):
    s = gamma / jnp.sqrt(var + eps)
    return wt * s[None, :], b * s[None, :] + (beta - mean * s)[None, :]


def pack_params(p):
    """Pre-pack / pre-fold weights into the layout the fused kernel expects."""
    f32 = jnp.float32
    H, A = RNN_HIDDEN_DIM, N_ACTIONS
    pp = {}
    pp["w1"], pp["b1"] = p["mlp1_w"], p["mlp1_b"]
    pp["wxg"], pp["bxg"] = p["gru_wih"], p["gru_bih"]
    pp["whg"], pp["bhg"] = p["gru_whh"], p["gru_bhh"]

    aw1, ab1 = _fold_bn(p["ae_w1"], p["ae_b1"], p["ae_bn_gamma"],
                        p["ae_bn_beta"], p["ae_bn_mean"], p["ae_bn_var"])
    pp["aw2"], pp["ab2"] = p["ae_w2"], p["ae_b2"]

    iw1, ib1 = _fold_bn(p["in_w1"], p["in_b1"], p["in_bn_gamma"],
                        p["in_bn_beta"], p["in_bn_mean"], p["in_bn_var"])
    iwl, iwr = iw1[:H], iw1[H:]
    w2a = p["mlp2_w"][:H]                        # (32, 5)
    pp["w2b"] = p["mlp2_w"][H:]                  # (24, 5)
    pp["b2"] = p["mlp2_b"]

    # fused h-consumer weight: [aw1 | w2a | iwl | iwr] padded to 128 lanes
    hw = jnp.concatenate([aw1, w2a, iwl, iwr], axis=1)                   # (32, 101)
    hb = jnp.concatenate([ab1, jnp.zeros((1, A), f32), ib1,
                          jnp.zeros((1, H), f32)], axis=1)               # (1, 101)
    pad = 128 - hw.shape[1]
    pp["hw"] = jnp.pad(hw, ((0, 0), (0, pad)))
    pp["hb"] = jnp.pad(hb, ((0, 0), (0, pad)))

    # attention: QKV with the x3 target-token replication folded into the weight
    eye3 = jnp.eye(N_AGENTS, dtype=f32)
    scale = 1.0 / float(D_K) ** 0.5
    qw = jnp.tile(jnp.kron(eye3, p["wq"] * scale), (1, N_AGENTS))        # (24, 1152)
    kw = jnp.kron(eye3, jnp.tile(p["wk"], (1, N_AGENTS)))                # (24, 1152)
    vw = jnp.kron(eye3, jnp.tile(p["wv"], (1, N_AGENTS)))                # (24, 1152)
    pp["wqkv"] = jnp.concatenate([qw, kw, vw], axis=1)                   # (24, 3456)
    sel3 = jnp.kron(jnp.eye(N_AGENTS * N_AGENTS * N_HEAD, dtype=f32),
                    jnp.ones((D_K, 1), f32))                             # (1152, 36)
    pp["sel3"], pp["expm3"] = sel3, sel3.T
    pp["wfcb"] = jnp.kron(eye3, p["wfc"])                                # (384, 24)
    pp["g8"] = jnp.kron(eye3, jnp.ones((AWARENESS_DIM, AWARENESS_DIM), f32)
                        / AWARENESS_DIM)                                 # (24, 24)
    pp["gma"] = jnp.tile(p["ln_gamma"], (1, N_AGENTS))
    pp["bta"] = jnp.tile(p["ln_beta"], (1, N_AGENTS))

    # infer net second layer: block-diag over partner j, outputs pre-permuted
    # to [mu for all j (24) | logvar for all j (24)] to align with a_mean lanes.
    iw2, ib2 = p["in_w2"], p["in_b2"]
    pp["iw2b"] = jnp.concatenate([jnp.kron(eye3, iw2[:, :AWARENESS_DIM]),
                                  jnp.kron(eye3, iw2[:, AWARENESS_DIM:])], axis=1)
    pp["ib2b"] = jnp.concatenate([jnp.tile(ib2[:, :AWARENESS_DIM], (1, N_AGENTS)),
                                  jnp.tile(ib2[:, AWARENESS_DIM:], (1, N_AGENTS))],
                                 axis=1)
    return pp


# ---------------- forward wrapper ----------------
def linda_atten_forward(pp, inputs, hidden_state, noise, test_mode=False):
    f32 = jnp.float32
    B = inputs.shape[0]
    bs = B // N_AGENTS
    x_in = inputs.astype(f32)
    h_in = hidden_state.reshape(B, RNN_HIDDEN_DIM).astype(f32)
    noise_f = noise.reshape(B, LATENT).astype(f32)

    # tile selection: >=2 grid steps for larger batches (v7x megacore), rows % 8 == 0
    if bs <= 8:
        tb = bs
    else:
        tb = min(TB_MAX, ((bs + 1) // 2 + 7) // 8 * 8)
    bs_pad = ((bs + tb - 1) // tb) * tb
    n_tiles = bs_pad // tb
    pad_rows = (bs_pad - bs) * N_AGENTS
    if pad_rows:
        x_in = jnp.pad(x_in, ((0, pad_rows), (0, 0)))
        h_in = jnp.pad(h_in, ((0, pad_rows), (0, 0)))
        noise_f = jnp.pad(noise_f, ((0, pad_rows), (0, 0)))

    # tile-wise agent-major row permutation (agent outer, sample inner per tile)
    def to_agent_major(a):
        return (a.reshape(n_tiles, tb, N_AGENTS, a.shape[-1])
                 .transpose(0, 2, 1, 3)
                 .reshape(n_tiles * N_AGENTS * tb, a.shape[-1]))

    def from_agent_major(a):
        return (a.reshape(n_tiles, N_AGENTS, tb, a.shape[-1])
                 .transpose(0, 2, 1, 3)
                 .reshape(n_tiles * N_AGENTS * tb, a.shape[-1]))

    x_in = to_agent_major(x_in)
    h_in = to_agent_major(h_in)
    noise_f = to_agent_major(noise_f)

    rows = tb * N_AGENTS
    grid = (n_tiles,)

    def row_spec(d):
        return pl.BlockSpec((rows, d), lambda i: (i, 0))

    def full_spec(a):
        return pl.BlockSpec(a.shape, lambda i: (0, 0))

    weight_names = ["w1", "b1", "wxg", "bxg", "whg", "bhg",
                    "hw", "hb", "aw2", "ab2",
                    "wqkv", "sel3", "expm3", "wfcb", "g8", "gma", "bta",
                    "w2b", "b2"]
    compute_kld = not test_mode
    if compute_kld:
        weight_names += ["iw2b", "ib2b"]

    args = [x_in, h_in, noise_f] + [pp[k] for k in weight_names]
    in_specs = [row_spec(INPUT_SHAPE), row_spec(RNN_HIDDEN_DIM), row_spec(LATENT)]
    in_specs += [full_spec(pp[k]) for k in weight_names]

    out_shapes = (
        jax.ShapeDtypeStruct((bs_pad * N_AGENTS, 128), f32),   # [h | q | pad] slab
        jax.ShapeDtypeStruct((bs_pad, 128), f32),              # per-sample KLD
    )
    out_specs = (row_spec(128), pl.BlockSpec((tb, 128), lambda i: (i, 0)))

    slab, kldb = pl.pallas_call(
        functools.partial(_fused_kernel, compute_kld=compute_kld, tb=tb),
        out_shape=out_shapes,
        grid=grid,
        in_specs=in_specs,
        out_specs=out_specs,
        compiler_params=pltpu.CompilerParams(
            dimension_semantics=("parallel",),
            vmem_limit_bytes=32 * 1024 * 1024),
    )(*args)

    slab = from_agent_major(slab)
    h_out = slab[:B, :RNN_HIDDEN_DIM]
    q_out = slab[:B, RNN_HIDDEN_DIM:RNN_HIDDEN_DIM + N_ACTIONS]
    kld = kldb[:bs, :1]
    return q_out, h_out, kld


# ---------------- demo ----------------
if __name__ == "__main__":
    key = jax.random.PRNGKey(0)
    kp, kx, kh, kn = jax.random.split(key, 4)
    params = init_params(kp)
    packed = pack_params(params)

    bs = 2
    B = bs * N_AGENTS
    inputs = jax.random.normal(kx, (B, INPUT_SHAPE), jnp.float32)
    hidden_state = 0.1 * jax.random.normal(kh, (B, RNN_HIDDEN_DIM), jnp.float32)
    noise = jax.random.normal(kn, (bs, N_AGENTS, LATENT), jnp.float32)

    fwd_train = jax.jit(functools.partial(linda_atten_forward, test_mode=False))
    q, h, kld = fwd_train(packed, inputs, hidden_state, noise)
    jax.block_until_ready((q, h, kld))

    fwd_eval = jax.jit(functools.partial(linda_atten_forward, test_mode=True))
    q2, h2, kld2 = fwd_eval(packed, inputs, hidden_state, noise)
    jax.block_until_ready((q2, h2, kld2))

    assert q.shape == (B, N_ACTIONS)
    assert h.shape == (B, RNN_HIDDEN_DIM)
    assert kld.shape == (bs, 1)
    assert bool(jnp.all(jnp.isfinite(q))) and bool(jnp.all(jnp.isfinite(h)))
    assert bool(jnp.all(jnp.isfinite(kld)))
    assert bool(jnp.all(kld2 == 0.0))
    # q / h must not depend on the KLD branch
    assert bool(jnp.allclose(q, q2, rtol=1e-5, atol=1e-5))
    assert bool(jnp.allclose(h, h2, rtol=1e-5, atol=1e-5))
    print("KERNEL_OK")
</pallas_src>

<mosaic_0001>
module attributes {stable_mosaic.version = 11 : i64} {
  func.func @_fused_kernel(%arg0: i32, %arg1: memref<6x16xf32, #tpu.memory_space<vmem>>, %arg2: memref<6x32xf32, #tpu.memory_space<vmem>>, %arg3: memref<6x24xf32, #tpu.memory_space<vmem>>, %arg4: memref<16x32xf32, #tpu.memory_space<vmem>>, %arg5: memref<1x32xf32, #tpu.memory_space<vmem>>, %arg6: memref<32x96xf32, #tpu.memory_space<vmem>>, %arg7: memref<1x96xf32, #tpu.memory_space<vmem>>, %arg8: memref<32x96xf32, #tpu.memory_space<vmem>>, %arg9: memref<1x96xf32, #tpu.memory_space<vmem>>, %arg10: memref<32x128xf32, #tpu.memory_space<vmem>>, %arg11: memref<1x128xf32, #tpu.memory_space<vmem>>, %arg12: memref<32x48xf32, #tpu.memory_space<vmem>>, %arg13: memref<1x48xf32, #tpu.memory_space<vmem>>, %arg14: memref<24x3456xf32, #tpu.memory_space<vmem>>, %arg15: memref<1152x36xf32, #tpu.memory_space<vmem>>, %arg16: memref<36x1152xf32, #tpu.memory_space<vmem>>, %arg17: memref<384x24xf32, #tpu.memory_space<vmem>>, %arg18: memref<24x24xf32, #tpu.memory_space<vmem>>, %arg19: memref<1x24xf32, #tpu.memory_space<vmem>>, %arg20: memref<1x24xf32, #tpu.memory_space<vmem>>, %arg21: memref<24x5xf32, #tpu.memory_space<vmem>>, %arg22: memref<1x5xf32, #tpu.memory_space<vmem>>, %arg23: memref<96x48xf32, #tpu.memory_space<vmem>>, %arg24: memref<1x48xf32, #tpu.memory_space<vmem>>, %arg25: memref<6x128xf32, #tpu.memory_space<vmem>>, %arg26: memref<2x128xf32, #tpu.memory_space<vmem>>) attributes {dimension_semantics = [#tpu.dimension_semantics<parallel>], iteration_bounds = array<i64: 1>, scalar_prefetch = 0 : i64, scratch_operands = 0 : i64, tpu.core_type = #tpu.core_type<tc>, window_params = [{transform_indices = @transform_0, window_bounds = array<i64: 6, 16>}, {transform_indices = @transform_1, window_bounds = array<i64: 6, 32>}, {transform_indices = @transform_2, window_bounds = array<i64: 6, 24>}, {pipeline_mode = #tpu.pipeline_mode<synchronous>, transform_indices = @transform_3, window_bounds = array<i64: 16, 32>}, {pipeline_mode = #tpu.pipeline_mode<synchronous>, transform_indices = @transform_4, window_bounds = array<i64: 1, 32>}, {pipeline_mode = #tpu.pipeline_mode<synchronous>, transform_indices = @transform_5, window_bounds = array<i64: 32, 96>}, {pipeline_mode = #tpu.pipeline_mode<synchronous>, transform_indices = @transform_6, window_bounds = array<i64: 1, 96>}, {pipeline_mode = #tpu.pipeline_mode<synchronous>, transform_indices = @transform_7, window_bounds = array<i64: 32, 96>}, {pipeline_mode = #tpu.pipeline_mode<synchronous>, transform_indices = @transform_8, window_bounds = array<i64: 1, 96>}, {pipeline_mode = #tpu.pipeline_mode<synchronous>, transform_indices = @transform_9, window_bounds = array<i64: 32, 128>}, {pipeline_mode = #tpu.pipeline_mode<synchronous>, transform_indices = @transform_10, window_bounds = array<i64: 1, 128>}, {pipeline_mode = #tpu.pipeline_mode<synchronous>, transform_indices = @transform_11, window_bounds = array<i64: 32, 48>}, {pipeline_mode = #tpu.pipeline_mode<synchronous>, transform_indices = @transform_12, window_bounds = array<i64: 1, 48>}, {pipeline_mode = #tpu.pipeline_mode<synchronous>, transform_indices = @transform_13, window_bounds = array<i64: 24, 3456>}, {pipeline_mode = #tpu.pipeline_mode<synchronous>, transform_indices = @transform_14, window_bounds = array<i64: 1152, 36>}, {pipeline_mode = #tpu.pipeline_mode<synchronous>, transform_indices = @transform_15, window_bounds = array<i64: 36, 1152>}, {pipeline_mode = #tpu.pipeline_mode<synchronous>, transform_indices = @transform_16, window_bounds = array<i64: 384, 24>}, {pipeline_mode = #tpu.pipeline_mode<synchronous>, transform_indices = @transform_17, window_bounds = array<i64: 24, 24>}, {pipeline_mode = #tpu.pipeline_mode<synchronous>, transform_indices = @transform_18, window_bounds = array<i64: 1, 24>}, {pipeline_mode = #tpu.pipeline_mode<synchronous>, transform_indices = @transform_19, window_bounds = array<i64: 1, 24>}, {pipeline_mode = #tpu.pipeline_mode<synchronous>, transform_indices = @transform_20, window_bounds = array<i64: 24, 5>}, {pipeline_mode = #tpu.pipeline_mode<synchronous>, transform_indices = @transform_21, window_bounds = array<i64: 1, 5>}, {pipeline_mode = #tpu.pipeline_mode<synchronous>, transform_indices = @transform_22, window_bounds = array<i64: 96, 48>}, {pipeline_mode = #tpu.pipeline_mode<synchronous>, transform_indices = @transform_23, window_bounds = array<i64: 1, 48>}, {transform_indices = @transform_24, window_bounds = array<i64: 6, 128>}, {transform_indices = @transform_25, window_bounds = array<i64: 2, 128>}]} {
    %c0 = arith.constant 0 : index
    %c0_0 = arith.constant 0 : index
    %0 = vector.load %arg1[%c0, %c0_0] : memref<6x16xf32, #tpu.memory_space<vmem>>, vector<6x16xf32>
    %c0_1 = arith.constant 0 : index
    %c0_2 = arith.constant 0 : index
    %1 = vector.load %arg4[%c0_1, %c0_2] : memref<16x32xf32, #tpu.memory_space<vmem>>, vector<16x32xf32>
    %cst = arith.constant dense<0.000000e+00> : vector<6x32xf32>
    %2 = tpu.matmul %0, %1, %cst {dimension_numbers = #tpu.dot_dimension_numbers<[1], [0], [0], [1], [0, 0, 1, 1], [], []>} : vector<6x16xf32>, vector<16x32xf32>, vector<6x32xf32> -> vector<6x32xf32>
    %c0_3 = arith.constant 0 : index
    %c0_4 = arith.constant 0 : index
    %3 = vector.load %arg5[%c0_3, %c0_4] : memref<1x32xf32, #tpu.memory_space<vmem>>, vector<1x32xf32>
    %4 = vector.broadcast %3 : vector<1x32xf32> to vector<6x32xf32>
    %5 = arith.addf %2, %4 : vector<6x32xf32>
    %cst_5 = arith.constant 0.000000e+00 : f32
    %6 = vector.broadcast %cst_5 : f32 to vector<6x32xf32>
    %7 = arith.maximumf %5, %6 : vector<6x32xf32>
    %c0_6 = arith.constant 0 : index
    %c0_7 = arith.constant 0 : index
    %8 = vector.load %arg2[%c0_6, %c0_7] : memref<6x32xf32, #tpu.memory_space<vmem>>, vector<6x32xf32>
    %c0_8 = arith.constant 0 : index
    %c0_9 = arith.constant 0 : index
    %9 = vector.load %arg6[%c0_8, %c0_9] : memref<32x96xf32, #tpu.memory_space<vmem>>, vector<32x96xf32>
    %cst_10 = arith.constant dense<0.000000e+00> : vector<6x96xf32>
    %10 = tpu.matmul %7, %9, %cst_10 {dimension_numbers = #tpu.dot_dimension_numbers<[1], [0], [0], [1], [0, 0, 1, 1], [], []>} : vector<6x32xf32>, vector<32x96xf32>, vector<6x96xf32> -> vector<6x96xf32>
    %c0_11 = arith.constant 0 : index
    %c0_12 = arith.constant 0 : index
    %11 = vector.load %arg7[%c0_11, %c0_12] : memref<1x96xf32, #tpu.memory_space<vmem>>, vector<1x96xf32>
    %12 = vector.broadcast %11 : vector<1x96xf32> to vector<6x96xf32>
    %13 = arith.addf %10, %12 : vector<6x96xf32>
    %c0_13 = arith.constant 0 : index
    %c0_14 = arith.constant 0 : index
    %14 = vector.load %arg8[%c0_13, %c0_14] : memref<32x96xf32, #tpu.memory_space<vmem>>, vector<32x96xf32>
    %cst_15 = arith.constant dense<0.000000e+00> : vector<6x96xf32>
    %15 = tpu.matmul %8, %14, %cst_15 {dimension_numbers = #tpu.dot_dimension_numbers<[1], [0], [0], [1], [0, 0, 1, 1], [], []>} : vector<6x32xf32>, vector<32x96xf32>, vector<6x96xf32> -> vector<6x96xf32>
    %c0_16 = arith.constant 0 : index
    %c0_17 = arith.constant 0 : index
    %16 = vector.load %arg9[%c0_16, %c0_17] : memref<1x96xf32, #tpu.memory_space<vmem>>, vector<1x96xf32>
    %17 = vector.broadcast %16 : vector<1x96xf32> to vector<6x96xf32>
    %18 = arith.addf %15, %17 : vector<6x96xf32>
    %19 = vector.extract_strided_slice %13 {offsets = [0, 0], sizes = [6, 32], strides = [1, 1]} : vector<6x96xf32> to vector<6x32xf32>
    %20 = vector.extract_strided_slice %18 {offsets = [0, 0], sizes = [6, 32], strides = [1, 1]} : vector<6x96xf32> to vector<6x32xf32>
    %21 = arith.addf %19, %20 : vector<6x32xf32>
    %22 = arith.negf %21 : vector<6x32xf32>
    %23 = math.exp %22 : vector<6x32xf32>
    %cst_18 = arith.constant 1.000000e+00 : f32
    %24 = vector.broadcast %cst_18 : f32 to vector<6x32xf32>
    %25 = arith.addf %24, %23 : vector<6x32xf32>
    %26 = arith.divf %24, %25 : vector<6x32xf32>
    %27 = vector.extract_strided_slice %13 {offsets = [0, 32], sizes = [6, 32], strides = [1, 1]} : vector<6x96xf32> to vector<6x32xf32>
    %28 = vector.extract_strided_slice %18 {offsets = [0, 32], sizes = [6, 32], strides = [1, 1]} : vector<6x96xf32> to vector<6x32xf32>
    %29 = arith.addf %27, %28 : vector<6x32xf32>
    %30 = arith.negf %29 : vector<6x32xf32>
    %31 = math.exp %30 : vector<6x32xf32>
    %cst_19 = arith.constant 1.000000e+00 : f32
    %32 = vector.broadcast %cst_19 : f32 to vector<6x32xf32>
    %33 = arith.addf %32, %31 : vector<6x32xf32>
    %34 = arith.divf %32, %33 : vector<6x32xf32>
    %35 = vector.extract_strided_slice %13 {offsets = [0, 64], sizes = [6, 32], strides = [1, 1]} : vector<6x96xf32> to vector<6x32xf32>
    %36 = vector.extract_strided_slice %18 {offsets = [0, 64], sizes = [6, 32], strides = [1, 1]} : vector<6x96xf32> to vector<6x32xf32>
    %37 = arith.mulf %26, %36 : vector<6x32xf32>
    %38 = arith.addf %35, %37 : vector<6x32xf32>
    %39 = math.tanh %38 : vector<6x32xf32>
    %cst_20 = arith.constant 1.000000e+00 : f32
    %40 = vector.broadcast %cst_20 : f32 to vector<6x32xf32>
    %41 = arith.subf %40, %34 : vector<6x32xf32>
    %42 = arith.mulf %41, %39 : vector<6x32xf32>
    %43 = arith.mulf %34, %8 : vector<6x32xf32>
    %44 = arith.addf %42, %43 : vector<6x32xf32>
    %c0_21 = arith.constant 0 : index
    %c0_22 = arith.constant 0 : index
    %45 = vector.load %arg10[%c0_21, %c0_22] : memref<32x128xf32, #tpu.memory_space<vmem>>, vector<32x128xf32>
    %cst_23 = arith.constant dense<0.000000e+00> : vector<6x128xf32>
    %46 = tpu.matmul %44, %45, %cst_23 {dimension_numbers = #tpu.dot_dimension_numbers<[1], [0], [0], [1], [0, 0, 1, 1], [], []>} : vector<6x32xf32>, vector<32x128xf32>, vector<6x128xf32> -> vector<6x128xf32>
    %c0_24 = arith.constant 0 : index
    %c0_25 = arith.constant 0 : index
    %47 = vector.load %arg11[%c0_24, %c0_25] : memref<1x128xf32, #tpu.memory_space<vmem>>, vector<1x128xf32>
    %48 = vector.broadcast %47 : vector<1x128xf32> to vector<6x128xf32>
    %49 = arith.addf %46, %48 : vector<6x128xf32>
    %50 = vector.extract_strided_slice %49 {offsets = [0, 0], sizes = [6, 32], strides = [1, 1]} : vector<6x128xf32> to vector<6x32xf32>
    %51 = vector.extract_strided_slice %49 {offsets = [0, 32], sizes = [6, 5], strides = [1, 1]} : vector<6x128xf32> to vector<6x5xf32>
    %cst_26 = arith.constant 0.000000e+00 : f32
    %52 = vector.broadcast %cst_26 : f32 to vector<6x32xf32>
    %53 = arith.cmpf ogt, %50, %52 : vector<6x32xf32>
    %cst_27 = arith.constant 0.00999999977 : f32
    %54 = vector.broadcast %cst_27 : f32 to vector<6x32xf32>
    %55 = arith.mulf %54, %50 : vector<6x32xf32>
    %56 = arith.select %53, %50, %55 : vector<6x32xi1>, vector<6x32xf32>
    %c0_28 = arith.constant 0 : index
    %c0_29 = arith.constant 0 : index
    %57 = vector.load %arg12[%c0_28, %c0_29] : memref<32x48xf32, #tpu.memory_space<vmem>>, vector<32x48xf32>
    %cst_30 = arith.constant dense<0.000000e+00> : vector<6x48xf32>
    %58 = tpu.matmul %56, %57, %cst_30 {dimension_numbers = #tpu.dot_dimension_numbers<[1], [0], [0], [1], [0, 0, 1, 1], [], []>} : vector<6x32xf32>, vector<32x48xf32>, vector<6x48xf32> -> vector<6x48xf32>
    %c0_31 = arith.constant 0 : index
    %c0_32 = arith.constant 0 : index
    %59 = vector.load %arg13[%c0_31, %c0_32] : memref<1x48xf32, #tpu.memory_space<vmem>>, vector<1x48xf32>
    %60 = vector.broadcast %59 : vector<1x48xf32> to vector<6x48xf32>
    %61 = arith.addf %58, %60 : vector<6x48xf32>
    %62 = vector.extract_strided_slice %61 {offsets = [0, 0], sizes = [6, 24], strides = [1, 1]} : vector<6x48xf32> to vector<6x24xf32>
    %63 = vector.extract_strided_slice %61 {offsets = [0, 24], sizes = [6, 24], strides = [1, 1]} : vector<6x48xf32> to vector<6x24xf32>
    %cst_33 = arith.constant -6.21460819 : f32
    %64 = vector.broadcast %cst_33 : f32 to vector<6x24xf32>
    %65 = arith.maximumf %63, %64 : vector<6x24xf32>
    %cst_34 = arith.constant 5.000000e-01 : f32
    %66 = vector.broadcast %cst_34 : f32 to vector<6x24xf32>
    %67 = arith.mulf %66, %65 : vector<6x24xf32>
    %68 = math.exp %67 : vector<6x24xf32>
    %c0_35 = arith.constant 0 : index
    %c0_36 = arith.constant 0 : index
    %69 = vector.load %arg3[%c0_35, %c0_36] : memref<6x24xf32, #tpu.memory_space<vmem>>, vector<6x24xf32>
    %70 = arith.mulf %68, %69 : vector<6x24xf32>
    %71 = arith.addf %62, %70 : vector<6x24xf32>
    %c0_37 = arith.constant 0 : index
    %c0_38 = arith.constant 0 : index
    %72 = vector.load %arg14[%c0_37, %c0_38] : memref<24x3456xf32, #tpu.memory_space<vmem>>, vector<24x3456xf32>
    %cst_39 = arith.constant dense<0.000000e+00> : vector<6x3456xf32>
    %73 = tpu.matmul %71, %72, %cst_39 {dimension_numbers = #tpu.dot_dimension_numbers<[1], [0], [0], [1], [0, 0, 1, 1], [], []>} : vector<6x24xf32>, vector<24x3456xf32>, vector<6x3456xf32> -> vector<6x3456xf32>
    %74 = vector.extract_strided_slice %73 {offsets = [0, 0], sizes = [6, 1152], strides = [1, 1]} : vector<6x3456xf32> to vector<6x1152xf32>
    %75 = vector.extract_strided_slice %73 {offsets = [0, 1152], sizes = [6, 1152], strides = [1, 1]} : vector<6x3456xf32> to vector<6x1152xf32>
    %76 = arith.mulf %74, %75 : vector<6x1152xf32>
    %c0_40 = arith.constant 0 : index
    %c0_41 = arith.constant 0 : index
    %77 = vector.load %arg15[%c0_40, %c0_41] : memref<1152x36xf32, #tpu.memory_space<vmem>>, vector<1152x36xf32>
    %cst_42 = arith.constant dense<0.000000e+00> : vector<6x36xf32>
    %78 = tpu.matmul %76, %77, %cst_42 {dimension_numbers = #tpu.dot_dimension_numbers<[1], [0], [0], [1], [0, 0, 1, 1], [], []>} : vector<6x1152xf32>, vector<1152x36xf32>, vector<6x36xf32> -> vector<6x36xf32>
    %79 = vector.extract_strided_slice %78 {offsets = [0, 0], sizes = [6, 12], strides = [1, 1]} : vector<6x36xf32> to vector<6x12xf32>
    %80 = vector.extract_strided_slice %78 {offsets = [0, 12], sizes = [6, 12], strides = [1, 1]} : vector<6x36xf32> to vector<6x12xf32>
    %81 = arith.maximumf %79, %80 : vector<6x12xf32>
    %82 = vector.extract_strided_slice %78 {offsets = [0, 24], sizes = [6, 12], strides = [1, 1]} : vector<6x36xf32> to vector<6x12xf32>
    %83 = arith.maximumf %81, %82 : vector<6x12xf32>
    %84 = tpu.concatenate %83, %83, %83 in 1 : vector<6x12xf32>, vector<6x12xf32>, vector<6x12xf32> -> vector<6x36xf32>
    %85 = arith.subf %78, %84 : vector<6x36xf32>
    %86 = math.exp %85 : vector<6x36xf32>
    %87 = vector.extract_strided_slice %86 {offsets = [0, 0], sizes = [6, 12], strides = [1, 1]} : vector<6x36xf32> to vector<6x12xf32>
    %88 = vector.extract_strided_slice %86 {offsets = [0, 12], sizes = [6, 12], strides = [1, 1]} : vector<6x36xf32> to vector<6x12xf32>
    %89 = arith.addf %87, %88 : vector<6x12xf32>
    %90 = vector.extract_strided_slice %86 {offsets = [0, 24], sizes = [6, 12], strides = [1, 1]} : vector<6x36xf32> to vector<6x12xf32>
    %91 = arith.addf %89, %90 : vector<6x12xf32>
    %92 = tpu.reciprocal %91 {approx = true} : vector<6x12xf32> -> vector<6x12xf32>
    %93 = tpu.concatenate %92, %92, %92 in 1 : vector<6x12xf32>, vector<6x12xf32>, vector<6x12xf32> -> vector<6x36xf32>
    %94 = arith.mulf %86, %93 : vector<6x36xf32>
    %c0_43 = arith.constant 0 : index
    %c0_44 = arith.constant 0 : index
    %95 = vector.load %arg16[%c0_43, %c0_44] : memref<36x1152xf32, #tpu.memory_space<vmem>>, vector<36x1152xf32>
    %cst_45 = arith.constant dense<0.000000e+00> : vector<6x1152xf32>
    %96 = tpu.matmul %94, %95, %cst_45 {dimension_numbers = #tpu.dot_dimension_numbers<[1], [0], [0], [1], [0, 0, 1, 1], [], []>} : vector<6x36xf32>, vector<36x1152xf32>, vector<6x1152xf32> -> vector<6x1152xf32>
    %97 = vector.extract_strided_slice %73 {offsets = [0, 2304], sizes = [6, 1152], strides = [1, 1]} : vector<6x3456xf32> to vector<6x1152xf32>
    %98 = arith.mulf %96, %97 : vector<6x1152xf32>
    %99 = vector.extract_strided_slice %98 {offsets = [0, 0], sizes = [6, 384], strides = [1, 1]} : vector<6x1152xf32> to vector<6x384xf32>
    %100 = vector.extract_strided_slice %98 {offsets = [0, 384], sizes = [6, 384], strides = [1, 1]} : vector<6x1152xf32> to vector<6x384xf32>
    %101 = arith.addf %99, %100 : vector<6x384xf32>
    %102 = vector.extract_strided_slice %98 {offsets = [0, 768], sizes = [6, 384], strides = [1, 1]} : vector<6x1152xf32> to vector<6x384xf32>
    %103 = arith.addf %101, %102 : vector<6x384xf32>
    %c0_46 = arith.constant 0 : index
    %c0_47 = arith.constant 0 : index
    %104 = vector.load %arg17[%c0_46, %c0_47] : memref<384x24xf32, #tpu.memory_space<vmem>>, vector<384x24xf32>
    %cst_48 = arith.constant dense<0.000000e+00> : vector<6x24xf32>
    %105 = tpu.matmul %103, %104, %cst_48 {dimension_numbers = #tpu.dot_dimension_numbers<[1], [0], [0], [1], [0, 0, 1, 1], [], []>} : vector<6x384xf32>, vector<384x24xf32>, vector<6x24xf32> -> vector<6x24xf32>
    %106 = arith.addf %105, %71 : vector<6x24xf32>
    %c0_49 = arith.constant 0 : index
    %c0_50 = arith.constant 0 : index
    %107 = vector.load %arg18[%c0_49, %c0_50] : memref<24x24xf32, #tpu.memory_space<vmem>>, vector<24x24xf32>
    %cst_51 = arith.constant dense<0.000000e+00> : vector<6x24xf32>
    %108 = tpu.matmul %106, %107, %cst_51 {dimension_numbers = #tpu.dot_dimension_numbers<[1], [0], [0], [1], [0, 0, 1, 1], [], []>} : vector<6x24xf32>, vector<24x24xf32>, vector<6x24xf32> -> vector<6x24xf32>
    %109 = arith.subf %106, %108 : vector<6x24xf32>
    %110 = arith.mulf %109, %109 : vector<6x24xf32>
    %c0_52 = arith.constant 0 : index
    %c0_53 = arith.constant 0 : index
    %111 = vector.load %arg18[%c0_52, %c0_53] : memref<24x24xf32, #tpu.memory_space<vmem>>, vector<24x24xf32>
    %cst_54 = arith.constant dense<0.000000e+00> : vector<6x24xf32>
    %112 = tpu.matmul %110, %111, %cst_54 {dimension_numbers = #tpu.dot_dimension_numbers<[1], [0], [0], [1], [0, 0, 1, 1], [], []>} : vector<6x24xf32>, vector<24x24xf32>, vector<6x24xf32> -> vector<6x24xf32>
    %cst_55 = arith.constant 9.99999997E-7 : f32
    %113 = vector.broadcast %cst_55 : f32 to vector<6x24xf32>
    %114 = arith.addf %112, %113 : vector<6x24xf32>
    %115 = math.rsqrt %114 : vector<6x24xf32>
    %116 = arith.mulf %109, %115 : vector<6x24xf32>
    %c0_56 = arith.constant 0 : index
    %c0_57 = arith.constant 0 : index
    %117 = vector.load %arg19[%c0_56, %c0_57] : memref<1x24xf32, #tpu.memory_space<vmem>>, vector<1x24xf32>
    %118 = vector.broadcast %117 : vector<1x24xf32> to vector<6x24xf32>
    %119 = arith.mulf %116, %118 : vector<6x24xf32>
    %c0_58 = arith.constant 0 : index
    %c0_59 = arith.constant 0 : index
    %120 = vector.load %arg20[%c0_58, %c0_59] : memref<1x24xf32, #tpu.memory_space<vmem>>, vector<1x24xf32>
    %121 = vector.broadcast %120 : vector<1x24xf32> to vector<6x24xf32>
    %122 = arith.addf %119, %121 : vector<6x24xf32>
    %c0_60 = arith.constant 0 : index
    %c0_61 = arith.constant 0 : index
    %123 = vector.load %arg21[%c0_60, %c0_61] : memref<24x5xf32, #tpu.memory_space<vmem>>, vector<24x5xf32>
    %cst_62 = arith.constant dense<0.000000e+00> : vector<6x5xf32>
    %124 = tpu.matmul %122, %123, %cst_62 {dimension_numbers = #tpu.dot_dimension_numbers<[1], [0], [0], [1], [0, 0, 1, 1], [], []>} : vector<6x24xf32>, vector<24x5xf32>, vector<6x5xf32> -> vector<6x5xf32>
    %125 = arith.addf %51, %124 : vector<6x5xf32>
    %c0_63 = arith.constant 0 : index
    %c0_64 = arith.constant 0 : index
    %126 = vector.load %arg22[%c0_63, %c0_64] : memref<1x5xf32, #tpu.memory_space<vmem>>, vector<1x5xf32>
    %127 = vector.broadcast %126 : vector<1x5xf32> to vector<6x5xf32>
    %128 = arith.addf %125, %127 : vector<6x5xf32>
    %cst_65 = arith.constant 0.000000e+00 : f32
    %129 = vector.broadcast %cst_65 : f32 to vector<6x91xf32>
    %130 = tpu.concatenate %44, %128, %129 in 1 : vector<6x32xf32>, vector<6x5xf32>, vector<6x91xf32> -> vector<6x128xf32>
    %c0_66 = arith.constant 0 : index
    %c0_67 = arith.constant 0 : index
    %131 = vector.load %arg25[%c0_66, %c0_67] : memref<6x128xf32, #tpu.memory_space<vmem>>, vector<6x128xf32>
    tpu.vector_store %arg25[%c0_66, %c0_67], %130 {strides = array<i32>} : memref<6x128xf32, #tpu.memory_space<vmem>>, vector<6x128xf32>,
    %132 = vector.extract_strided_slice %49 {offsets = [0, 37], sizes = [6, 32], strides = [1, 1]} : vector<6x128xf32> to vector<6x32xf32>
    %133 = vector.extract_strided_slice %49 {offsets = [0, 69], sizes = [6, 32], strides = [1, 1]} : vector<6x128xf32> to vector<6x32xf32>
    %134 = vector.extract_strided_slice %133 {offsets = [0, 0], sizes = [2, 32], strides = [1, 1]} : vector<6x32xf32> to vector<2x32xf32>
    %135 = vector.extract_strided_slice %133 {offsets = [2, 0], sizes = [2, 32], strides = [1, 1]} : vector<6x32xf32> to vector<2x32xf32>
    %136 = vector.extract_strided_slice %133 {offsets = [4, 0], sizes = [2, 32], strides = [1, 1]} : vector<6x32xf32> to vector<2x32xf32>
    %137 = tpu.concatenate %134, %135, %136 in 1 : vector<2x32xf32>, vector<2x32xf32>, vector<2x32xf32> -> vector<2x96xf32>
    %138 = tpu.concatenate %132, %132, %132 in 1 : vector<6x32xf32>, vector<6x32xf32>, vector<6x32xf32> -> vector<6x96xf32>
    %139 = tpu.concatenate %137, %137, %137 in 0 : vector<2x96xf32>, vector<2x96xf32>, vector<2x96xf32> -> vector<6x96xf32>
    %140 = arith.addf %138, %139 : vector<6x96xf32>
    %cst_68 = arith.constant 0.000000e+00 : f32
    %141 = vector.broadcast %cst_68 : f32 to vector<6x96xf32>
    %142 = arith.cmpf ogt, %140, %141 : vector<6x96xf32>
    %cst_69 = arith.constant 0.00999999977 : f32
    %143 = vector.broadcast %cst_69 : f32 to vector<6x96xf32>
    %144 = arith.mulf %143, %140 : vector<6x96xf32>
    %145 = arith.select %142, %140, %144 : vector<6x96xi1>, vector<6x96xf32>
    %c0_70 = arith.constant 0 : index
    %c0_71 = arith.constant 0 : index
    %146 = vector.load %arg23[%c0_70, %c0_71] : memref<96x48xf32, #tpu.memory_space<vmem>>, vector<96x48xf32>
    %cst_72 = arith.constant dense<0.000000e+00> : vector<6x48xf32>
    %147 = tpu.matmul %145, %146, %cst_72 {dimension_numbers = #tpu.dot_dimension_numbers<[1], [0], [0], [1], [0, 0, 1, 1], [], []>} : vector<6x96xf32>, vector<96x48xf32>, vector<6x48xf32> -> vector<6x48xf32>
    %c0_73 = arith.constant 0 : index
    %c0_74 = arith.constant 0 : index
    %148 = vector.load %arg24[%c0_73, %c0_74] : memref<1x48xf32, #tpu.memory_space<vmem>>, vector<1x48xf32>
    %149 = vector.broadcast %148 : vector<1x48xf32> to vector<6x48xf32>
    %150 = arith.addf %147, %149 : vector<6x48xf32>
    %151 = vector.extract_strided_slice %150 {offsets = [0, 0], sizes = [6, 24], strides = [1, 1]} : vector<6x48xf32> to vector<6x24xf32>
    %152 = vector.extract_strided_slice %150 {offsets = [0, 24], sizes = [6, 24], strides = [1, 1]} : vector<6x48xf32> to vector<6x24xf32>
    %cst_75 = arith.constant -6.21460819 : f32
    %153 = vector.broadcast %cst_75 : f32 to vector<6x24xf32>
    %154 = arith.maximumf %152, %153 : vector<6x24xf32>
    %155 = arith.mulf %68, %68 : vector<6x24xf32>
    %156 = arith.subf %154, %65 : vector<6x24xf32>
    %cst_76 = arith.constant 5.000000e-01 : f32
    %157 = vector.broadcast %cst_76 : f32 to vector<6x24xf32>
    %158 = arith.mulf %157, %156 : vector<6x24xf32>
    %159 = arith.subf %62, %151 : vector<6x24xf32>
    %160 = arith.mulf %159, %159 : vector<6x24xf32>
    %161 = arith.addf %155, %160 : vector<6x24xf32>
    %cst_77 = arith.constant 5.000000e-01 : f32
    %162 = vector.broadcast %cst_77 : f32 to vector<6x24xf32>
    %163 = arith.mulf %162, %161 : vector<6x24xf32>
    %cst_78 = arith.constant 0.000000e+00 : f32
    %164 = vector.broadcast %cst_78 : f32 to vector<6x24xf32>
    %165 = arith.subf %164, %154 : vector<6x24xf32>
    %166 = math.exp %165 : vector<6x24xf32>
    %167 = arith.mulf %163, %166 : vector<6x24xf32>
    %168 = arith.addf %158, %167 : vector<6x24xf32>
    %cst_79 = arith.constant 5.000000e-01 : f32
    %169 = vector.broadcast %cst_79 : f32 to vector<6x24xf32>
    %170 = arith.subf %168, %169 : vector<6x24xf32>
    %171 = vector.extract_strided_slice %170 {offsets = [0, 0], sizes = [2, 24], strides = [1, 1]} : vector<6x24xf32> to vector<2x24xf32>
    %172 = vector.extract_strided_slice %170 {offsets = [2, 0], sizes = [2, 24], strides = [1, 1]} : vector<6x24xf32> to vector<2x24xf32>
    %173 = arith.addf %171, %172 : vector<2x24xf32>
    %174 = vector.extract_strided_slice %170 {offsets = [4, 0], sizes = [2, 24], strides = [1, 1]} : vector<6x24xf32> to vector<2x24xf32>
    %175 = arith.addf %173, %174 : vector<2x24xf32>
    %cst_80 = arith.constant dense<0.000000e+00> : vector<2xf32>
    %176 = vector.multi_reduction <add>, %175, %cst_80 [1] : vector<2x24xf32> to vector<2xf32>
    %177 = vector.shape_cast %176 : vector<2xf32> to vector<2x1xf32>
    %cst_81 = arith.constant 0.013888889 : f32
    %178 = vector.broadcast %cst_81 : f32 to vector<2x1xf32>
    %179 = arith.mulf %177, %178 : vector<2x1xf32>
    %180 = vector.shape_cast %179 : vector<2x1xf32> to vector<2x1xf32>
    %181 = vector.broadcast %180 : vector<2x1xf32> to vector<2x128xf32>
    %c0_82 = arith.constant 0 : index
    %c0_83 = arith.constant 0 : index
    %182 = vector.load %arg26[%c0_82, %c0_83] : memref<2x128xf32, #tpu.memory_space<vmem>>, vector<2x128xf32>
    tpu.vector_store %arg26[%c0_82, %c0_83], %181 {strides = array<i32>} : memref<2x128xf32, #tpu.memory_space<vmem>>, vector<2x128xf32>,
    return
  }
  func.func @transform_0(%arg0: i32) -> (i32, i32) {
    %c0_i32 = arith.constant 0 : i32
    %c0_i32_0 = arith.constant 0 : i32
    return %arg0, %c0_i32 : i32, i32
  }
  func.func @transform_1(%arg0: i32) -> (i32, i32) {
    %c0_i32 = arith.constant 0 : i32
    %c0_i32_0 = arith.constant 0 : i32
    return %arg0, %c0_i32 : i32, i32
  }
  func.func @transform_2(%arg0: i32) -> (i32, i32) {
    %c0_i32 = arith.constant 0 : i32
    %c0_i32_0 = arith.constant 0 : i32
    return %arg0, %c0_i32 : i32, i32
  }
  func.func @transform_3(%arg0: i32) -> (i32, i32) {
    %c0_i32 = arith.constant 0 : i32
    %c0_i32_0 = arith.constant 0 : i32
    %c0_i32_1 = arith.constant 0 : i32
    return %c0_i32, %c0_i32_0 : i32, i32
  }
  func.func @transform_4(%arg0: i32) -> (i32, i32) {
    %c0_i32 = arith.constant 0 : i32
    %c0_i32_0 = arith.constant 0 : i32
    %c0_i32_1 = arith.constant 0 : i32
    return %c0_i32, %c0_i32_0 : i32, i32
  }
  func.func @transform_5(%arg0: i32) -> (i32, i32) {
    %c0_i32 = arith.constant 0 : i32
    %c0_i32_0 = arith.constant 0 : i32
    %c0_i32_1 = arith.constant 0 : i32
    return %c0_i32, %c0_i32_0 : i32, i32
  }
  func.func @transform_6(%arg0: i32) -> (i32, i32) {
    %c0_i32 = arith.constant 0 : i32
    %c0_i32_0 = arith.constant 0 : i32
    %c0_i32_1 = arith.constant 0 : i32
    return %c0_i32, %c0_i32_0 : i32, i32
  }
  func.func @transform_7(%arg0: i32) -> (i32, i32) {
    %c0_i32 = arith.constant 0 : i32
    %c0_i32_0 = arith.constant 0 : i32
    %c0_i32_1 = arith.constant 0 : i32
    return %c0_i32, %c0_i32_0 : i32, i32
  }
  func.func @transform_8(%arg0: i32) -> (i32, i32) {
    %c0_i32 = arith.constant 0 : i32
    %c0_i32_0 = arith.constant 0 : i32
    %c0_i32_1 = arith.constant 0 : i32
    return %c0_i32, %c0_i32_0 : i32, i32
  }
  func.func @transform_9(%arg0: i32) -> (i32, i32) {
    %c0_i32 = arith.constant 0 : i32
    %c0_i32_0 = arith.constant 0 : i32
    %c0_i32_1 = arith.constant 0 : i32
    return %c0_i32, %c0_i32_0 : i32, i32
  }
  func.func @transform_10(%arg0: i32) -> (i32, i32) {
    %c0_i32 = arith.constant 0 : i32
    %c0_i32_0 = arith.constant 0 : i32
    %c0_i32_1 = arith.constant 0 : i32
    return %c0_i32, %c0_i32_0 : i32, i32
  }
  func.func @transform_11(%arg0: i32) -> (i32, i32) {
    %c0_i32 = arith.constant 0 : i32
    %c0_i32_0 = arith.constant 0 : i32
    %c0_i32_1 = arith.constant 0 : i32
    return %c0_i32, %c0_i32_0 : i32, i32
  }
  func.func @transform_12(%arg0: i32) -> (i32, i32) {
    %c0_i32 = arith.constant 0 : i32
    %c0_i32_0 = arith.constant 0 : i32
    %c0_i32_1 = arith.constant 0 : i32
    return %c0_i32, %c0_i32_0 : i32, i32
  }
  func.func @transform_13(%arg0: i32) -> (i32, i32) {
    %c0_i32 = arith.constant 0 : i32
    %c0_i32_0 = arith.constant 0 : i32
    %c0_i32_1 = arith.constant 0 : i32
    return %c0_i32, %c0_i32_0 : i32, i32
  }
  func.func @transform_14(%arg0: i32) -> (i32, i32) {
    %c0_i32 = arith.constant 0 : i32
    %c0_i32_0 = arith.constant 0 : i32
    %c0_i32_1 = arith.constant 0 : i32
    return %c0_i32, %c0_i32_0 : i32, i32
  }
  func.func @transform_15(%arg0: i32) -> (i32, i32) {
    %c0_i32 = arith.constant 0 : i32
    %c0_i32_0 = arith.constant 0 : i32
    %c0_i32_1 = arith.constant 0 : i32
    return %c0_i32, %c0_i32_0 : i32, i32
  }
  func.func @transform_16(%arg0: i32) -> (i32, i32) {
    %c0_i32 = arith.constant 0 : i32
    %c0_i32_0 = arith.constant 0 : i32
    %c0_i32_1 = arith.constant 0 : i32
    return %c0_i32, %c0_i32_0 : i32, i32
  }
  func.func @transform_17(%arg0: i32) -> (i32, i32) {
    %c0_i32 = arith.constant 0 : i32
    %c0_i32_0 = arith.constant 0 : i32
    %c0_i32_1 = arith.constant 0 : i32
    return %c0_i32, %c0_i32_0 : i32, i32
  }
  func.func @transform_18(%arg0: i32) -> (i32, i32) {
    %c0_i32 = arith.constant 0 : i32
    %c0_i32_0 = arith.constant 0 : i32
    %c0_i32_1 = arith.constant 0 : i32
    return %c0_i32, %c0_i32_0 : i32, i32
  }
  func.func @transform_19(%arg0: i32) -> (i32, i32) {
    %c0_i32 = arith.constant 0 : i32
    %c0_i32_0 = arith.constant 0 : i32
    %c0_i32_1 = arith.constant 0 : i32
    return %c0_i32, %c0_i32_0 : i32, i32
  }
  func.func @transform_20(%arg0: i32) -> (i32, i32) {
    %c0_i32 = arith.constant 0 : i32
    %c0_i32_0 = arith.constant 0 : i32
    %c0_i32_1 = arith.constant 0 : i32
    return %c0_i32, %c0_i32_0 : i32, i32
  }
  func.func @transform_21(%arg0: i32) -> (i32, i32) {
    %c0_i32 = arith.constant 0 : i32
    %c0_i32_0 = arith.constant 0 : i32
    %c0_i32_1 = arith.constant 0 : i32
    return %c0_i32, %c0_i32_0 : i32, i32
  }
  func.func @transform_22(%arg0: i32) -> (i32, i32) {
    %c0_i32 = arith.constant 0 : i32
    %c0_i32_0 = arith.constant 0 : i32
    %c0_i32_1 = arith.constant 0 : i32
    return %c0_i32, %c0_i32_0 : i32, i32
  }
  func.func @transform_23(%arg0: i32) -> (i32, i32) {
    %c0_i32 = arith.constant 0 : i32
    %c0_i32_0 = arith.constant 0 : i32
    %c0_i32_1 = arith.constant 0 : i32
    return %c0_i32, %c0_i32_0 : i32, i32
  }
  func.func @transform_24(%arg0: i32) -> (i32, i32) {
    %c0_i32 = arith.constant 0 : i32
    %c0_i32_0 = arith.constant 0 : i32
    return %arg0, %c0_i32 : i32, i32
  }
  func.func @transform_25(%arg0: i32) -> (i32, i32) {
    %c0_i32 = arith.constant 0 : i32
    %c0_i32_0 = arith.constant 0 : i32
    return %arg0, %c0_i32 : i32, i32
  }
}

</mosaic_0001>

<llo_original>
// kernel: linda_atten_forward.1
$region0: #{linda_atten_forward.1}
  #allocation0 [shape = 'u32[]', space=smem, size = 0x4, offset = 0x4, fixed_abs, tag = 'smem constant byte address 0x4 - core index']
  #allocation1 [shape = 'u32[144,128]{1,0:T(1,128)}', space=vmem, size = 0x12000, scoped, tag = 'internal scratch']
  %s0 = inlined_call_operand.vmem [shape: f32[6,16], index: 0, kind: input, shape index: {}]
  %s1 = inlined_call_operand.vmem [shape: f32[6,32], index: 1, kind: input, shape index: {}]
  %s2 = inlined_call_operand.vmem [shape: f32[6,24], index: 2, kind: input, shape index: {}]
  %s3 = inlined_call_operand.vmem [shape: f32[16,32], index: 3, kind: input, shape index: {}]
  %s4 = inlined_call_operand.vmem [shape: f32[1,32], index: 4, kind: input, shape index: {}]
  %s5 = inlined_call_operand.vmem [shape: f32[32,96], index: 5, kind: input, shape index: {}]
  %s6 = inlined_call_operand.vmem [shape: f32[1,96], index: 6, kind: input, shape index: {}]
  %s7 = inlined_call_operand.vmem [shape: f32[32,96], index: 7, kind: input, shape index: {}]
  %s8 = inlined_call_operand.vmem [shape: f32[1,96], index: 8, kind: input, shape index: {}]
  %s9 = inlined_call_operand.vmem [shape: f32[32,128], index: 9, kind: input, shape index: {}]
  %s10 = inlined_call_operand.vmem [shape: f32[1,128], index: 10, kind: input, shape index: {}]
  %s11 = inlined_call_operand.vmem [shape: f32[32,48], index: 11, kind: input, shape index: {}]
  %s12 = inlined_call_operand.vmem [shape: f32[1,48], index: 12, kind: input, shape index: {}]
  %s13 = inlined_call_operand.vmem [shape: f32[24,3456], index: 13, kind: input, shape index: {}]
  %s14 = inlined_call_operand.vmem [shape: f32[1152,36], index: 14, kind: input, shape index: {}]
  %s15 = inlined_call_operand.vmem [shape: f32[36,1152], index: 15, kind: input, shape index: {}]
  %s16 = inlined_call_operand.vmem [shape: f32[384,24], index: 16, kind: input, shape index: {}]
  %s17 = inlined_call_operand.vmem [shape: f32[24,24], index: 17, kind: input, shape index: {}]
  %s18 = inlined_call_operand.vmem [shape: f32[1,24], index: 18, kind: input, shape index: {}]
  %s19 = inlined_call_operand.vmem [shape: f32[1,24], index: 19, kind: input, shape index: {}]
  %s20 = inlined_call_operand.vmem [shape: f32[24,5], index: 20, kind: input, shape index: {}]
  %s21 = inlined_call_operand.vmem [shape: f32[1,5], index: 21, kind: input, shape index: {}]
  %s22 = inlined_call_operand.vmem [shape: f32[96,48], index: 22, kind: input, shape index: {}]
  %s23 = inlined_call_operand.vmem [shape: f32[1,48], index: 23, kind: input, shape index: {}]
  %s24 = inlined_call_operand.vmem [shape: f32[6,128], index: 24, kind: output, shape index: {0}]
  %s25 = inlined_call_operand.vmem [shape: f32[2,128], index: 25, kind: output, shape index: {1}]
  %26 = xla_tuple %s24, %s25
  %s27 = sld [smem:[#allocation0]]
  $region114: #{linda_atten_forward.1} parent=0
    _
  %s29 = ssub.s32 1, %s27
  %s30 = scalar_select 0, %s29, %s27
  // Predicated region
  $region2: #{linda_atten_forward.1} parent=0 // pred_check
    _
  $region3: #{linda_atten_forward.1} parent=0 // pred_check_branch
    %32 = sbr.rel (0) target = $region5
  $region4: #{linda_atten_forward.1} parent=0 // pred_region
    _
  $region5: #{linda_atten_forward.1} parent=0 // pred_fallthru
    _
  // Predicated region
  $region6: #{linda_atten_forward.1} parent=0 // pred_check
    _
  $region7: #{linda_atten_forward.1} parent=0 // pred_check_branch
    %34 = sbr.rel (0) target = $region9
  $region8: #{linda_atten_forward.1} parent=0 // pred_region
    _
  $region9: #{linda_atten_forward.1} parent=0 // pred_fallthru
    _
  // Predicated region
  $region10: #{linda_atten_forward.1} parent=0 // pred_check
    _
  $region11: #{linda_atten_forward.1} parent=0 // pred_check_branch
    %36 = sbr.rel (0) target = $region13
  $region12: #{linda_atten_forward.1} parent=0 // pred_region
    _
  $region13: #{linda_atten_forward.1} parent=0 // pred_fallthru
    _
  // Predicated region
  $region14: #{linda_atten_forward.1} parent=0 // pred_check
    _
  $region15: #{linda_atten_forward.1} parent=0 // pred_check_branch
    %38 = sbr.rel (0) target = $region17
  $region16: #{linda_atten_forward.1} parent=0 // pred_region
    _
  $region17: #{linda_atten_forward.1} parent=0 // pred_fallthru
    _
  // Predicated region
  $region18: #{linda_atten_forward.1} parent=0 // pred_check
    _
  $region19: #{linda_atten_forward.1} parent=0 // pred_check_branch
    %40 = sbr.rel (0) target = $region21
  $region20: #{linda_atten_forward.1} parent=0 // pred_region
    _
  $region21: #{linda_atten_forward.1} parent=0 // pred_fallthru
    _
  // Predicated region
  $region22: #{linda_atten_forward.1} parent=0 // pred_check
    _
  $region23: #{linda_atten_forward.1} parent=0 // pred_check_branch
    %42 = sbr.rel (0) target = $region25
  $region24: #{linda_atten_forward.1} parent=0 // pred_region
    _
  $region25: #{linda_atten_forward.1} parent=0 // pred_fallthru
    _
  // Predicated region
  $region26: #{linda_atten_forward.1} parent=0 // pred_check
    _
  $region27: #{linda_atten_forward.1} parent=0 // pred_check_branch
    %44 = sbr.rel (0) target = $region29
  $region28: #{linda_atten_forward.1} parent=0 // pred_region
    _
  $region29: #{linda_atten_forward.1} parent=0 // pred_fallthru
    _
  // Predicated region
  $region30: #{linda_atten_forward.1} parent=0 // pred_check
    _
  $region31: #{linda_atten_forward.1} parent=0 // pred_check_branch
    %46 = sbr.rel (0) target = $region33
  $region32: #{linda_atten_forward.1} parent=0 // pred_region
    _
  $region33: #{linda_atten_forward.1} parent=0 // pred_fallthru
    _
  // Predicated region
  $region34: #{linda_atten_forward.1} parent=0 // pred_check
    _
  $region35: #{linda_atten_forward.1} parent=0 // pred_check_branch
    %48 = sbr.rel (0) target = $region37
  $region36: #{linda_atten_forward.1} parent=0 // pred_region
    _
  $region37: #{linda_atten_forward.1} parent=0 // pred_fallthru
    _
  // Predicated region
  $region38: #{linda_atten_forward.1} parent=0 // pred_check
    _
  $region39: #{linda_atten_forward.1} parent=0 // pred_check_branch
    %50 = sbr.rel (0) target = $region41
  $region40: #{linda_atten_forward.1} parent=0 // pred_region
    _
  $region41: #{linda_atten_forward.1} parent=0 // pred_fallthru
    _
  // Predicated region
  $region42: #{linda_atten_forward.1} parent=0 // pred_check
    _
  $region43: #{linda_atten_forward.1} parent=0 // pred_check_branch
    %52 = sbr.rel (0) target = $region45
  $region44: #{linda_atten_forward.1} parent=0 // pred_region
    _
  $region45: #{linda_atten_forward.1} parent=0 // pred_fallthru
    _
  // Predicated region
  $region46: #{linda_atten_forward.1} parent=0 // pred_check
    _
  $region47: #{linda_atten_forward.1} parent=0 // pred_check_branch
    %54 = sbr.rel (0) target = $region49
  $region48: #{linda_atten_forward.1} parent=0 // pred_region
    _
  $region49: #{linda_atten_forward.1} parent=0 // pred_fallthru
    _
  // Predicated region
  $region50: #{linda_atten_forward.1} parent=0 // pred_check
    _
  $region51: #{linda_atten_forward.1} parent=0 // pred_check_branch
    %56 = sbr.rel (0) target = $region53
  $region52: #{linda_atten_forward.1} parent=0 // pred_region
    _
  $region53: #{linda_atten_forward.1} parent=0 // pred_fallthru
    _
  // Predicated region
  $region54: #{linda_atten_forward.1} parent=0 // pred_check
    _
  $region55: #{linda_atten_forward.1} parent=0 // pred_check_branch
    %58 = sbr.rel (0) target = $region57
  $region56: #{linda_atten_forward.1} parent=0 // pred_region
    _
  $region57: #{linda_atten_forward.1} parent=0 // pred_fallthru
    _
  // Predicated region
  $region58: #{linda_atten_forward.1} parent=0 // pred_check
    _
  $region59: #{linda_atten_forward.1} parent=0 // pred_check_branch
    %60 = sbr.rel (0) target = $region61
  $region60: #{linda_atten_forward.1} parent=0 // pred_region
    _
  $region61: #{linda_atten_forward.1} parent=0 // pred_fallthru
    _
  // Predicated region
  $region62: #{linda_atten_forward.1} parent=0 // pred_check
    _
  $region63: #{linda_atten_forward.1} parent=0 // pred_check_branch
    %62 = sbr.rel (0) target = $region65
  $region64: #{linda_atten_forward.1} parent=0 // pred_region
    _
  $region65: #{linda_atten_forward.1} parent=0 // pred_fallthru
    _
  // Predicated region
  $region66: #{linda_atten_forward.1} parent=0 // pred_check
    _
  $region67: #{linda_atten_forward.1} parent=0 // pred_check_branch
    %64 = sbr.rel (0) target = $region69
  $region68: #{linda_atten_forward.1} parent=0 // pred_region
    _
  $region69: #{linda_atten_forward.1} parent=0 // pred_fallthru
    _
  // Predicated region
  $region70: #{linda_atten_forward.1} parent=0 // pred_check
    _
  $region71: #{linda_atten_forward.1} parent=0 // pred_check_branch
    %66 = sbr.rel (0) target = $region73
  $region72: #{linda_atten_forward.1} parent=0 // pred_region
    _
  $region73: #{linda_atten_forward.1} parent=0 // pred_fallthru
    _
  // Predicated region
  $region74: #{linda_atten_forward.1} parent=0 // pred_check
    _
  $region75: #{linda_atten_forward.1} parent=0 // pred_check_branch
    %68 = sbr.rel (0) target = $region77
  $region76: #{linda_atten_forward.1} parent=0 // pred_region
    _
  $region77: #{linda_atten_forward.1} parent=0 // pred_fallthru
    _
  // Predicated region
  $region78: #{linda_atten_forward.1} parent=0 // pred_check
    _
  $region79: #{linda_atten_forward.1} parent=0 // pred_check_branch
    %70 = sbr.rel (0) target = $region81
  $region80: #{linda_atten_forward.1} parent=0 // pred_region
    _
  $region81: #{linda_atten_forward.1} parent=0 // pred_fallthru
    _
  // Predicated region
  $region82: #{linda_atten_forward.1} parent=0 // pred_check
    _
  $region83: #{linda_atten_forward.1} parent=0 // pred_check_branch
    %72 = sbr.rel (0) target = $region85
  $region84: #{linda_atten_forward.1} parent=0 // pred_region
    _
  $region85: #{linda_atten_forward.1} parent=0 // pred_fallthru
    _
  // Predicated region
  $region86: #{linda_atten_forward.1} parent=0 // pred_check
    _
  $region87: #{linda_atten_forward.1} parent=0 // pred_check_branch
    %74 = sbr.rel (0) target = $region89
  $region88: #{linda_atten_forward.1} parent=0 // pred_region
    _
  $region89: #{linda_atten_forward.1} parent=0 // pred_fallthru
    _
  // Predicated region
  $region90: #{linda_atten_forward.1} parent=0 // pred_check
    _
  $region91: #{linda_atten_forward.1} parent=0 // pred_check_branch
    %76 = sbr.rel (0) target = $region93
  $region92: #{linda_atten_forward.1} parent=0 // pred_region
    _
  $region93: #{linda_atten_forward.1} parent=0 // pred_fallthru
    _
  // Predicated region
  $region94: #{linda_atten_forward.1} parent=0 // pred_check
    _
  $region95: #{linda_atten_forward.1} parent=0 // pred_check_branch
    %78 = sbr.rel (0) target = $region97
  $region96: #{linda_atten_forward.1} parent=0 // pred_region
    _
  $region97: #{linda_atten_forward.1} parent=0 // pred_fallthru
    _
  %v79 = vld [vmem:[%s0] sm:$0x3f]
  %v80 = vld [vmem:[%s3] sm:$0xff]
  %v81 = vld [vmem:[%s3 + $0x8] sm:$0xff]
  %v82 = vld [vmem:[%s4] sm:$0x1]
  %v84 = vlaneseq
  %v85 = vshrl.u32 %v84, 7
  %v86 = vsub.s32 0, %v85
  %v87 = vrot.slane %v82, %v86
  %vm89 = vcmask 130048
  %v91 = vsel %vm89, %v79, 0
  %93 = vmatprep.subr.mxu0 0.0
  %94 = vmatpush1.msra.mxu0 %v80
  %95 = vmatprep.subr.mxu0 0.0
  %96 = vmatpush1.msra.mxu0 %v81
  %97 = vmatprep.subr.mxu0 0.0
  %98 = vmatpush1.msra.mxu0 0.0
  %99 = vmatprep.subr.mxu0 0.0
  %100 = vmatpush1.msra.mxu0 0.0
  %101 = vmatprep.subr.mxu0 0.0
  %102 = vmatpush1.msra.mxu0 0.0
  %103 = vmatprep.subr.mxu0 0.0
  %104 = vmatpush1.msra.mxu0 0.0
  %105 = vmatprep.subr.mxu0 0.0
  %106 = vmatpush1.msra.mxu0 0.0
  %107 = vmatprep.subr.mxu0 0.0
  %108 = vmatpush1.msra.mxu0 0.0
  %109 = vmatprep.subr.mxu0 0.0
  %110 = vmatpush1.msra.mxu0 0.0
  %111 = vmatprep.subr.mxu0 0.0
  %112 = vmatpush1.msra.mxu0 0.0
  %113 = vmatprep.subr.mxu0 0.0
  %114 = vmatpush1.msra.mxu0 0.0
  %115 = vmatprep.subr.mxu0 0.0
  %116 = vmatpush1.msra.mxu0 0.0
  %117 = vmatprep.subr.mxu0 0.0
  %118 = vmatpush1.msra.mxu0 0.0
  %119 = vmatprep.subr.mxu0 0.0
  %120 = vmatpush1.msra.mxu0 0.0
  %121 = vmatprep.subr.mxu0 0.0
  %122 = vmatpush1.msra.mxu0 0.0
  %123 = vmatprep.subr.mxu0 0.0
  %124 = vmatpush1.msra.mxu0 0.0
  %125 = vmatprep.subr.mxu0 0.0
  %126 = vmatpush1.msra.mxu0 0.0
  %127 = vmatprep.subr.mxu0 0.0
  %128 = vmatpush1.msra.mxu0 0.0
  %129 = vmatprep.subr.mxu0 0.0
  %130 = vmatpush1.msra.mxu0 0.0
  %131 = vmatprep.subr.mxu0 0.0
  %132 = vmatpush1.msra.mxu0 0.0
  %133 = vmatprep.subr.mxu0 0.0
  %134 = vmatpush1.msra.mxu0 0.0
  %135 = vmatprep.subr.mxu0 0.0
  %136 = vmatpush1.msra.mxu0 0.0
  %137 = vmatprep.subr.mxu0 0.0
  %138 = vmatpush1.msra.mxu0 0.0
  %139 = vmatprep.subr.mxu0 0.0
  %140 = vmatpush1.msra.mxu0 0.0
  %141 = vmatprep.subr.mxu0 0.0
  %142 = vmatpush1.msra.mxu0 0.0
  %143 = vmatprep.subr.mxu0 0.0
  %144 = vmatpush1.msra.mxu0 0.0
  %145 = vmatprep.subr.mxu0 0.0
  %146 = vmatpush1.msra.mxu0 0.0
  %147 = vmatprep.subr.mxu0 0.0
  %148 = vmatpush1.msra.mxu0 0.0
  %149 = vmatprep.subr.mxu0 0.0
  %150 = vmatpush1.msra.mxu0 0.0
  %151 = vmatprep.subr.mxu0 0.0
  %152 = vmatpush1.msra.mxu0 0.0
  %153 = vmatprep.subr.mxu0 0.0
  %154 = vmatpush1.msra.mxu0 0.0
  %155 = vmatprep.subr.mxu0 0.0
  %156 = vmatpush1.msra.mxu0 0.0
  %157 = vmatprep.mubr.f32.mxu0 0.0
  %158 = vmatmul.mubr.f32.gmra.mrb[0].mxu0 %v91
  %v159 = vpop.f32.mrb[0].mxu0
  %v160 = vadd.f32 %v87, %v159
  %v161 = vpop.f32.mrb[0].mxu0
  %162 = vdwg.mxu0
  %v163 = vmax.f32 %v160, 0.0
  %v164 = vld [vmem:[%s1] sm:$0x3f]
  %v165 = vld [vmem:[%s5] sm:$0xff]
  %v166 = vld [vmem:[%s5 + $0x8] sm:$0xff]
  %v167 = vld [vmem:[%s5 + $0x10] sm:$0xff]
  %v168 = vld [vmem:[%s5 + $0x18] sm:$0xff]
  %v169 = vld [vmem:[%s6] sm:$0x1]
  %v171 = vlaneseq
  %v172 = vshrl.u32 %v171, 7
  %v173 = vsub.s32 0, %v172
  %v174 = vrot.slane %v169, %v173
  %vm176 = vcmask 261120
  %v178 = vsel %vm176, %v163, 0
  %180 = vmatprep.subr.mxu0 0.0
  %181 = vmatpush1.msra.mxu0 %v165
  %182 = vmatprep.subr.mxu0 0.0
  %183 = vmatpush1.msra.mxu0 %v166
  %184 = vmatprep.subr.mxu0 0.0
  %185 = vmatpush1.msra.mxu0 %v167
  %186 = vmatprep.subr.mxu0 0.0
  %187 = vmatpush1.msra.mxu0 %v168
  %188 = vmatprep.subr.mxu0 0.0
  %189 = vmatpush1.msra.mxu0 0.0
  %190 = vmatprep.subr.mxu0 0.0
  %191 = vmatpush1.msra.mxu0 0.0
  %192 = vmatprep.subr.mxu0 0.0
  %193 = vmatpush1.msra.mxu0 0.0
  %194 = vmatprep.subr.mxu0 0.0
  %195 = vmatpush1.msra.mxu0 0.0
  %196 = vmatprep.subr.mxu0 0.0
  %197 = vmatpush1.msra.mxu0 0.0
  %198 = vmatprep.subr.mxu0 0.0
  %199 = vmatpush1.msra.mxu0 0.0
  %200 = vmatprep.subr.mxu0 0.0
  %201 = vmatpush1.msra.mxu0 0.0
  %202 = vmatprep.subr.mxu0 0.0
  %203 = vmatpush1.msra.mxu0 0.0
  %204 = vmatprep.subr.mxu0 0.0
  %205 = vmatpush1.msra.mxu0 0.0
  %206 = vmatprep.subr.mxu0 0.0
  %207 = vmatpush1.msra.mxu0 0.0
  %208 = vmatprep.subr.mxu0 0.0
  %209 = vmatpush1.msra.mxu0 0.0
  %210 = vmatprep.subr.mxu0 0.0
  %211 = vmatpush1.msra.mxu0 0.0
  %212 = vmatprep.subr.mxu0 0.0
  %213 = vmatpush1.msra.mxu0 0.0
  %214 = vmatprep.subr.mxu0 0.0
  %215 = vmatpush1.msra.mxu0 0.0
  %216 = vmatprep.subr.mxu0 0.0
  %217 = vmatpush1.msra.mxu0 0.0
  %218 = vmatprep.subr.mxu0 0.0
  %219 = vmatpush1.msra.mxu0 0.0
  %220 = vmatprep.subr.mxu0 0.0
  %221 = vmatpush1.msra.mxu0 0.0
  %222 = vmatprep.subr.mxu0 0.0
  %223 = vmatpush1.msra.mxu0 0.0
  %224 = vmatprep.subr.mxu0 0.0
  %225 = vmatpush1.msra.mxu0 0.0
  %226 = vmatprep.subr.mxu0 0.0
  %227 = vmatpush1.msra.mxu0 0.0
  %228 = vmatprep.subr.mxu0 0.0
  %229 = vmatpush1.msra.mxu0 0.0
  %230 = vmatprep.subr.mxu0 0.0
  %231 = vmatpush1.msra.mxu0 0.0
  %232 = vmatprep.subr.mxu0 0.0
  %233 = vmatpush1.msra.mxu0 0.0
  %234 = vmatprep.subr.mxu0 0.0
  %235 = vmatpush1.msra.mxu0 0.0
  %236 = vmatprep.subr.mxu0 0.0
  %237 = vmatpush1.msra.mxu0 0.0
  %238 = vmatprep.subr.mxu0 0.0
  %239 = vmatpush1.msra.mxu0 0.0
  %240 = vmatprep.subr.mxu0 0.0
  %241 = vmatpush1.msra.mxu0 0.0
  %242 = vmatprep.subr.mxu0 0.0
  %243 = vmatpush1.msra.mxu0 0.0
  %244 = vmatprep.mubr.f32.mxu0 0.0
  %245 = vmatmul.mubr.f32.gmra.mrb[0].mxu0 %v178
  %v246 = vpop.f32.mrb[0].mxu0
  %v247 = vadd.f32 %v174, %v246
  %v248 = vpop.f32.mrb[0].mxu0
  %249 = vdwg.mxu0
  %v250 = vld [vmem:[%s7] sm:$0xff]
  %v251 = vld [vmem:[%s7 + $0x8] sm:$0xff]
  %v252 = vld [vmem:[%s7 + $0x10] sm:$0xff]
  %v253 = vld [vmem:[%s7 + $0x18] sm:$0xff]
  %v254 = vld [vmem:[%s8] sm:$0x1]
  %v256 = vlaneseq
  %v257 = vshrl.u32 %v256, 7
  %v258 = vsub.s32 0, %v257
  %v259 = vrot.slane %v254, %v258
  %v262 = vsel %vm176, %v164, 0
  %264 = vmatprep.subr.mxu0 0.0
  %265 = vmatpush1.msra.mxu0 %v250
  %266 = vmatprep.subr.mxu0 0.0
  %267 = vmatpush1.msra.mxu0 %v251
  %268 = vmatprep.subr.mxu0 0.0
  %269 = vmatpush1.msra.mxu0 %v252
  %270 = vmatprep.subr.mxu0 0.0
  %271 = vmatpush1.msra.mxu0 %v253
  %272 = vmatprep.subr.mxu0 0.0
  %273 = vmatpush1.msra.mxu0 0.0
  %274 = vmatprep.subr.mxu0 0.0
  %275 = vmatpush1.msra.mxu0 0.0
  %276 = vmatprep.subr.mxu0 0.0
  %277 = vmatpush1.msra.mxu0 0.0
  %278 = vmatprep.subr.mxu0 0.0
  %279 = vmatpush1.msra.mxu0 0.0
  %280 = vmatprep.subr.mxu0 0.0
  %281 = vmatpush1.msra.mxu0 0.0
  %282 = vmatprep.subr.mxu0 0.0
  %283 = vmatpush1.msra.mxu0 0.0
  %284 = vmatprep.subr.mxu0 0.0
  %285 = vmatpush1.msra.mxu0 0.0
  %286 = vmatprep.subr.mxu0 0.0
  %287 = vmatpush1.msra.mxu0 0.0
  %288 = vmatprep.subr.mxu0 0.0
  %289 = vmatpush1.msra.mxu0 0.0
  %290 = vmatprep.subr.mxu0 0.0
  %291 = vmatpush1.msra.mxu0 0.0
  %292 = vmatprep.subr.mxu0 0.0
  %293 = vmatpush1.msra.mxu0 0.0
  %294 = vmatprep.subr.mxu0 0.0
  %295 = vmatpush1.msra.mxu0 0.0
  %296 = vmatprep.subr.mxu0 0.0
  %297 = vmatpush1.msra.mxu0 0.0
  %298 = vmatprep.subr.mxu0 0.0
  %299 = vmatpush1.msra.mxu0 0.0
  %300 = vmatprep.subr.mxu0 0.0
  %301 = vmatpush1.msra.mxu0 0.0
  %302 = vmatprep.subr.mxu0 0.0
  %303 = vmatpush1.msra.mxu0 0.0
  %304 = vmatprep.subr.mxu0 0.0
  %305 = vmatpush1.msra.mxu0 0.0
  %306 = vmatprep.subr.mxu0 0.0
  %307 = vmatpush1.msra.mxu0 0.0
  %308 = vmatprep.subr.mxu0 0.0
  %309 = vmatpush1.msra.mxu0 0.0
  %310 = vmatprep.subr.mxu0 0.0
  %311 = vmatpush1.msra.mxu0 0.0
  %312 = vmatprep.subr.mxu0 0.0
  %313 = vmatpush1.msra.mxu0 0.0
  %314 = vmatprep.subr.mxu0 0.0
  %315 = vmatpush1.msra.mxu0 0.0
  %316 = vmatprep.subr.mxu0 0.0
  %317 = vmatpush1.msra.mxu0 0.0
  %318 = vmatprep.subr.mxu0 0.0
  %319 = vmatpush1.msra.mxu0 0.0
  %320 = vmatprep.subr.mxu0 0.0
  %321 = vmatpush1.msra.mxu0 0.0
  %322 = vmatprep.subr.mxu0 0.0
  %323 = vmatpush1.msra.mxu0 0.0
  %324 = vmatprep.subr.mxu0 0.0
  %325 = vmatpush1.msra.mxu0 0.0
  %326 = vmatprep.subr.mxu0 0.0
  %327 = vmatpush1.msra.mxu0 0.0
  %328 = vmatprep.mubr.f32.mxu0 0.0
  %329 = vmatmul.mubr.f32.gmra.mrb[0].mxu0 %v262
  %v330 = vpop.f32.mrb[0].mxu0
  %v331 = vadd.f32 %v259, %v330
  %v332 = vpop.f32.mrb[0].mxu0
  %333 = vdwg.mxu0
  %v334 = vadd.f32 %v247, %v331
  %v335 = vxor.u32 %v334, 2147483648
  %v336 = vmul.f32 %v335, 1.442695
  %v337 = vpow.pop %v336
  %v338 = vadd.f32 %v337, 1.0
  %v339 = vrcp.pop %v338
  %v340 = vmul.f32 1.0, %v339
  %342 = vrot.lane.b32.xlu0 %v331, 64
  %v343 = vpop.permute.xlu0 %342
  %v345 = vmul.f32 %v340, %v343
  %347 = vrot.lane.b32.xlu0 %v345, 64
  %v348 = vpop.permute.xlu0 %347
  %v350 = vadd.f32 %v247, %v348
  %v351 = vtanh.pop %v350
  %v352 = vsub.f32 1.0, %v340
  %354 = vrot.lane.b32.xlu0 %v351, 96
  %v355 = vpop.permute.xlu0 %354
  %v357 = vmul.f32 %v352, %v355
  %358 = vrot.lane.b32.xlu0 %v164, 32
  %v359 = vpop.permute.xlu0 %358
  %v361 = vmul.f32 %v340, %v359
  %v362 = vadd.f32 %v357, %v361
  %v363 = vld [vmem:[%s9] sm:$0xff]
  %v364 = vld [vmem:[%s9 + $0x8] sm:$0xff]
  %v365 = vld [vmem:[%s9 + $0x10] sm:$0xff]
  %v366 = vld [vmem:[%s9 + $0x18] sm:$0xff]
  %v367 = vld [vmem:[%s10] sm:$0x1]
  %v369 = vlaneseq
  %v370 = vshrl.u32 %v369, 7
  %v371 = vsub.s32 0, %v370
  %v372 = vrot.slane %v367, %v371
  %375 = vrot.lane.b32.xlu0 %v362, 96
  %v376 = vpop.permute.xlu0 %375
  %v377 = vsel %vm176, %v376, 0
  %379 = vmatprep.subr.mxu0 0.0
  %380 = vmatpush1.msra.mxu0 %v363
  %381 = vmatprep.subr.mxu0 0.0
  %382 = vmatpush1.msra.mxu0 %v364
  %383 = vmatprep.subr.mxu0 0.0
  %384 = vmatpush1.msra.mxu0 %v365
  %385 = vmatprep.subr.mxu0 0.0
  %386 = vmatpush1.msra.mxu0 %v366
  %387 = vmatprep.subr.mxu0 0.0
  %388 = vmatpush1.msra.mxu0 0.0
  %389 = vmatprep.subr.mxu0 0.0
  %390 = vmatpush1.msra.mxu0 0.0
  %391 = vmatprep.subr.mxu0 0.0
  %392 = vmatpush1.msra.mxu0 0.0
  %393 = vmatprep.subr.mxu0 0.0
  %394 = vmatpush1.msra.mxu0 0.0
  %395 = vmatprep.subr.mxu0 0.0
  %396 = vmatpush1.msra.mxu0 0.0
  %397 = vmatprep.subr.mxu0 0.0
  %398 = vmatpush1.msra.mxu0 0.0
  %399 = vmatprep.subr.mxu0 0.0
  %400 = vmatpush1.msra.mxu0 0.0
  %401 = vmatprep.subr.mxu0 0.0
  %402 = vmatpush1.msra.mxu0 0.0
  %403 = vmatprep.subr.mxu0 0.0
  %404 = vmatpush1.msra.mxu0 0.0
  %405 = vmatprep.subr.mxu0 0.0
  %406 = vmatpush1.msra.mxu0 0.0
  %407 = vmatprep.subr.mxu0 0.0
  %408 = vmatpush1.msra.mxu0 0.0
  %409 = vmatprep.subr.mxu0 0.0
  %410 = vmatpush1.msra.mxu0 0.0
  %411 = vmatprep.subr.mxu0 0.0
  %412 = vmatpush1.msra.mxu0 0.0
  %413 = vmatprep.subr.mxu0 0.0
  %414 = vmatpush1.msra.mxu0 0.0
  %415 = vmatprep.subr.mxu0 0.0
  %416 = vmatpush1.msra.mxu0 0.0
  %417 = vmatprep.subr.mxu0 0.0
  %418 = vmatpush1.msra.mxu0 0.0
  %419 = vmatprep.subr.mxu0 0.0
  %420 = vmatpush1.msra.mxu0 0.0
  %421 = vmatprep.subr.mxu0 0.0
  %422 = vmatpush1.msra.mxu0 0.0
  %423 = vmatprep.subr.mxu0 0.0
  %424 = vmatpush1.msra.mxu0 0.0
  %425 = vmatprep.subr.mxu0 0.0
  %426 = vmatpush1.msra.mxu0 0.0
  %427 = vmatprep.subr.mxu0 0.0
  %428 = vmatpush1.msra.mxu0 0.0
  %429 = vmatprep.subr.mxu0 0.0
  %430 = vmatpush1.msra.mxu0 0.0
  %431 = vmatprep.subr.mxu0 0.0
  %432 = vmatpush1.msra.mxu0 0.0
  %433 = vmatprep.subr.mxu0 0.0
  %434 = vmatpush1.msra.mxu0 0.0
  %435 = vmatprep.subr.mxu0 0.0
  %436 = vmatpush1.msra.mxu0 0.0
  %437 = vmatprep.subr.mxu0 0.0
  %438 = vmatpush1.msra.mxu0 0.0
  %439 = vmatprep.subr.mxu0 0.0
  %440 = vmatpush1.msra.mxu0 0.0
  %441 = vmatprep.subr.mxu0 0.0
  %442 = vmatpush1.msra.mxu0 0.0
  %443 = vmatprep.mubr.f32.mxu0 0.0
  %444 = vmatmul.mubr.f32.gmra.mrb[0].mxu0 %v377
  %v445 = vpop.f32.mrb[0].mxu0
  %v446 = vadd.f32 %v372, %v445
  %v447 = vpop.f32.mrb[0].mxu0
  %448 = vdwg.mxu0
  %vm449 = vcmp.gt.f32.partialorder %v446, 0.0
  %v450 = vmul.f32 %v446, 0.01
  %v451 = vsel %vm449, %v446, %v450
  %v452 = vld [vmem:[%s11] sm:$0xff]
  %v453 = vld [vmem:[%s11 + $0x8] sm:$0xff]
  %v454 = vld [vmem:[%s11 + $0x10] sm:$0xff]
  %v455 = vld [vmem:[%s11 + $0x18] sm:$0xff]
  %v456 = vld [vmem:[%s12] sm:$0x1]
  %v458 = vlaneseq
  %v459 = vshrl.u32 %v458, 7
  %v460 = vsub.s32 0, %v459
  %v461 = vrot.slane %v456, %v460
  %v464 = vsel %vm176, %v451, 0
  %466 = vmatprep.subr.mxu0 0.0
  %467 = vmatpush1.msra.mxu0 %v452
  %468 = vmatprep.subr.mxu0 0.0
  %469 = vmatpush1.msra.mxu0 %v453
  %470 = vmatprep.subr.mxu0 0.0
  %471 = vmatpush1.msra.mxu0 %v454
  %472 = vmatprep.subr.mxu0 0.0
  %473 = vmatpush1.msra.mxu0 %v455
  %474 = vmatprep.subr.mxu0 0.0
  %475 = vmatpush1.msra.mxu0 0.0
  %476 = vmatprep.subr.mxu0 0.0
  %477 = vmatpush1.msra.mxu0 0.0
  %478 = vmatprep.subr.mxu0 0.0
  %479 = vmatpush1.msra.mxu0 0.0
  %480 = vmatprep.subr.mxu0 0.0
  %481 = vmatpush1.msra.mxu0 0.0
  %482 = vmatprep.subr.mxu0 0.0
  %483 = vmatpush1.msra.mxu0 0.0
  %484 = vmatprep.subr.mxu0 0.0
  %485 = vmatpush1.msra.mxu0 0.0
  %486 = vmatprep.subr.mxu0 0.0
  %487 = vmatpush1.msra.mxu0 0.0
  %488 = vmatprep.subr.mxu0 0.0
  %489 = vmatpush1.msra.mxu0 0.0
  %490 = vmatprep.subr.mxu0 0.0
  %491 = vmatpush1.msra.mxu0 0.0
  %492 = vmatprep.subr.mxu0 0.0
  %493 = vmatpush1.msra.mxu0 0.0
  %494 = vmatprep.subr.mxu0 0.0
  %495 = vmatpush1.msra.mxu0 0.0
  %496 = vmatprep.subr.mxu0 0.0
  %497 = vmatpush1.msra.mxu0 0.0
  %498 = vmatprep.subr.mxu0 0.0
  %499 = vmatpush1.msra.mxu0 0.0
  %500 = vmatprep.subr.mxu0 0.0
  %501 = vmatpush1.msra.mxu0 0.0
  %502 = vmatprep.subr.mxu0 0.0
  %503 = vmatpush1.msra.mxu0 0.0
  %504 = vmatprep.subr.mxu0 0.0
  %505 = vmatpush1.msra.mxu0 0.0
  %506 = vmatprep.subr.mxu0 0.0
  %507 = vmatpush1.msra.mxu0 0.0
  %508 = vmatprep.subr.mxu0 0.0
  %509 = vmatpush1.msra.mxu0 0.0
  %510 = vmatprep.subr.mxu0 0.0
  %511 = vmatpush1.msra.mxu0 0.0
  %512 = vmatprep.subr.mxu0 0.0
  %513 = vmatpush1.msra.mxu0 0.0
  %514 = vmatprep.subr.mxu0 0.0
  %515 = vmatpush1.msra.mxu0 0.0
  %516 = vmatprep.subr.mxu0 0.0
  %517 = vmatpush1.msra.mxu0 0.0
  %518 = vmatprep.subr.mxu0 0.0
  %519 = vmatpush1.msra.mxu0 0.0
  %520 = vmatprep.subr.mxu0 0.0
  %521 = vmatpush1.msra.mxu0 0.0
  %522 = vmatprep.subr.mxu0 0.0
  %523 = vmatpush1.msra.mxu0 0.0
  %524 = vmatprep.subr.mxu0 0.0
  %525 = vmatpush1.msra.mxu0 0.0
  %526 = vmatprep.subr.mxu0 0.0
  %527 = vmatpush1.msra.mxu0 0.0
  %528 = vmatprep.subr.mxu0 0.0
  %529 = vmatpush1.msra.mxu0 0.0
  %530 = vmatprep.mubr.f32.mxu0 0.0
  %531 = vmatmul.mubr.f32.gmra.mrb[0].mxu0 %v464
  %v532 = vpop.f32.mrb[0].mxu0
  %v533 = vadd.f32 %v461, %v532
  %v534 = vpop.f32.mrb[0].mxu0
  %535 = vdwg.mxu0
  %v536 = vmax.f32 %v533, -6.214608
  %v537 = vmul.f32 %v536, 0.5
  %v538 = vmul.f32 %v537, 1.442695
  %v539 = vpow.pop %v538
  %v540 = vld [vmem:[%s2] sm:$0x3f]
  %542 = vrot.lane.b32.xlu0 %v540, 24
  %v543 = vpop.permute.xlu0 %542
  %v545 = vmul.f32 %v539, %v543
  %547 = vrot.lane.b32.xlu0 %v545, 104
  %v548 = vpop.permute.xlu0 %547
  %v550 = vadd.f32 %v533, %v548
  %v551 = vld [vmem:[%s13] sm:$0xff]
  %v552 = vld [vmem:[%s13 + $0x8] sm:$0xff]
  %v553 = vld [vmem:[%s13 + $0x10] sm:$0xff]
  %v554 = vld [vmem:[%s13 + $0x18] sm:$0xff]
  %v555 = vld [vmem:[%s13 + $0x20] sm:$0xff]
  %v556 = vld [vmem:[%s13 + $0x28] sm:$0xff]
  %v557 = vld [vmem:[%s13 + $0x30] sm:$0xff]
  %v558 = vld [vmem:[%s13 + $0x38] sm:$0xff]
  %v559 = vld [vmem:[%s13 + $0x40] sm:$0xff]
  %v560 = vld [vmem:[%s13 + $0x48] sm:$0xff]
  %v561 = vld [vmem:[%s13 + $0x50] sm:$0xff]
  %v562 = vld [vmem:[%s13 + $0x58] sm:$0xff]
  %v563 = vld [vmem:[%s13 + $0x60] sm:$0xff]
  %v564 = vld [vmem:[%s13 + $0x68] sm:$0xff]
  %v565 = vld [vmem:[%s13 + $0x70] sm:$0xff]
  %v566 = vld [vmem:[%s13 + $0x78] sm:$0xff]
  %v567 = vld [vmem:[%s13 + $0x80] sm:$0xff]
  %v568 = vld [vmem:[%s13 + $0x88] sm:$0xff]
  %v569 = vld [vmem:[%s13 + $0x90] sm:$0xff]
  %v570 = vld [vmem:[%s13 + $0x98] sm:$0xff]
  %v571 = vld [vmem:[%s13 + $0xa0] sm:$0xff]
  %v572 = vld [vmem:[%s13 + $0xa8] sm:$0xff]
  %v573 = vld [vmem:[%s13 + $0xb0] sm:$0xff]
  %v574 = vld [vmem:[%s13 + $0xb8] sm:$0xff]
  %v575 = vld [vmem:[%s13 + $0xc0] sm:$0xff]
  %v576 = vld [vmem:[%s13 + $0xc8] sm:$0xff]
  %v577 = vld [vmem:[%s13 + $0xd0] sm:$0xff]
  %v578 = vld [vmem:[%s13 + $0xd8] sm:$0xff]
  %v579 = vld [vmem:[%s13 + $0xe0] sm:$0xff]
  %v580 = vld [vmem:[%s13 + $0xe8] sm:$0xff]
  %v581 = vld [vmem:[%s13 + $0xf0] sm:$0xff]
  %v582 = vld [vmem:[%s13 + $0xf8] sm:$0xff]
  %v583 = vld [vmem:[%s13 + $0x100] sm:$0xff]
  %v584 = vld [vmem:[%s13 + $0x108] sm:$0xff]
  %v585 = vld [vmem:[%s13 + $0x110] sm:$0xff]
  %v586 = vld [vmem:[%s13 + $0x118] sm:$0xff]
  %v587 = vld [vmem:[%s13 + $0x120] sm:$0xff]
  %v588 = vld [vmem:[%s13 + $0x128] sm:$0xff]
  %v589 = vld [vmem:[%s13 + $0x130] sm:$0xff]
  %v590 = vld [vmem:[%s13 + $0x138] sm:$0xff]
  %v591 = vld [vmem:[%s13 + $0x140] sm:$0xff]
  %v592 = vld [vmem:[%s13 + $0x148] sm:$0xff]
  %v593 = vld [vmem:[%s13 + $0x150] sm:$0xff]
  %v594 = vld [vmem:[%s13 + $0x158] sm:$0xff]
  %v595 = vld [vmem:[%s13 + $0x160] sm:$0xff]
  %v596 = vld [vmem:[%s13 + $0x168] sm:$0xff]
  %v597 = vld [vmem:[%s13 + $0x170] sm:$0xff]
  %v598 = vld [vmem:[%s13 + $0x178] sm:$0xff]
  %v599 = vld [vmem:[%s13 + $0x180] sm:$0xff]
  %v600 = vld [vmem:[%s13 + $0x188] sm:$0xff]
  %v601 = vld [vmem:[%s13 + $0x190] sm:$0xff]
  %v602 = vld [vmem:[%s13 + $0x198] sm:$0xff]
  %v603 = vld [vmem:[%s13 + $0x1a0] sm:$0xff]
  %v604 = vld [vmem:[%s13 + $0x1a8] sm:$0xff]
  %v605 = vld [vmem:[%s13 + $0x1b0] sm:$0xff]
  %v606 = vld [vmem:[%s13 + $0x1b8] sm:$0xff]
  %v607 = vld [vmem:[%s13 + $0x1c0] sm:$0xff]
  %v608 = vld [vmem:[%s13 + $0x1c8] sm:$0xff]
  %v609 = vld [vmem:[%s13 + $0x1d0] sm:$0xff]
  %v610 = vld [vmem:[%s13 + $0x1d8] sm:$0xff]
  %v611 = vld [vmem:[%s13 + $0x1e0] sm:$0xff]
  %v612 = vld [vmem:[%s13 + $0x1e8] sm:$0xff]
  %v613 = vld [vmem:[%s13 + $0x1f0] sm:$0xff]
  %v614 = vld [vmem:[%s13 + $0x1f8] sm:$0xff]
  %v615 = vld [vmem:[%s13 + $0x200] sm:$0xff]
  %v616 = vld [vmem:[%s13 + $0x208] sm:$0xff]
  %v617 = vld [vmem:[%s13 + $0x210] sm:$0xff]
  %v618 = vld [vmem:[%s13 + $0x218] sm:$0xff]
  %v619 = vld [vmem:[%s13 + $0x220] sm:$0xff]
  %v620 = vld [vmem:[%s13 + $0x228] sm:$0xff]
  %v621 = vld [vmem:[%s13 + $0x230] sm:$0xff]
  %v622 = vld [vmem:[%s13 + $0x238] sm:$0xff]
  %v623 = vld [vmem:[%s13 + $0x240] sm:$0xff]
  %v624 = vld [vmem:[%s13 + $0x248] sm:$0xff]
  %v625 = vld [vmem:[%s13 + $0x250] sm:$0xff]
  %v626 = vld [vmem:[%s13 + $0x258] sm:$0xff]
  %v627 = vld [vmem:[%s13 + $0x260] sm:$0xff]
  %v628 = vld [vmem:[%s13 + $0x268] sm:$0xff]
  %v629 = vld [vmem:[%s13 + $0x270] sm:$0xff]
  %v630 = vld [vmem:[%s13 + $0x278] sm:$0xff]
  %v631 = vld [vmem:[%s13 + $0x280] sm:$0xff]
  %vm632 = vcmask 195584
  %v634 = vsel %vm632, %v550, 0
  %636 = vmatprep.subr.mxu0 %v552
  %637 = vmatpush1.msra.mxu0 %v551
  %638 = vmatprep.subr.mxu0 %v579
  %639 = vmatpush1.msra.mxu0 %v578
  %640 = vmatprep.subr.mxu0 %v606
  %641 = vmatpush1.msra.mxu0 %v605
  %642 = vmatprep.subr.mxu0 0.0
  %643 = vmatpush1.msra.mxu0 0.0
  %644 = vmatprep.subr.mxu0 0.0
  %645 = vmatpush1.msra.mxu0 0.0
  %646 = vmatprep.subr.mxu0 0.0
  %647 = vmatpush1.msra.mxu0 0.0
  %648 = vmatprep.subr.mxu0 0.0
  %649 = vmatpush1.msra.mxu0 0.0
  %650 = vmatprep.subr.mxu0 0.0
  %651 = vmatpush1.msra.mxu0 0.0
  %652 = vmatprep.subr.mxu0 0.0
  %653 = vmatpush1.msra.mxu0 0.0
  %654 = vmatprep.subr.mxu0 0.0
  %655 = vmatpush1.msra.mxu0 0.0
  %656 = vmatprep.subr.mxu0 0.0
  %657 = vmatpush1.msra.mxu0 0.0
  %658 = vmatprep.subr.mxu0 0.0
  %659 = vmatpush1.msra.mxu0 0.0
  %660 = vmatprep.subr.mxu0 0.0
  %661 = vmatpush1.msra.mxu0 0.0
  %662 = vmatprep.subr.mxu0 0.0
  %663 = vmatpush1.msra.mxu0 0.0
  %664 = vmatprep.subr.mxu0 0.0
  %665 = vmatpush1.msra.mxu0 0.0
  %666 = vmatprep.subr.mxu0 0.0
  %667 = vmatpush1.msra.mxu0 0.0
  %668 = vmatprep.subr.mxu0 0.0
  %669 = vmatpush1.msra.mxu0 0.0
  %670 = vmatprep.subr.mxu0 0.0
  %671 = vmatpush1.msra.mxu0 0.0
  %672 = vmatprep.subr.mxu0 0.0
  %673 = vmatpush1.msra.mxu0 0.0
  %674 = vmatprep.subr.mxu0 0.0
  %675 = vmatpush1.msra.mxu0 0.0
  %676 = vmatprep.subr.mxu0 0.0
  %677 = vmatpush1.msra.mxu0 0.0
  %678 = vmatprep.subr.mxu0 0.0
  %679 = vmatpush1.msra.mxu0 0.0
  %680 = vmatprep.subr.mxu0 0.0
  %681 = vmatpush1.msra.mxu0 0.0
  %682 = vmatprep.subr.mxu0 0.0
  %683 = vmatpush1.msra.mxu0 0.0
  %684 = vmatprep.subr.mxu0 0.0
  %685 = vmatpush1.msra.mxu0 0.0
  %686 = vmatprep.subr.mxu0 0.0
  %687 = vmatpush1.msra.mxu0 0.0
  %688 = vmatprep.subr.mxu0 0.0
  %689 = vmatpush1.msra.mxu0 0.0
  %690 = vmatprep.subr.mxu0 0.0
  %691 = vmatpush1.msra.mxu0 0.0
  %692 = vmatprep.subr.mxu0 0.0
  %693 = vmatpush1.msra.mxu0 0.0
  %694 = vmatprep.subr.mxu0 0.0
  %695 = vmatpush1.msra.mxu0 0.0
  %696 = vmatprep.subr.mxu0 0.0
  %697 = vmatpush1.msra.mxu0 0.0
  %698 = vmatprep.subr.mxu0 0.0
  %699 = vmatpush1.msra.mxu0 0.0
  %700 = vmatprep.mubr.f32.mxu0 0.0
  %701 = vmatmul.mubr.f32.gmra.mrb[0].mxu0 %v634
  %v702 = vpop.f32.mrb[0].mxu0
  %v703 = vadd.f32 0.0, %v702
  %v704 = vpop.f32.mrb[0].mxu0
  %v705 = vadd.f32 0.0, %v704
  %706 = vdwg.mxu0
  %707 = vmatprep.subr.mxu0 %v554
  %708 = vmatpush1.msra.mxu0 %v553
  %709 = vmatprep.subr.mxu0 %v581
  %710 = vmatpush1.msra.mxu0 %v580
  %711 = vmatprep.subr.mxu0 %v608
  %712 = vmatpush1.msra.mxu0 %v607
  %713 = vmatprep.subr.mxu0 0.0
  %714 = vmatpush1.msra.mxu0 0.0
  %715 = vmatprep.subr.mxu0 0.0
  %716 = vmatpush1.msra.mxu0 0.0
  %717 = vmatprep.subr.mxu0 0.0
  %718 = vmatpush1.msra.mxu0 0.0
  %719 = vmatprep.subr.mxu0 0.0
  %720 = vmatpush1.msra.mxu0 0.0
  %721 = vmatprep.subr.mxu0 0.0
  %722 = vmatpush1.msra.mxu0 0.0
  %723 = vmatprep.subr.mxu0 0.0
  %724 = vmatpush1.msra.mxu0 0.0
  %725 = vmatprep.subr.mxu0 0.0
  %726 = vmatpush1.msra.mxu0 0.0
  %727 = vmatprep.subr.mxu0 0.0
  %728 = vmatpush1.msra.mxu0 0.0
  %729 = vmatprep.subr.mxu0 0.0
  %730 = vmatpush1.msra.mxu0 0.0
  %731 = vmatprep.subr.mxu0 0.0
  %732 = vmatpush1.msra.mxu0 0.0
  %733 = vmatprep.subr.mxu0 0.0
  %734 = vmatpush1.msra.mxu0 0.0
  %735 = vmatprep.subr.mxu0 0.0
  %736 = vmatpush1.msra.mxu0 0.0
  %737 = vmatprep.subr.mxu0 0.0
  %738 = vmatpush1.msra.mxu0 0.0
  %739 = vmatprep.subr.mxu0 0.0
  %740 = vmatpush1.msra.mxu0 0.0
  %741 = vmatprep.subr.mxu0 0.0
  %742 = vmatpush1.msra.mxu0 0.0
  %743 = vmatprep.subr.mxu0 0.0
  %744 = vmatpush1.msra.mxu0 0.0
  %745 = vmatprep.subr.mxu0 0.0
  %746 = vmatpush1.msra.mxu0 0.0
  %747 = vmatprep.subr.mxu0 0.0
  %748 = vmatpush1.msra.mxu0 0.0
  %749 = vmatprep.subr.mxu0 0.0
  %750 = vmatpush1.msra.mxu0 0.0
  %751 = vmatprep.subr.mxu0 0.0
  %752 = vmatpush1.msra.mxu0 0.0
  %753 = vmatprep.subr.mxu0 0.0
  %754 = vmatpush1.msra.mxu0 0.0
  %755 = vmatprep.subr.mxu0 0.0
  %756 = vmatpush1.msra.mxu0 0.0
  %757 = vmatprep.subr.mxu0 0.0
  %758 = vmatpush1.msra.mxu0 0.0
  %759 = vmatprep.subr.mxu0 0.0
  %760 = vmatpush1.msra.mxu0 0.0
  %761 = vmatprep.subr.mxu0 0.0
  %762 = vmatpush1.msra.mxu0 0.0
  %763 = vmatprep.subr.mxu0 0.0
  %764 = vmatpush1.msra.mxu0 0.0
  %765 = vmatprep.subr.mxu0 0.0
  %766 = vmatpush1.msra.mxu0 0.0
  %767 = vmatprep.subr.mxu0 0.0
  %768 = vmatpush1.msra.mxu0 0.0
  %769 = vmatprep.subr.mxu0 0.0
  %770 = vmatpush1.msra.mxu0 0.0
  %771 = vmatprep.mubr.f32.mxu0 0.0
  %772 = vmatmul.mubr.f32.gmra.mrb[0].mxu0 %v634
  %v773 = vpop.f32.mrb[0].mxu0
  %v774 = vadd.f32 0.0, %v773
  %v775 = vpop.f32.mrb[0].mxu0
  %v776 = vadd.f32 0.0, %v775
  %777 = vdwg.mxu0
  %778 = vmatprep.subr.mxu0 %v556
  %779 = vmatpush1.msra.mxu0 %v555
  %780 = vmatprep.subr.mxu0 %v583
  %781 = vmatpush1.msra.mxu0 %v582
  %782 = vmatprep.subr.mxu0 %v610
  %783 = vmatpush1.msra.mxu0 %v609
  %784 = vmatprep.subr.mxu0 0.0
  %785 = vmatpush1.msra.mxu0 0.0
  %786 = vmatprep.subr.mxu0 0.0
  %787 = vmatpush1.msra.mxu0 0.0
  %788 = vmatprep.subr.mxu0 0.0
  %789 = vmatpush1.msra.mxu0 0.0
  %790 = vmatprep.subr.mxu0 0.0
  %791 = vmatpush1.msra.mxu0 0.0
  %792 = vmatprep.subr.mxu0 0.0
  %793 = vmatpush1.msra.mxu0 0.0
  %794 = vmatprep.subr.mxu0 0.0
  %795 = vmatpush1.msra.mxu0 0.0
  %796 = vmatprep.subr.mxu0 0.0
  %797 = vmatpush1.msra.mxu0 0.0
  %798 = vmatprep.subr.mxu0 0.0
  %799 = vmatpush1.msra.mxu0 0.0
  %800 = vmatprep.subr.mxu0 0.0
  %801 = vmatpush1.msra.mxu0 0.0
  %802 = vmatprep.subr.mxu0 0.0
  %803 = vmatpush1.msra.mxu0 0.0
  %804 = vmatprep.subr.mxu0 0.0
  %805 = vmatpush1.msra.mxu0 0.0
  %806 = vmatprep.subr.mxu0 0.0
  %807 = vmatpush1.msra.mxu0 0.0
  %808 = vmatprep.subr.mxu0 0.0
  %809 = vmatpush1.msra.mxu0 0.0
  %810 = vmatprep.subr.mxu0 0.0
  %811 = vmatpush1.msra.mxu0 0.0
  %812 = vmatprep.subr.mxu0 0.0
  %813 = vmatpush1.msra.mxu0 0.0
  %814 = vmatprep.subr.mxu0 0.0
  %815 = vmatpush1.msra.mxu0 0.0
  %816 = vmatprep.subr.mxu0 0.0
  %817 = vmatpush1.msra.mxu0 0.0
  %818 = vmatprep.subr.mxu0 0.0
  %819 = vmatpush1.msra.mxu0 0.0
  %820 = vmatprep.subr.mxu0 0.0
  %821 = vmatpush1.msra.mxu0 0.0
  %822 = vmatprep.subr.mxu0 0.0
  %823 = vmatpush1.msra.mxu0 0.0
  %824 = vmatprep.subr.mxu0 0.0
  %825 = vmatpush1.msra.mxu0 0.0
  %826 = vmatprep.subr.mxu0 0.0
  %827 = vmatpush1.msra.mxu0 0.0
  %828 = vmatprep.subr.mxu0 0.0
  %829 = vmatpush1.msra.mxu0 0.0
  %830 = vmatprep.subr.mxu0 0.0
  %831 = vmatpush1.msra.mxu0 0.0
  %832 = vmatprep.subr.mxu0 0.0
  %833 = vmatpush1.msra.mxu0 0.0
  %834 = vmatprep.subr.mxu0 0.0
  %835 = vmatpush1.msra.mxu0 0.0
  %836 = vmatprep.subr.mxu0 0.0
  %837 = vmatpush1.msra.mxu0 0.0
  %838 = vmatprep.subr.mxu0 0.0
  %839 = vmatpush1.msra.mxu0 0.0
  %840 = vmatprep.subr.mxu0 0.0
  %841 = vmatpush1.msra.mxu0 0.0
  %842 = vmatprep.mubr.f32.mxu0 0.0
  %843 = vmatmul.mubr.f32.gmra.mrb[0].mxu0 %v634
  %v844 = vpop.f32.mrb[0].mxu0
  %v845 = vadd.f32 0.0, %v844
  %v846 = vpop.f32.mrb[0].mxu0
  %v847 = vadd.f32 0.0, %v846
  %848 = vdwg.mxu0
  %849 = vmatprep.subr.mxu0 %v558
  %850 = vmatpush1.msra.mxu0 %v557
  %851 = vmatprep.subr.mxu0 %v585
  %852 = vmatpush1.msra.mxu0 %v584
  %853 = vmatprep.subr.mxu0 %v612
  %854 = vmatpush1.msra.mxu0 %v611
  %855 = vmatprep.subr.mxu0 0.0
  %856 = vmatpush1.msra.mxu0 0.0
  %857 = vmatprep.subr.mxu0 0.0
  %858 = vmatpush1.msra.mxu0 0.0
  %859 = vmatprep.subr.mxu0 0.0
  %860 = vmatpush1.msra.mxu0 0.0
  %861 = vmatprep.subr.mxu0 0.0
  %862 = vmatpush1.msra.mxu0 0.0
  %863 = vmatprep.subr.mxu0 0.0
  %864 = vmatpush1.msra.mxu0 0.0
  %865 = vmatprep.subr.mxu0 0.0
  %866 = vmatpush1.msra.mxu0 0.0
  %867 = vmatprep.subr.mxu0 0.0
  %868 = vmatpush1.msra.mxu0 0.0
  %869 = vmatprep.subr.mxu0 0.0
  %870 = vmatpush1.msra.mxu0 0.0
  %871 = vmatprep.subr.mxu0 0.0
  %872 = vmatpush1.msra.mxu0 0.0
  %873 = vmatprep.subr.mxu0 0.0
  %874 = vmatpush1.msra.mxu0 0.0
  %875 = vmatprep.subr.mxu0 0.0
  %876 = vmatpush1.msra.mxu0 0.0
  %877 = vmatprep.subr.mxu0 0.0
  %878 = vmatpush1.msra.mxu0 0.0
  %879 = vmatprep.subr.mxu0 0.0
  %880 = vmatpush1.msra.mxu0 0.0
  %881 = vmatprep.subr.mxu0 0.0
  %882 = vmatpush1.msra.mxu0 0.0
  %883 = vmatprep.subr.mxu0 0.0
  %884 = vmatpush1.msra.mxu0 0.0
  %885 = vmatprep.subr.mxu0 0.0
  %886 = vmatpush1.msra.mxu0 0.0
  %887 = vmatprep.subr.mxu0 0.0
  %888 = vmatpush1.msra.mxu0 0.0
  %889 = vmatprep.subr.mxu0 0.0
  %890 = vmatpush1.msra.mxu0 0.0
  %891 = vmatprep.subr.mxu0 0.0
  %892 = vmatpush1.msra.mxu0 0.0
  %893 = vmatprep.subr.mxu0 0.0
  %894 = vmatpush1.msra.mxu0 0.0
  %895 = vmatprep.subr.mxu0 0.0
  %896 = vmatpush1.msra.mxu0 0.0
  %897 = vmatprep.subr.mxu0 0.0
  %898 = vmatpush1.msra.mxu0 0.0
  %899 = vmatprep.subr.mxu0 0.0
  %900 = vmatpush1.msra.mxu0 0.0
  %901 = vmatprep.subr.mxu0 0.0
  %902 = vmatpush1.msra.mxu0 0.0
  %903 = vmatprep.subr.mxu0 0.0
  %904 = vmatpush1.msra.mxu0 0.0
  %905 = vmatprep.subr.mxu0 0.0
  %906 = vmatpush1.msra.mxu0 0.0
  %907 = vmatprep.subr.mxu0 0.0
  %908 = vmatpush1.msra.mxu0 0.0
  %909 = vmatprep.subr.mxu0 0.0
  %910 = vmatpush1.msra.mxu0 0.0
  %911 = vmatprep.subr.mxu0 0.0
  %912 = vmatpush1.msra.mxu0 0.0
  %913 = vmatprep.mubr.f32.mxu0 0.0
  %914 = vmatmul.mubr.f32.gmra.mrb[0].mxu0 %v634
  %v915 = vpop.f32.mrb[0].mxu0
  %v916 = vadd.f32 0.0, %v915
  %v917 = vpop.f32.mrb[0].mxu0
  %v918 = vadd.f32 0.0, %v917
  %919 = vdwg.mxu0
  %920 = vmatprep.subr.mxu0 %v560
  %921 = vmatpush1.msra.mxu0 %v559
  %922 = vmatprep.subr.mxu0 %v587
  %923 = vmatpush1.msra.mxu0 %v586
  %924 = vmatprep.subr.mxu0 %v614
  %925 = vmatpush1.msra.mxu0 %v613
  %926 = vmatprep.subr.mxu0 0.0
  %927 = vmatpush1.msra.mxu0 0.0
  %928 = vmatprep.subr.mxu0 0.0
  %929 = vmatpush1.msra.mxu0 0.0
  %930 = vmatprep.subr.mxu0 0.0
  %931 = vmatpush1.msra.mxu0 0.0
  %932 = vmatprep.subr.mxu0 0.0
  %933 = vmatpush1.msra.mxu0 0.0
  %934 = vmatprep.subr.mxu0 0.0
  %935 = vmatpush1.msra.mxu0 0.0
  %936 = vmatprep.subr.mxu0 0.0
  %937 = vmatpush1.msra.mxu0 0.0
  %938 = vmatprep.subr.mxu0 0.0
  %939 = vmatpush1.msra.mxu0 0.0
  %940 = vmatprep.subr.mxu0 0.0
  %941 = vmatpush1.msra.mxu0 0.0
  %942 = vmatprep.subr.mxu0 0.0
  %943 = vmatpush1.msra.mxu0 0.0
  %944 = vmatprep.subr.mxu0 0.0
  %945 = vmatpush1.msra.mxu0 0.0
  %946 = vmatprep.subr.mxu0 0.0
  %947 = vmatpush1.msra.mxu0 0.0
  %948 = vmatprep.subr.mxu0 0.0
  %949 = vmatpush1.msra.mxu0 0.0
  %950 = vmatprep.subr.mxu0 0.0
  %951 = vmatpush1.msra.mxu0 0.0
  %952 = vmatprep.subr.mxu0 0.0
  %953 = vmatpush1.msra.mxu0 0.0
  %954 = vmatprep.subr.mxu0 0.0
  %955 = vmatpush1.msra.mxu0 0.0
  %956 = vmatprep.subr.mxu0 0.0
  %957 = vmatpush1.msra.mxu0 0.0
  %958 = vmatprep.subr.mxu0 0.0
  %959 = vmatpush1.msra.mxu0 0.0
  %960 = vmatprep.subr.mxu0 0.0
  %961 = vmatpush1.msra.mxu0 0.0
  %962 = vmatprep.subr.mxu0 0.0
  %963 = vmatpush1.msra.mxu0 0.0
  %964 = vmatprep.subr.mxu0 0.0
  %965 = vmatpush1.msra.mxu0 0.0
  %966 = vmatprep.subr.mxu0 0.0
  %967 = vmatpush1.msra.mxu0 0.0
  %968 = vmatprep.subr.mxu0 0.0
  %969 = vmatpush1.msra.mxu0 0.0
  %970 = vmatprep.subr.mxu0 0.0
  %971 = vmatpush1.msra.mxu0 0.0
  %972 = vmatprep.subr.mxu0 0.0
  %973 = vmatpush1.msra.mxu0 0.0
  %974 = vmatprep.subr.mxu0 0.0
  %975 = vmatpush1.msra.mxu0 0.0
  %976 = vmatprep.subr.mxu0 0.0
  %977 = vmatpush1.msra.mxu0 0.0
  %978 = vmatprep.subr.mxu0 0.0
  %979 = vmatpush1.msra.mxu0 0.0
  %980 = vmatprep.subr.mxu0 0.0
  %981 = vmatpush1.msra.mxu0 0.0
  %982 = vmatprep.subr.mxu0 0.0
  %983 = vmatpush1.msra.mxu0 0.0
  %984 = vmatprep.mubr.f32.mxu0 0.0
  %985 = vmatmul.mubr.f32.gmra.mrb[0].mxu0 %v634
  %v986 = vpop.f32.mrb[0].mxu0
  %v987 = vadd.f32 0.0, %v986
  %v988 = vpop.f32.mrb[0].mxu0
  %v989 = vadd.f32 0.0, %v988
  %990 = vdwg.mxu0
  %991 = vmatprep.subr.mxu0 %v562
  %992 = vmatpush1.msra.mxu0 %v561
  %993 = vmatprep.subr.mxu0 %v589
  %994 = vmatpush1.msra.mxu0 %v588
  %995 = vmatprep.subr.mxu0 %v616
  %996 = vmatpush1.msra.mxu0 %v615
  %997 = vmatprep.subr.mxu0 0.0
  %998 = vmatpush1.msra.mxu0 0.0
  %999 = vmatprep.subr.mxu0 0.0
  %1000 = vmatpush1.msra.mxu0 0.0
  %1001 = vmatprep.subr.mxu0 0.0
  %1002 = vmatpush1.msra.mxu0 0.0
  %1003 = vmatprep.subr.mxu0 0.0
  %1004 = vmatpush1.msra.mxu0 0.0
  %1005 = vmatprep.subr.mxu0 0.0
  %1006 = vmatpush1.msra.mxu0 0.0
  %1007 = vmatprep.subr.mxu0 0.0
  %1008 = vmatpush1.msra.mxu0 0.0
  %1009 = vmatprep.subr.mxu0 0.0
  %1010 = vmatpush1.msra.mxu0 0.0
  %1011 = vmatprep.subr.mxu0 0.0
  %1012 = vmatpush1.msra.mxu0 0.0
  %1013 = vmatprep.subr.mxu0 0.0
  %1014 = vmatpush1.msra.mxu0 0.0
  %1015 = vmatprep.subr.mxu0 0.0
  %1016 = vmatpush1.msra.mxu0 0.0
  %1017 = vmatprep.subr.mxu0 0.0
  %1018 = vmatpush1.msra.mxu0 0.0
  %1019 = vmatprep.subr.mxu0 0.0
  %1020 = vmatpush1.msra.mxu0 0.0
  %1021 = vmatprep.subr.mxu0 0.0
  %1022 = vmatpush1.msra.mxu0 0.0
  %1023 = vmatprep.subr.mxu0 0.0
  %1024 = vmatpush1.msra.mxu0 0.0
  %1025 = vmatprep.subr.mxu0 0.0
  %1026 = vmatpush1.msra.mxu0 0.0
  %1027 = vmatprep.subr.mxu0 0.0
  %1028 = vmatpush1.msra.mxu0 0.0
  %1029 = vmatprep.subr.mxu0 0.0
  %1030 = vmatpush1.msra.mxu0 0.0
  %1031 = vmatprep.subr.mxu0 0.0
  %1032 = vmatpush1.msra.mxu0 0.0
  %1033 = vmatprep.subr.mxu0 0.0
  %1034 = vmatpush1.msra.mxu0 0.0
  %1035 = vmatprep.subr.mxu0 0.0
  %1036 = vmatpush1.msra.mxu0 0.0
  %1037 = vmatprep.subr.mxu0 0.0
  %1038 = vmatpush1.msra.mxu0 0.0
  %1039 = vmatprep.subr.mxu0 0.0
  %1040 = vmatpush1.msra.mxu0 0.0
  %1041 = vmatprep.subr.mxu0 0.0
  %1042 = vmatpush1.msra.mxu0 0.0
  %1043 = vmatprep.subr.mxu0 0.0
  %1044 = vmatpush1.msra.mxu0 0.0
  %1045 = vmatprep.subr.mxu0 0.0
  %1046 = vmatpush1.msra.mxu0 0.0
  %1047 = vmatprep.subr.mxu0 0.0
  %1048 = vmatpush1.msra.mxu0 0.0
  %1049 = vmatprep.subr.mxu0 0.0
  %1050 = vmatpush1.msra.mxu0 0.0
  %1051 = vmatprep.subr.mxu0 0.0
  %1052 = vmatpush1.msra.mxu0 0.0
  %1053 = vmatprep.subr.mxu0 0.0
  %1054 = vmatpush1.msra.mxu0 0.0
  %1055 = vmatprep.mubr.f32.mxu0 0.0
  %1056 = vmatmul.mubr.f32.gmra.mrb[0].mxu0 %v634
  %v1057 = vpop.f32.mrb[0].mxu0
  %v1058 = vadd.f32 0.0, %v1057
  %v1059 = vpop.f32.mrb[0].mxu0
  %v1060 = vadd.f32 0.0, %v1059
  %1061 = vdwg.mxu0
  %1062 = vmatprep.subr.mxu0 %v564
  %1063 = vmatpush1.msra.mxu0 %v563
  %1064 = vmatprep.subr.mxu0 %v591
  %1065 = vmatpush1.msra.mxu0 %v590
  %1066 = vmatprep.subr.mxu0 %v618
  %1067 = vmatpush1.msra.mxu0 %v617
  %1068 = vmatprep.subr.mxu0 0.0
  %1069 = vmatpush1.msra.mxu0 0.0
  %1070 = vmatprep.subr.mxu0 0.0
  %1071 = vmatpush1.msra.mxu0 0.0
  %1072 = vmatprep.subr.mxu0 0.0
  %1073 = vmatpush1.msra.mxu0 0.0
  %1074 = vmatprep.subr.mxu0 0.0
  %1075 = vmatpush1.msra.mxu0 0.0
  %1076 = vmatprep.subr.mxu0 0.0
  %1077 = vmatpush1.msra.mxu0 0.0
  %1078 = vmatprep.subr.mxu0 0.0
  %1079 = vmatpush1.msra.mxu0 0.0
  %1080 = vmatprep.subr.mxu0 0.0
  %1081 = vmatpush1.msra.mxu0 0.0
  %1082 = vmatprep.subr.mxu0 0.0
  %1083 = vmatpush1.msra.mxu0 0.0
  %1084 = vmatprep.subr.mxu0 0.0
  %1085 = vmatpush1.msra.mxu0 0.0
  %1086 = vmatprep.subr.mxu0 0.0
  %1087 = vmatpush1.msra.mxu0 0.0
  %1088 = vmatprep.subr.mxu0 0.0
  %1089 = vmatpush1.msra.mxu0 0.0
  %1090 = vmatprep.subr.mxu0 0.0
  %1091 = vmatpush1.msra.mxu0 0.0
  %1092 = vmatprep.subr.mxu0 0.0
  %1093 = vmatpush1.msra.mxu0 0.0
  %1094 = vmatprep.subr.mxu0 0.0
  %1095 = vmatpush1.msra.mxu0 0.0
  %1096 = vmatprep.subr.mxu0 0.0
  %1097 = vmatpush1.msra.mxu0 0.0
  %1098 = vmatprep.subr.mxu0 0.0
  %1099 = vmatpush1.msra.mxu0 0.0
  %1100 = vmatprep.subr.mxu0 0.0
  %1101 = vmatpush1.msra.mxu0 0.0
  %1102 = vmatprep.subr.mxu0 0.0
  %1103 = vmatpush1.msra.mxu0 0.0
  %1104 = vmatprep.subr.mxu0 0.0
  %1105 = vmatpush1.msra.mxu0 0.0
  %1106 = vmatprep.subr.mxu0 0.0
  %1107 = vmatpush1.msra.mxu0 0.0
  %1108 = vmatprep.subr.mxu0 0.0
  %1109 = vmatpush1.msra.mxu0 0.0
  %1110 = vmatprep.subr.mxu0 0.0
  %1111 = vmatpush1.msra.mxu0 0.0
  %1112 = vmatprep.subr.mxu0 0.0
  %1113 = vmatpush1.msra.mxu0 0.0
  %1114 = vmatprep.subr.mxu0 0.0
  %1115 = vmatpush1.msra.mxu0 0.0
  %1116 = vmatprep.subr.mxu0 0.0
  %1117 = vmatpush1.msra.mxu0 0.0
  %1118 = vmatprep.subr.mxu0 0.0
  %1119 = vmatpush1.msra.mxu0 0.0
  %1120 = vmatprep.subr.mxu0 0.0
  %1121 = vmatpush1.msra.mxu0 0.0
  %1122 = vmatprep.subr.mxu0 0.0
  %1123 = vmatpush1.msra.mxu0 0.0
  %1124 = vmatprep.subr.mxu0 0.0
  %1125 = vmatpush1.msra.mxu0 0.0
  %1126 = vmatprep.mubr.f32.mxu0 0.0
  %1127 = vmatmul.mubr.f32.gmra.mrb[0].mxu0 %v634
  %v1128 = vpop.f32.mrb[0].mxu0
  %v1129 = vadd.f32 0.0, %v1128
  %v1130 = vpop.f32.mrb[0].mxu0
  %v1131 = vadd.f32 0.0, %v1130
  %1132 = vdwg.mxu0
  %1133 = vmatprep.subr.mxu0 %v566
  %1134 = vmatpush1.msra.mxu0 %v565
  %1135 = vmatprep.subr.mxu0 %v593
  %1136 = vmatpush1.msra.mxu0 %v592
  %1137 = vmatprep.subr.mxu0 %v620
  %1138 = vmatpush1.msra.mxu0 %v619
  %1139 = vmatprep.subr.mxu0 0.0
  %1140 = vmatpush1.msra.mxu0 0.0
  %1141 = vmatprep.subr.mxu0 0.0
  %1142 = vmatpush1.msra.mxu0 0.0
  %1143 = vmatprep.subr.mxu0 0.0
  %1144 = vmatpush1.msra.mxu0 0.0
  %1145 = vmatprep.subr.mxu0 0.0
  %1146 = vmatpush1.msra.mxu0 0.0
  %1147 = vmatprep.subr.mxu0 0.0
  %1148 = vmatpush1.msra.mxu0 0.0
  %1149 = vmatprep.subr.mxu0 0.0
  %1150 = vmatpush1.msra.mxu0 0.0
  %1151 = vmatprep.subr.mxu0 0.0
  %1152 = vmatpush1.msra.mxu0 0.0
  %1153 = vmatprep.subr.mxu0 0.0
  %1154 = vmatpush1.msra.mxu0 0.0
  %1155 = vmatprep.subr.mxu0 0.0
  %1156 = vmatpush1.msra.mxu0 0.0
  %1157 = vmatprep.subr.mxu0 0.0
  %1158 = vmatpush1.msra.mxu0 0.0
  %1159 = vmatprep.subr.mxu0 0.0
  %1160 = vmatpush1.msra.mxu0 0.0
  %1161 = vmatprep.subr.mxu0 0.0
  %1162 = vmatpush1.msra.mxu0 0.0
  %1163 = vmatprep.subr.mxu0 0.0
  %1164 = vmatpush1.msra.mxu0 0.0
  %1165 = vmatprep.subr.mxu0 0.0
  %1166 = vmatpush1.msra.mxu0 0.0
  %1167 = vmatprep.subr.mxu0 0.0
  %1168 = vmatpush1.msra.mxu0 0.0
  %1169 = vmatprep.subr.mxu0 0.0
  %1170 = vmatpush1.msra.mxu0 0.0
  %1171 = vmatprep.subr.mxu0 0.0
  %1172 = vmatpush1.msra.mxu0 0.0
  %1173 = vmatprep.subr.mxu0 0.0
  %1174 = vmatpush1.msra.mxu0 0.0
  %1175 = vmatprep.subr.mxu0 0.0
  %1176 = vmatpush1.msra.mxu0 0.0
  %1177 = vmatprep.subr.mxu0 0.0
  %1178 = vmatpush1.msra.mxu0 0.0
  %1179 = vmatprep.subr.mxu0 0.0
  %1180 = vmatpush1.msra.mxu0 0.0
  %1181 = vmatprep.subr.mxu0 0.0
  %1182 = vmatpush1.msra.mxu0 0.0
  %1183 = vmatprep.subr.mxu0 0.0
  %1184 = vmatpush1.msra.mxu0 0.0
  %1185 = vmatprep.subr.mxu0 0.0
  %1186 = vmatpush1.msra.mxu0 0.0
  %1187 = vmatprep.subr.mxu0 0.0
  %1188 = vmatpush1.msra.mxu0 0.0
  %1189 = vmatprep.subr.mxu0 0.0
  %1190 = vmatpush1.msra.mxu0 0.0
  %1191 = vmatprep.subr.mxu0 0.0
  %1192 = vmatpush1.msra.mxu0 0.0
  %1193 = vmatprep.subr.mxu0 0.0
  %1194 = vmatpush1.msra.mxu0 0.0
  %1195 = vmatprep.subr.mxu0 0.0
  %1196 = vmatpush1.msra.mxu0 0.0
  %1197 = vmatprep.mubr.f32.mxu0 0.0
  %1198 = vmatmul.mubr.f32.gmra.mrb[0].mxu0 %v634
  %v1199 = vpop.f32.mrb[0].mxu0
  %v1200 = vadd.f32 0.0, %v1199
  %v1201 = vpop.f32.mrb[0].mxu0
  %v1202 = vadd.f32 0.0, %v1201
  %1203 = vdwg.mxu0
  %1204 = vmatprep.subr.mxu0 %v568
  %1205 = vmatpush1.msra.mxu0 %v567
  %1206 = vmatprep.subr.mxu0 %v595
  %1207 = vmatpush1.msra.mxu0 %v594
  %1208 = vmatprep.subr.mxu0 %v622
  %1209 = vmatpush1.msra.mxu0 %v621
  %1210 = vmatprep.subr.mxu0 0.0
  %1211 = vmatpush1.msra.mxu0 0.0
  %1212 = vmatprep.subr.mxu0 0.0
  %1213 = vmatpush1.msra.mxu0 0.0
  %1214 = vmatprep.subr.mxu0 0.0
  %1215 = vmatpush1.msra.mxu0 0.0
  %1216 = vmatprep.subr.mxu0 0.0
  %1217 = vmatpush1.msra.mxu0 0.0
  %1218 = vmatprep.subr.mxu0 0.0
  %1219 = vmatpush1.msra.mxu0 0.0
  %1220 = vmatprep.subr.mxu0 0.0
  %1221 = vmatpush1.msra.mxu0 0.0
  %1222 = vmatprep.subr.mxu0 0.0
  %1223 = vmatpush1.msra.mxu0 0.0
  %1224 = vmatprep.subr.mxu0 0.0
  %1225 = vmatpush1.msra.mxu0 0.0
  %1226 = vmatprep.subr.mxu0 0.0
  %1227 = vmatpush1.msra.mxu0 0.0
  %1228 = vmatprep.subr.mxu0 0.0
  %1229 = vmatpush1.msra.mxu0 0.0
  %1230 = vmatprep.subr.mxu0 0.0
  %1231 = vmatpush1.msra.mxu0 0.0
  %1232 = vmatprep.subr.mxu0 0.0
  %1233 = vmatpush1.msra.mxu0 0.0
  %1234 = vmatprep.subr.mxu0 0.0
  %1235 = vmatpush1.msra.mxu0 0.0
  %1236 = vmatprep.subr.mxu0 0.0
  %1237 = vmatpush1.msra.mxu0 0.0
  %1238 = vmatprep.subr.mxu0 0.0
  %1239 = vmatpush1.msra.mxu0 0.0
  %1240 = vmatprep.subr.mxu0 0.0
  %1241 = vmatpush1.msra.mxu0 0.0
  %1242 = vmatprep.subr.mxu0 0.0
  %1243 = vmatpush1.msra.mxu0 0.0
  %1244 = vmatprep.subr.mxu0 0.0
  %1245 = vmatpush1.msra.mxu0 0.0
  %1246 = vmatprep.subr.mxu0 0.0
  %1247 = vmatpush1.msra.mxu0 0.0
  %1248 = vmatprep.subr.mxu0 0.0
  %1249 = vmatpush1.msra.mxu0 0.0
  %1250 = vmatprep.subr.mxu0 0.0
  %1251 = vmatpush1.msra.mxu0 0.0
  %1252 = vmatprep.subr.mxu0 0.0
  %1253 = vmatpush1.msra.mxu0 0.0
  %1254 = vmatprep.subr.mxu0 0.0
  %1255 = vmatpush1.msra.mxu0 0.0
  %1256 = vmatprep.subr.mxu0 0.0
  %1257 = vmatpush1.msra.mxu0 0.0
  %1258 = vmatprep.subr.mxu0 0.0
  %1259 = vmatpush1.msra.mxu0 0.0
  %1260 = vmatprep.subr.mxu0 0.0
  %1261 = vmatpush1.msra.mxu0 0.0
  %1262 = vmatprep.subr.mxu0 0.0
  %1263 = vmatpush1.msra.mxu0 0.0
  %1264 = vmatprep.subr.mxu0 0.0
  %1265 = vmatpush1.msra.mxu0 0.0
  %1266 = vmatprep.subr.mxu0 0.0
  %1267 = vmatpush1.msra.mxu0 0.0
  %1268 = vmatprep.mubr.f32.mxu0 0.0
  %1269 = vmatmul.mubr.f32.gmra.mrb[0].mxu0 %v634
  %v1270 = vpop.f32.mrb[0].mxu0
  %v1271 = vadd.f32 0.0, %v1270
  %v1272 = vpop.f32.mrb[0].mxu0
  %v1273 = vadd.f32 0.0, %v1272
  %1274 = vdwg.mxu0
  %1275 = vmatprep.subr.mxu0 %v570
  %1276 = vmatpush1.msra.mxu0 %v569
  %1277 = vmatprep.subr.mxu0 %v597
  %1278 = vmatpush1.msra.mxu0 %v596
  %1279 = vmatprep.subr.mxu0 %v624
  %1280 = vmatpush1.msra.mxu0 %v623
  %1281 = vmatprep.subr.mxu0 0.0
  %1282 = vmatpush1.msra.mxu0 0.0
  %1283 = vmatprep.subr.mxu0 0.0
  %1284 = vmatpush1.msra.mxu0 0.0
  %1285 = vmatprep.subr.mxu0 0.0
  %1286 = vmatpush1.msra.mxu0 0.0
  %1287 = vmatprep.subr.mxu0 0.0
  %1288 = vmatpush1.msra.mxu0 0.0
  %1289 = vmatprep.subr.mxu0 0.0
  %1290 = vmatpush1.msra.mxu0 0.0
  %1291 = vmatprep.subr.mxu0 0.0
  %1292 = vmatpush1.msra.mxu0 0.0
  %1293 = vmatprep.subr.mxu0 0.0
  %1294 = vmatpush1.msra.mxu0 0.0
  %1295 = vmatprep.subr.mxu0 0.0
  %1296 = vmatpush1.msra.mxu0 0.0
  %1297 = vmatprep.subr.mxu0 0.0
  %1298 = vmatpush1.msra.mxu0 0.0
  %1299 = vmatprep.subr.mxu0 0.0
  %1300 = vmatpush1.msra.mxu0 0.0
  %1301 = vmatprep.subr.mxu0 0.0
  %1302 = vmatpush1.msra.mxu0 0.0
  %1303 = vmatprep.subr.mxu0 0.0
  %1304 = vmatpush1.msra.mxu0 0.0
  %1305 = vmatprep.subr.mxu0 0.0
  %1306 = vmatpush1.msra.mxu0 0.0
  %1307 = vmatprep.subr.mxu0 0.0
  %1308 = vmatpush1.msra.mxu0 0.0
  %1309 = vmatprep.subr.mxu0 0.0
  %1310 = vmatpush1.msra.mxu0 0.0
  %1311 = vmatprep.subr.mxu0 0.0
  %1312 = vmatpush1.msra.mxu0 0.0
  %1313 = vmatprep.subr.mxu0 0.0
  %1314 = vmatpush1.msra.mxu0 0.0
  %1315 = vmatprep.subr.mxu0 0.0
  %1316 = vmatpush1.msra.mxu0 0.0
  %1317 = vmatprep.subr.mxu0 0.0
  %1318 = vmatpush1.msra.mxu0 0.0
  %1319 = vmatprep.subr.mxu0 0.0
  %1320 = vmatpush1.msra.mxu0 0.0
  %1321 = vmatprep.subr.mxu0 0.0
  %1322 = vmatpush1.msra.mxu0 0.0
  %1323 = vmatprep.subr.mxu0 0.0
  %1324 = vmatpush1.msra.mxu0 0.0
  %1325 = vmatprep.subr.mxu0 0.0
  %1326 = vmatpush1.msra.mxu0 0.0
  %1327 = vmatprep.subr.mxu0 0.0
  %1328 = vmatpush1.msra.mxu0 0.0
  %1329 = vmatprep.subr.mxu0 0.0
  %1330 = vmatpush1.msra.mxu0 0.0
  %1331 = vmatprep.subr.mxu0 0.0
  %1332 = vmatpush1.msra.mxu0 0.0
  %1333 = vmatprep.subr.mxu0 0.0
  %1334 = vmatpush1.msra.mxu0 0.0
  %1335 = vmatprep.subr.mxu0 0.0
  %1336 = vmatpush1.msra.mxu0 0.0
  %1337 = vmatprep.subr.mxu0 0.0
  %1338 = vmatpush1.msra.mxu0 0.0
  %1339 = vmatprep.mubr.f32.mxu0 0.0
  %1340 = vmatmul.mubr.f32.gmra.mrb[0].mxu0 %v634
  %v1341 = vpop.f32.mrb[0].mxu0
  %v1342 = vadd.f32 0.0, %v1341
  %v1343 = vpop.f32.mrb[0].mxu0
  %v1344 = vadd.f32 0.0, %v1343
  %1345 = vdwg.mxu0
  %1346 = vmatprep.subr.mxu0 %v572
  %1347 = vmatpush1.msra.mxu0 %v571
  %1348 = vmatprep.subr.mxu0 %v599
  %1349 = vmatpush1.msra.mxu0 %v598
  %1350 = vmatprep.subr.mxu0 %v626
  %1351 = vmatpush1.msra.mxu0 %v625
  %1352 = vmatprep.subr.mxu0 0.0
  %1353 = vmatpush1.msra.mxu0 0.0
  %1354 = vmatprep.subr.mxu0 0.0
  %1355 = vmatpush1.msra.mxu0 0.0
  %1356 = vmatprep.subr.mxu0 0.0
  %1357 = vmatpush1.msra.mxu0 0.0
  %1358 = vmatprep.subr.mxu0 0.0
  %1359 = vmatpush1.msra.mxu0 0.0
  %1360 = vmatprep.subr.mxu0 0.0
  %1361 = vmatpush1.msra.mxu0 0.0
  %1362 = vmatprep.subr.mxu0 0.0
  %1363 = vmatpush1.msra.mxu0 0.0
  %1364 = vmatprep.subr.mxu0 0.0
  %1365 = vmatpush1.msra.mxu0 0.0
  %1366 = vmatprep.subr.mxu0 0.0
  %1367 = vmatpush1.msra.mxu0 0.0
  %1368 = vmatprep.subr.mxu0 0.0
  %1369 = vmatpush1.msra.mxu0 0.0
  %1370 = vmatprep.subr.mxu0 0.0
  %1371 = vmatpush1.msra.mxu0 0.0
  %1372 = vmatprep.subr.mxu0 0.0
  %1373 = vmatpush1.msra.mxu0 0.0
  %1374 = vmatprep.subr.mxu0 0.0
  %1375 = vmatpush1.msra.mxu0 0.0
  %1376 = vmatprep.subr.mxu0 0.0
  %1377 = vmatpush1.msra.mxu0 0.0
  %1378 = vmatprep.subr.mxu0 0.0
  %1379 = vmatpush1.msra.mxu0 0.0
  %1380 = vmatprep.subr.mxu0 0.0
  %1381 = vmatpush1.msra.mxu0 0.0
  %1382 = vmatprep.subr.mxu0 0.0
  %1383 = vmatpush1.msra.mxu0 0.0
  %1384 = vmatprep.subr.mxu0 0.0
  %1385 = vmatpush1.msra.mxu0 0.0
  %1386 = vmatprep.subr.mxu0 0.0
  %1387 = vmatpush1.msra.mxu0 0.0
  %1388 = vmatprep.subr.mxu0 0.0
  %1389 = vmatpush1.msra.mxu0 0.0
  %1390 = vmatprep.subr.mxu0 0.0
  %1391 = vmatpush1.msra.mxu0 0.0
  %1392 = vmatprep.subr.mxu0 0.0
  %1393 = vmatpush1.msra.mxu0 0.0
  %1394 = vmatprep.subr.mxu0 0.0
  %1395 = vmatpush1.msra.mxu0 0.0
  %1396 = vmatprep.subr.mxu0 0.0
  %1397 = vmatpush1.msra.mxu0 0.0
  %1398 = vmatprep.subr.mxu0 0.0
  %1399 = vmatpush1.msra.mxu0 0.0
  %1400 = vmatprep.subr.mxu0 0.0
  %1401 = vmatpush1.msra.mxu0 0.0
  %1402 = vmatprep.subr.mxu0 0.0
  %1403 = vmatpush1.msra.mxu0 0.0
  %1404 = vmatprep.subr.mxu0 0.0
  %1405 = vmatpush1.msra.mxu0 0.0
  %1406 = vmatprep.subr.mxu0 0.0
  %1407 = vmatpush1.msra.mxu0 0.0
  %1408 = vmatprep.subr.mxu0 0.0
  %1409 = vmatpush1.msra.mxu0 0.0
  %1410 = vmatprep.mubr.f32.mxu0 0.0
  %1411 = vmatmul.mubr.f32.gmra.mrb[0].mxu0 %v634
  %v1412 = vpop.f32.mrb[0].mxu0
  %v1413 = vadd.f32 0.0, %v1412
  %v1414 = vpop.f32.mrb[0].mxu0
  %v1415 = vadd.f32 0.0, %v1414
  %1416 = vdwg.mxu0
  %1417 = vmatprep.subr.mxu0 %v574
  %1418 = vmatpush1.msra.mxu0 %v573
  %1419 = vmatprep.subr.mxu0 %v601
  %1420 = vmatpush1.msra.mxu0 %v600
  %1421 = vmatprep.subr.mxu0 %v628
  %1422 = vmatpush1.msra.mxu0 %v627
  %1423 = vmatprep.subr.mxu0 0.0
  %1424 = vmatpush1.msra.mxu0 0.0
  %1425 = vmatprep.subr.mxu0 0.0
  %1426 = vmatpush1.msra.mxu0 0.0
  %1427 = vmatprep.subr.mxu0 0.0
  %1428 = vmatpush1.msra.mxu0 0.0
  %1429 = vmatprep.subr.mxu0 0.0
  %1430 = vmatpush1.msra.mxu0 0.0
  %1431 = vmatprep.subr.mxu0 0.0
  %1432 = vmatpush1.msra.mxu0 0.0
  %1433 = vmatprep.subr.mxu0 0.0
  %1434 = vmatpush1.msra.mxu0 0.0
  %1435 = vmatprep.subr.mxu0 0.0
  %1436 = vmatpush1.msra.mxu0 0.0
  %1437 = vmatprep.subr.mxu0 0.0
  %1438 = vmatpush1.msra.mxu0 0.0
  %1439 = vmatprep.subr.mxu0 0.0
  %1440 = vmatpush1.msra.mxu0 0.0
  %1441 = vmatprep.subr.mxu0 0.0
  %1442 = vmatpush1.msra.mxu0 0.0
  %1443 = vmatprep.subr.mxu0 0.0
  %1444 = vmatpush1.msra.mxu0 0.0
  %1445 = vmatprep.subr.mxu0 0.0
  %1446 = vmatpush1.msra.mxu0 0.0
  %1447 = vmatprep.subr.mxu0 0.0
  %1448 = vmatpush1.msra.mxu0 0.0
  %1449 = vmatprep.subr.mxu0 0.0
  %1450 = vmatpush1.msra.mxu0 0.0
  %1451 = vmatprep.subr.mxu0 0.0
  %1452 = vmatpush1.msra.mxu0 0.0
  %1453 = vmatprep.subr.mxu0 0.0
  %1454 = vmatpush1.msra.mxu0 0.0
  %1455 = vmatprep.subr.mxu0 0.0
  %1456 = vmatpush1.msra.mxu0 0.0
  %1457 = vmatprep.subr.mxu0 0.0
  %1458 = vmatpush1.msra.mxu0 0.0
  %1459 = vmatprep.subr.mxu0 0.0
  %1460 = vmatpush1.msra.mxu0 0.0
  %1461 = vmatprep.subr.mxu0 0.0
  %1462 = vmatpush1.msra.mxu0 0.0
  %1463 = vmatprep.subr.mxu0 0.0
  %1464 = vmatpush1.msra.mxu0 0.0
  %1465 = vmatprep.subr.mxu0 0.0
  %1466 = vmatpush1.msra.mxu0 0.0
  %1467 = vmatprep.subr.mxu0 0.0
  %1468 = vmatpush1.msra.mxu0 0.0
  %1469 = vmatprep.subr.mxu0 0.0
  %1470 = vmatpush1.msra.mxu0 0.0
  %1471 = vmatprep.subr.mxu0 0.0
  %1472 = vmatpush1.msra.mxu0 0.0
  %1473 = vmatprep.subr.mxu0 0.0
  %1474 = vmatpush1.msra.mxu0 0.0
  %1475 = vmatprep.subr.mxu0 0.0
  %1476 = vmatpush1.msra.mxu0 0.0
  %1477 = vmatprep.subr.mxu0 0.0
  %1478 = vmatpush1.msra.mxu0 0.0
  %1479 = vmatprep.subr.mxu0 0.0
  %1480 = vmatpush1.msra.mxu0 0.0
  %1481 = vmatprep.mubr.f32.mxu0 0.0
  %1482 = vmatmul.mubr.f32.gmra.mrb[0].mxu0 %v634
  %v1483 = vpop.f32.mrb[0].mxu0
  %v1484 = vadd.f32 0.0, %v1483
  %v1485 = vpop.f32.mrb[0].mxu0
  %v1486 = vadd.f32 0.0, %v1485
  %1487 = vdwg.mxu0
  %1488 = vmatprep.subr.mxu0 %v576
  %1489 = vmatpush1.msra.mxu0 %v575
  %1490 = vmatprep.subr.mxu0 %v603
  %1491 = vmatpush1.msra.mxu0 %v602
  %1492 = vmatprep.subr.mxu0 %v630
  %1493 = vmatpush1.msra.mxu0 %v629
  %1494 = vmatprep.subr.mxu0 0.0
  %1495 = vmatpush1.msra.mxu0 0.0
  %1496 = vmatprep.subr.mxu0 0.0
  %1497 = vmatpush1.msra.mxu0 0.0
  %1498 = vmatprep.subr.mxu0 0.0
  %1499 = vmatpush1.msra.mxu0 0.0
  %1500 = vmatprep.subr.mxu0 0.0
  %1501 = vmatpush1.msra.mxu0 0.0
  %1502 = vmatprep.subr.mxu0 0.0
  %1503 = vmatpush1.msra.mxu0 0.0
  %1504 = vmatprep.subr.mxu0 0.0
  %1505 = vmatpush1.msra.mxu0 0.0
  %1506 = vmatprep.subr.mxu0 0.0
  %1507 = vmatpush1.msra.mxu0 0.0
  %1508 = vmatprep.subr.mxu0 0.0
  %1509 = vmatpush1.msra.mxu0 0.0
  %1510 = vmatprep.subr.mxu0 0.0
  %1511 = vmatpush1.msra.mxu0 0.0
  %1512 = vmatprep.subr.mxu0 0.0
  %1513 = vmatpush1.msra.mxu0 0.0
  %1514 = vmatprep.subr.mxu0 0.0
  %1515 = vmatpush1.msra.mxu0 0.0
  %1516 = vmatprep.subr.mxu0 0.0
  %1517 = vmatpush1.msra.mxu0 0.0
  %1518 = vmatprep.subr.mxu0 0.0
  %1519 = vmatpush1.msra.mxu0 0.0
  %1520 = vmatprep.subr.mxu0 0.0
  %1521 = vmatpush1.msra.mxu0 0.0
  %1522 = vmatprep.subr.mxu0 0.0
  %1523 = vmatpush1.msra.mxu0 0.0
  %1524 = vmatprep.subr.mxu0 0.0
  %1525 = vmatpush1.msra.mxu0 0.0
  %1526 = vmatprep.subr.mxu0 0.0
  %1527 = vmatpush1.msra.mxu0 0.0
  %1528 = vmatprep.subr.mxu0 0.0
  %1529 = vmatpush1.msra.mxu0 0.0
  %1530 = vmatprep.subr.mxu0 0.0
  %1531 = vmatpush1.msra.mxu0 0.0
  %1532 = vmatprep.subr.mxu0 0.0
  %1533 = vmatpush1.msra.mxu0 0.0
  %1534 = vmatprep.subr.mxu0 0.0
  %1535 = vmatpush1.msra.mxu0 0.0
  %1536 = vmatprep.subr.mxu0 0.0
  %1537 = vmatpush1.msra.mxu0 0.0
  %1538 = vmatprep.subr.mxu0 0.0
  %1539 = vmatpush1.msra.mxu0 0.0
  %1540 = vmatprep.subr.mxu0 0.0
  %1541 = vmatpush1.msra.mxu0 0.0
  %1542 = vmatprep.subr.mxu0 0.0
  %1543 = vmatpush1.msra.mxu0 0.0
  %1544 = vmatprep.subr.mxu0 0.0
  %1545 = vmatpush1.msra.mxu0 0.0
  %1546 = vmatprep.subr.mxu0 0.0
  %1547 = vmatpush1.msra.mxu0 0.0
  %1548 = vmatprep.subr.mxu0 0.0
  %1549 = vmatpush1.msra.mxu0 0.0
  %1550 = vmatprep.subr.mxu0 0.0
  %1551 = vmatpush1.msra.mxu0 0.0
  %1552 = vmatprep.mubr.f32.mxu0 0.0
  %1553 = vmatmul.mubr.f32.gmra.mrb[0].mxu0 %v634
  %v1554 = vpop.f32.mrb[0].mxu0
  %v1555 = vadd.f32 0.0, %v1554
  %v1556 = vpop.f32.mrb[0].mxu0
  %v1557 = vadd.f32 0.0, %v1556
  %1558 = vdwg.mxu0
  %1559 = vmatprep.subr.mxu0 0.0
  %1560 = vmatpush1.msra.mxu0 %v577
  %1561 = vmatprep.subr.mxu0 0.0
  %1562 = vmatpush1.msra.mxu0 %v604
  %1563 = vmatprep.subr.mxu0 0.0
  %1564 = vmatpush1.msra.mxu0 %v631
  %1565 = vmatprep.subr.mxu0 0.0
  %1566 = vmatpush1.msra.mxu0 0.0
  %1567 = vmatprep.subr.mxu0 0.0
  %1568 = vmatpush1.msra.mxu0 0.0
  %1569 = vmatprep.subr.mxu0 0.0
  %1570 = vmatpush1.msra.mxu0 0.0
  %1571 = vmatprep.subr.mxu0 0.0
  %1572 = vmatpush1.msra.mxu0 0.0
  %1573 = vmatprep.subr.mxu0 0.0
  %1574 = vmatpush1.msra.mxu0 0.0
  %1575 = vmatprep.subr.mxu0 0.0
  %1576 = vmatpush1.msra.mxu0 0.0
  %1577 = vmatprep.subr.mxu0 0.0
  %1578 = vmatpush1.msra.mxu0 0.0
  %1579 = vmatprep.subr.mxu0 0.0
  %1580 = vmatpush1.msra.mxu0 0.0
  %1581 = vmatprep.subr.mxu0 0.0
  %1582 = vmatpush1.msra.mxu0 0.0
  %1583 = vmatprep.subr.mxu0 0.0
  %1584 = vmatpush1.msra.mxu0 0.0
  %1585 = vmatprep.subr.mxu0 0.0
  %1586 = vmatpush1.msra.mxu0 0.0
  %1587 = vmatprep.subr.mxu0 0.0
  %1588 = vmatpush1.msra.mxu0 0.0
  %1589 = vmatprep.subr.mxu0 0.0
  %1590 = vmatpush1.msra.mxu0 0.0
  %1591 = vmatprep.subr.mxu0 0.0
  %1592 = vmatpush1.msra.mxu0 0.0
  %1593 = vmatprep.subr.mxu0 0.0
  %1594 = vmatpush1.msra.mxu0 0.0
  %1595 = vmatprep.subr.mxu0 0.0
  %1596 = vmatpush1.msra.mxu0 0.0
  %1597 = vmatprep.subr.mxu0 0.0
  %1598 = vmatpush1.msra.mxu0 0.0
  %1599 = vmatprep.subr.mxu0 0.0
  %1600 = vmatpush1.msra.mxu0 0.0
  %1601 = vmatprep.subr.mxu0 0.0
  %1602 = vmatpush1.msra.mxu0 0.0
  %1603 = vmatprep.subr.mxu0 0.0
  %1604 = vmatpush1.msra.mxu0 0.0
  %1605 = vmatprep.subr.mxu0 0.0
  %1606 = vmatpush1.msra.mxu0 0.0
  %1607 = vmatprep.subr.mxu0 0.0
  %1608 = vmatpush1.msra.mxu0 0.0
  %1609 = vmatprep.subr.mxu0 0.0
  %1610 = vmatpush1.msra.mxu0 0.0
  %1611 = vmatprep.subr.mxu0 0.0
  %1612 = vmatpush1.msra.mxu0 0.0
  %1613 = vmatprep.subr.mxu0 0.0
  %1614 = vmatpush1.msra.mxu0 0.0
  %1615 = vmatprep.subr.mxu0 0.0
  %1616 = vmatpush1.msra.mxu0 0.0
  %1617 = vmatprep.subr.mxu0 0.0
  %1618 = vmatpush1.msra.mxu0 0.0
  %1619 = vmatprep.subr.mxu0 0.0
  %1620 = vmatpush1.msra.mxu0 0.0
  %1621 = vmatprep.subr.mxu0 0.0
  %1622 = vmatpush1.msra.mxu0 0.0
  %1623 = vmatprep.mubr.f32.mxu0 0.0
  %1624 = vmatmul.mubr.f32.gmra.mrb[0].mxu0 %v634
  %v1625 = vpop.f32.mrb[0].mxu0
  %v1626 = vadd.f32 0.0, %v1625
  %v1627 = vpop.f32.mrb[0].mxu0
  %1628 = vdwg.mxu0
  %v1629 = vmul.f32 %v703, %v989
  %v1630 = vmul.f32 %v705, %v1058
  %v1631 = vmul.f32 %v774, %v1060
  %v1632 = vmul.f32 %v776, %v1129
  %v1633 = vmul.f32 %v845, %v1131
  %v1634 = vmul.f32 %v847, %v1200
  %v1635 = vmul.f32 %v916, %v1202
  %v1636 = vmul.f32 %v918, %v1271
  %v1637 = vmul.f32 %v987, %v1273
  %v1638 = vld [vmem:[%s14] sm:$0xff]
  %v1639 = vld [vmem:[%s14 + $0x8] sm:$0xff]
  %v1640 = vld [vmem:[%s14 + $0x10] sm:$0xff]
  %v1641 = vld [vmem:[%s14 + $0x18] sm:$0xff]
  %v1642 = vld [vmem:[%s14 + $0x20] sm:$0xff]
  %v1643 = vld [vmem:[%s14 + $0x28] sm:$0xff]
  %v1644 = vld [vmem:[%s14 + $0x30] sm:$0xff]
  %v1645 = vld [vmem:[%s14 + $0x38] sm:$0xff]
  %v1646 = vld [vmem:[%s14 + $0x40] sm:$0xff]
  %v1647 = vld [vmem:[%s14 + $0x48] sm:$0xff]
  %v1648 = vld [vmem:[%s14 + $0x50] sm:$0xff]
  %v1649 = vld [vmem:[%s14 + $0x58] sm:$0xff]
  %v1650 = vld [vmem:[%s14 + $0x60] sm:$0xff]
  %v1651 = vld [vmem:[%s14 + $0x68] sm:$0xff]
  %v1652 = vld [vmem:[%s14 + $0x70] sm:$0xff]
  %v1653 = vld [vmem:[%s14 + $0x78] sm:$0xff]
  %v1654 = vld [vmem:[%s14 + $0x80] sm:$0xff]
  %v1655 = vld [vmem:[%s14 + $0x88] sm:$0xff]
  %v1656 = vld [vmem:[%s14 + $0x90] sm:$0xff]
  %v1657 = vld [vmem:[%s14 + $0x98] sm:$0xff]
  %v1658 = vld [vmem:[%s14 + $0xa0] sm:$0xff]
  %v1659 = vld [vmem:[%s14 + $0xa8] sm:$0xff]
  %v1660 = vld [vmem:[%s14 + $0xb0] sm:$0xff]
  %v1661 = vld [vmem:[%s14 + $0xb8] sm:$0xff]
  %v1662 = vld [vmem:[%s14 + $0xc0] sm:$0xff]
  %v1663 = vld [vmem:[%s14 + $0xc8] sm:$0xff]
  %v1664 = vld [vmem:[%s14 + $0xd0] sm:$0xff]
  %v1665 = vld [vmem:[%s14 + $0xd8] sm:$0xff]
  %v1666 = vld [vmem:[%s14 + $0xe0] sm:$0xff]
  %v1667 = vld [vmem:[%s14 + $0xe8] sm:$0xff]
  %v1668 = vld [vmem:[%s14 + $0xf0] sm:$0xff]
  %v1669 = vld [vmem:[%s14 + $0xf8] sm:$0xff]
  %v1670 = vld [vmem:[%s14 + $0x100] sm:$0xff]
  %v1671 = vld [vmem:[%s14 + $0x108] sm:$0xff]
  %v1672 = vld [vmem:[%s14 + $0x110] sm:$0xff]
  %v1673 = vld [vmem:[%s14 + $0x118] sm:$0xff]
  %v1674 = vld [vmem:[%s14 + $0x120] sm:$0xff]
  %v1675 = vld [vmem:[%s14 + $0x128] sm:$0xff]
  %v1676 = vld [vmem:[%s14 + $0x130] sm:$0xff]
  %v1677 = vld [vmem:[%s14 + $0x138] sm:$0xff]
  %v1678 = vld [vmem:[%s14 + $0x140] sm:$0xff]
  %v1679 = vld [vmem:[%s14 + $0x148] sm:$0xff]
  %v1680 = vld [vmem:[%s14 + $0x150] sm:$0xff]
  %v1681 = vld [vmem:[%s14 + $0x158] sm:$0xff]
  %v1682 = vld [vmem:[%s14 + $0x160] sm:$0xff]
  %v1683 = vld [vmem:[%s14 + $0x168] sm:$0xff]
  %v1684 = vld [vmem:[%s14 + $0x170] sm:$0xff]
  %v1685 = vld [vmem:[%s14 + $0x178] sm:$0xff]
  %v1686 = vld [vmem:[%s14 + $0x180] sm:$0xff]
  %v1687 = vld [vmem:[%s14 + $0x188] sm:$0xff]
  %v1688 = vld [vmem:[%s14 + $0x190] sm:$0xff]
  %v1689 = vld [vmem:[%s14 + $0x198] sm:$0xff]
  %v1690 = vld [vmem:[%s14 + $0x1a0] sm:$0xff]
  %v1691 = vld [vmem:[%s14 + $0x1a8] sm:$0xff]
  %v1692 = vld [vmem:[%s14 + $0x1b0] sm:$0xff]
  %v1693 = vld [vmem:[%s14 + $0x1b8] sm:$0xff]
  %v1694 = vld [vmem:[%s14 + $0x1c0] sm:$0xff]
  %v1695 = vld [vmem:[%s14 + $0x1c8] sm:$0xff]
  %v1696 = vld [vmem:[%s14 + $0x1d0] sm:$0xff]
  %v1697 = vld [vmem:[%s14 + $0x1d8] sm:$0xff]
  %v1698 = vld [vmem:[%s14 + $0x1e0] sm:$0xff]
  %v1699 = vld [vmem:[%s14 + $0x1e8] sm:$0xff]
  %v1700 = vld [vmem:[%s14 + $0x1f0] sm:$0xff]
  %v1701 = vld [vmem:[%s14 + $0x1f8] sm:$0xff]
  %v1702 = vld [vmem:[%s14 + $0x200] sm:$0xff]
  %v1703 = vld [vmem:[%s14 + $0x208] sm:$0xff]
  %v1704 = vld [vmem:[%s14 + $0x210] sm:$0xff]
  %v1705 = vld [vmem:[%s14 + $0x218] sm:$0xff]
  %v1706 = vld [vmem:[%s14 + $0x220] sm:$0xff]
  %v1707 = vld [vmem:[%s14 + $0x228] sm:$0xff]
  %v1708 = vld [vmem:[%s14 + $0x230] sm:$0xff]
  %v1709 = vld [vmem:[%s14 + $0x238] sm:$0xff]
  %v1710 = vld [vmem:[%s14 + $0x240] sm:$0xff]
  %v1711 = vld [vmem:[%s14 + $0x248] sm:$0xff]
  %v1712 = vld [vmem:[%s14 + $0x250] sm:$0xff]
  %v1713 = vld [vmem:[%s14 + $0x258] sm:$0xff]
  %v1714 = vld [vmem:[%s14 + $0x260] sm:$0xff]
  %v1715 = vld [vmem:[%s14 + $0x268] sm:$0xff]
  %v1716 = vld [vmem:[%s14 + $0x270] sm:$0xff]
  %v1717 = vld [vmem:[%s14 + $0x278] sm:$0xff]
  %v1718 = vld [vmem:[%s14 + $0x280] sm:$0xff]
  %v1719 = vld [vmem:[%s14 + $0x288] sm:$0xff]
  %v1720 = vld [vmem:[%s14 + $0x290] sm:$0xff]
  %v1721 = vld [vmem:[%s14 + $0x298] sm:$0xff]
  %v1722 = vld [vmem:[%s14 + $0x2a0] sm:$0xff]
  %v1723 = vld [vmem:[%s14 + $0x2a8] sm:$0xff]
  %v1724 = vld [vmem:[%s14 + $0x2b0] sm:$0xff]
  %v1725 = vld [vmem:[%s14 + $0x2b8] sm:$0xff]
  %v1726 = vld [vmem:[%s14 + $0x2c0] sm:$0xff]
  %v1727 = vld [vmem:[%s14 + $0x2c8] sm:$0xff]
  %v1728 = vld [vmem:[%s14 + $0x2d0] sm:$0xff]
  %v1729 = vld [vmem:[%s14 + $0x2d8] sm:$0xff]
  %v1730 = vld [vmem:[%s14 + $0x2e0] sm:$0xff]
  %v1731 = vld [vmem:[%s14 + $0x2e8] sm:$0xff]
  %v1732 = vld [vmem:[%s14 + $0x2f0] sm:$0xff]
  %v1733 = vld [vmem:[%s14 + $0x2f8] sm:$0xff]
  %v1734 = vld [vmem:[%s14 + $0x300] sm:$0xff]
  %v1735 = vld [vmem:[%s14 + $0x308] sm:$0xff]
  %v1736 = vld [vmem:[%s14 + $0x310] sm:$0xff]
  %v1737 = vld [vmem:[%s14 + $0x318] sm:$0xff]
  %v1738 = vld [vmem:[%s14 + $0x320] sm:$0xff]
  %v1739 = vld [vmem:[%s14 + $0x328] sm:$0xff]
  %v1740 = vld [vmem:[%s14 + $0x330] sm:$0xff]
  %v1741 = vld [vmem:[%s14 + $0x338] sm:$0xff]
  %v1742 = vld [vmem:[%s14 + $0x340] sm:$0xff]
  %v1743 = vld [vmem:[%s14 + $0x348] sm:$0xff]
  %v1744 = vld [vmem:[%s14 + $0x350] sm:$0xff]
  %v1745 = vld [vmem:[%s14 + $0x358] sm:$0xff]
  %v1746 = vld [vmem:[%s14 + $0x360] sm:$0xff]
  %v1747 = vld [vmem:[%s14 + $0x368] sm:$0xff]
  %v1748 = vld [vmem:[%s14 + $0x370] sm:$0xff]
  %v1749 = vld [vmem:[%s14 + $0x378] sm:$0xff]
  %v1750 = vld [vmem:[%s14 + $0x380] sm:$0xff]
  %v1751 = vld [vmem:[%s14 + $0x388] sm:$0xff]
  %v1752 = vld [vmem:[%s14 + $0x390] sm:$0xff]
  %v1753 = vld [vmem:[%s14 + $0x398] sm:$0xff]
  %v1754 = vld [vmem:[%s14 + $0x3a0] sm:$0xff]
  %v1755 = vld [vmem:[%s14 + $0x3a8] sm:$0xff]
  %v1756 = vld [vmem:[%s14 + $0x3b0] sm:$0xff]
  %v1757 = vld [vmem:[%s14 + $0x3b8] sm:$0xff]
  %v1758 = vld [vmem:[%s14 + $0x3c0] sm:$0xff]
  %v1759 = vld [vmem:[%s14 + $0x3c8] sm:$0xff]
  %v1760 = vld [vmem:[%s14 + $0x3d0] sm:$0xff]
  %v1761 = vld [vmem:[%s14 + $0x3d8] sm:$0xff]
  %v1762 = vld [vmem:[%s14 + $0x3e0] sm:$0xff]
  %v1763 = vld [vmem:[%s14 + $0x3e8] sm:$0xff]
  %v1764 = vld [vmem:[%s14 + $0x3f0] sm:$0xff]
  %v1765 = vld [vmem:[%s14 + $0x3f8] sm:$0xff]
  %v1766 = vld [vmem:[%s14 + $0x400] sm:$0xff]
  %v1767 = vld [vmem:[%s14 + $0x408] sm:$0xff]
  %v1768 = vld [vmem:[%s14 + $0x410] sm:$0xff]
  %v1769 = vld [vmem:[%s14 + $0x418] sm:$0xff]
  %v1770 = vld [vmem:[%s14 + $0x420] sm:$0xff]
  %v1771 = vld [vmem:[%s14 + $0x428] sm:$0xff]
  %v1772 = vld [vmem:[%s14 + $0x430] sm:$0xff]
  %v1773 = vld [vmem:[%s14 + $0x438] sm:$0xff]
  %v1774 = vld [vmem:[%s14 + $0x440] sm:$0xff]
  %v1775 = vld [vmem:[%s14 + $0x448] sm:$0xff]
  %v1776 = vld [vmem:[%s14 + $0x450] sm:$0xff]
  %v1777 = vld [vmem:[%s14 + $0x458] sm:$0xff]
  %v1778 = vld [vmem:[%s14 + $0x460] sm:$0xff]
  %v1779 = vld [vmem:[%s14 + $0x468] sm:$0xff]
  %v1780 = vld [vmem:[%s14 + $0x470] sm:$0xff]
  %v1781 = vld [vmem:[%s14 + $0x478] sm:$0xff]
  %1782 = vmatprep.subr.mxu0 0.0
  %1783 = vmatpush1.msra.mxu0 %v1638
  %1784 = vmatprep.subr.mxu0 0.0
  %1785 = vmatpush1.msra.mxu0 %v1639
  %1786 = vmatprep.subr.mxu0 0.0
  %1787 = vmatpush1.msra.mxu0 %v1640
  %1788 = vmatprep.subr.mxu0 0.0
  %1789 = vmatpush1.msra.mxu0 %v1641
  %1790 = vmatprep.subr.mxu0 0.0
  %1791 = vmatpush1.msra.mxu0 %v1642
  %1792 = vmatprep.subr.mxu0 0.0
  %1793 = vmatpush1.msra.mxu0 %v1643
  %1794 = vmatprep.subr.mxu0 0.0
  %1795 = vmatpush1.msra.mxu0 %v1644
  %1796 = vmatprep.subr.mxu0 0.0
  %1797 = vmatpush1.msra.mxu0 %v1645
  %1798 = vmatprep.subr.mxu0 0.0
  %1799 = vmatpush1.msra.mxu0 %v1646
  %1800 = vmatprep.subr.mxu0 0.0
  %1801 = vmatpush1.msra.mxu0 %v1647
  %1802 = vmatprep.subr.mxu0 0.0
  %1803 = vmatpush1.msra.mxu0 %v1648
  %1804 = vmatprep.subr.mxu0 0.0
  %1805 = vmatpush1.msra.mxu0 %v1649
  %1806 = vmatprep.subr.mxu0 0.0
  %1807 = vmatpush1.msra.mxu0 %v1650
  %1808 = vmatprep.subr.mxu0 0.0
  %1809 = vmatpush1.msra.mxu0 %v1651
  %1810 = vmatprep.subr.mxu0 0.0
  %1811 = vmatpush1.msra.mxu0 %v1652
  %1812 = vmatprep.subr.mxu0 0.0
  %1813 = vmatpush1.msra.mxu0 %v1653
  %1814 = vmatprep.subr.mxu0 0.0
  %1815 = vmatpush1.msra.mxu0 %v1654
  %1816 = vmatprep.subr.mxu0 0.0
  %1817 = vmatpush1.msra.mxu0 %v1655
  %1818 = vmatprep.subr.mxu0 0.0
  %1819 = vmatpush1.msra.mxu0 %v1656
  %1820 = vmatprep.subr.mxu0 0.0
  %1821 = vmatpush1.msra.mxu0 %v1657
  %1822 = vmatprep.subr.mxu0 0.0
  %1823 = vmatpush1.msra.mxu0 %v1658
  %1824 = vmatprep.subr.mxu0 0.0
  %1825 = vmatpush1.msra.mxu0 %v1659
  %1826 = vmatprep.subr.mxu0 0.0
  %1827 = vmatpush1.msra.mxu0 %v1660
  %1828 = vmatprep.subr.mxu0 0.0
  %1829 = vmatpush1.msra.mxu0 %v1661
  %1830 = vmatprep.subr.mxu0 0.0
  %1831 = vmatpush1.msra.mxu0 %v1662
  %1832 = vmatprep.subr.mxu0 0.0
  %1833 = vmatpush1.msra.mxu0 %v1663
  %1834 = vmatprep.subr.mxu0 0.0
  %1835 = vmatpush1.msra.mxu0 %v1664
  %1836 = vmatprep.subr.mxu0 0.0
  %1837 = vmatpush1.msra.mxu0 %v1665
  %1838 = vmatprep.subr.mxu0 0.0
  %1839 = vmatpush1.msra.mxu0 %v1666
  %1840 = vmatprep.subr.mxu0 0.0
  %1841 = vmatpush1.msra.mxu0 %v1667
  %1842 = vmatprep.subr.mxu0 0.0
  %1843 = vmatpush1.msra.mxu0 %v1668
  %1844 = vmatprep.subr.mxu0 0.0
  %1845 = vmatpush1.msra.mxu0 %v1669
  %1846 = vmatprep.mubr.f32.mxu0 %v1630
  %1847 = vmatmul.mubr.f32.gmra.mrb[0].mxu0 %v1629
  %v1848 = vpop.f32.mrb[0].mxu0
  %v1849 = vadd.f32 0.0, %v1848
  %v1850 = vpop.f32.mrb[0].mxu0
  %1851 = vdwg.mxu0
  %1852 = vmatprep.subr.mxu0 0.0
  %1853 = vmatpush1.msra.mxu0 %v1670
  %1854 = vmatprep.subr.mxu0 0.0
  %1855 = vmatpush1.msra.mxu0 %v1671
  %1856 = vmatprep.subr.mxu0 0.0
  %1857 = vmatpush1.msra.mxu0 %v1672
  %1858 = vmatprep.subr.mxu0 0.0
  %1859 = vmatpush1.msra.mxu0 %v1673
  %1860 = vmatprep.subr.mxu0 0.0
  %1861 = vmatpush1.msra.mxu0 %v1674
  %1862 = vmatprep.subr.mxu0 0.0
  %1863 = vmatpush1.msra.mxu0 %v1675
  %1864 = vmatprep.subr.mxu0 0.0
  %1865 = vmatpush1.msra.mxu0 %v1676
  %1866 = vmatprep.subr.mxu0 0.0
  %1867 = vmatpush1.msra.mxu0 %v1677
  %1868 = vmatprep.subr.mxu0 0.0
  %1869 = vmatpush1.msra.mxu0 %v1678
  %1870 = vmatprep.subr.mxu0 0.0
  %1871 = vmatpush1.msra.mxu0 %v1679
  %1872 = vmatprep.subr.mxu0 0.0
  %1873 = vmatpush1.msra.mxu0 %v1680
  %1874 = vmatprep.subr.mxu0 0.0
  %1875 = vmatpush1.msra.mxu0 %v1681
  %1876 = vmatprep.subr.mxu0 0.0
  %1877 = vmatpush1.msra.mxu0 %v1682
  %1878 = vmatprep.subr.mxu0 0.0
  %1879 = vmatpush1.msra.mxu0 %v1683
  %1880 = vmatprep.subr.mxu0 0.0
  %1881 = vmatpush1.msra.mxu0 %v1684
  %1882 = vmatprep.subr.mxu0 0.0
  %1883 = vmatpush1.msra.mxu0 %v1685
  %1884 = vmatprep.subr.mxu0 0.0
  %1885 = vmatpush1.msra.mxu0 %v1686
  %1886 = vmatprep.subr.mxu0 0.0
  %1887 = vmatpush1.msra.mxu0 %v1687
  %1888 = vmatprep.subr.mxu0 0.0
  %1889 = vmatpush1.msra.mxu0 %v1688
  %1890 = vmatprep.subr.mxu0 0.0
  %1891 = vmatpush1.msra.mxu0 %v1689
  %1892 = vmatprep.subr.mxu0 0.0
  %1893 = vmatpush1.msra.mxu0 %v1690
  %1894 = vmatprep.subr.mxu0 0.0
  %1895 = vmatpush1.msra.mxu0 %v1691
  %1896 = vmatprep.subr.mxu0 0.0
  %1897 = vmatpush1.msra.mxu0 %v1692
  %1898 = vmatprep.subr.mxu0 0.0
  %1899 = vmatpush1.msra.mxu0 %v1693
  %1900 = vmatprep.subr.mxu0 0.0
  %1901 = vmatpush1.msra.mxu0 %v1694
  %1902 = vmatprep.subr.mxu0 0.0
  %1903 = vmatpush1.msra.mxu0 %v1695
  %1904 = vmatprep.subr.mxu0 0.0
  %1905 = vmatpush1.msra.mxu0 %v1696
  %1906 = vmatprep.subr.mxu0 0.0
  %1907 = vmatpush1.msra.mxu0 %v1697
  %1908 = vmatprep.subr.mxu0 0.0
  %1909 = vmatpush1.msra.mxu0 %v1698
  %1910 = vmatprep.subr.mxu0 0.0
  %1911 = vmatpush1.msra.mxu0 %v1699
  %1912 = vmatprep.subr.mxu0 0.0
  %1913 = vmatpush1.msra.mxu0 %v1700
  %1914 = vmatprep.subr.mxu0 0.0
  %1915 = vmatpush1.msra.mxu0 %v1701
  %1916 = vmatprep.mubr.f32.mxu0 %v1632
  %1917 = vmatmul.mubr.f32.gmra.mrb[0].mxu0 %v1631
  %v1918 = vpop.f32.mrb[0].mxu0
  %v1919 = vadd.f32 %v1849, %v1918
  %v1920 = vpop.f32.mrb[0].mxu0
  %1921 = vdwg.mxu0
  %1922 = vmatprep.subr.mxu0 0.0
  %1923 = vmatpush1.msra.mxu0 %v1702
  %1924 = vmatprep.subr.mxu0 0.0
  %1925 = vmatpush1.msra.mxu0 %v1703
  %1926 = vmatprep.subr.mxu0 0.0
  %1927 = vmatpush1.msra.mxu0 %v1704
  %1928 = vmatprep.subr.mxu0 0.0
  %1929 = vmatpush1.msra.mxu0 %v1705
  %1930 = vmatprep.subr.mxu0 0.0
  %1931 = vmatpush1.msra.mxu0 %v1706
  %1932 = vmatprep.subr.mxu0 0.0
  %1933 = vmatpush1.msra.mxu0 %v1707
  %1934 = vmatprep.subr.mxu0 0.0
  %1935 = vmatpush1.msra.mxu0 %v1708
  %1936 = vmatprep.subr.mxu0 0.0
  %1937 = vmatpush1.msra.mxu0 %v1709
  %1938 = vmatprep.subr.mxu0 0.0
  %1939 = vmatpush1.msra.mxu0 %v1710
  %1940 = vmatprep.subr.mxu0 0.0
  %1941 = vmatpush1.msra.mxu0 %v1711
  %1942 = vmatprep.subr.mxu0 0.0
  %1943 = vmatpush1.msra.mxu0 %v1712
  %1944 = vmatprep.subr.mxu0 0.0
  %1945 = vmatpush1.msra.mxu0 %v1713
  %1946 = vmatprep.subr.mxu0 0.0
  %1947 = vmatpush1.msra.mxu0 %v1714
  %1948 = vmatprep.subr.mxu0 0.0
  %1949 = vmatpush1.msra.mxu0 %v1715
  %1950 = vmatprep.subr.mxu0 0.0
  %1951 = vmatpush1.msra.mxu0 %v1716
  %1952 = vmatprep.subr.mxu0 0.0
  %1953 = vmatpush1.msra.mxu0 %v1717
  %1954 = vmatprep.subr.mxu0 0.0
  %1955 = vmatpush1.msra.mxu0 %v1718
  %1956 = vmatprep.subr.mxu0 0.0
  %1957 = vmatpush1.msra.mxu0 %v1719
  %1958 = vmatprep.subr.mxu0 0.0
  %1959 = vmatpush1.msra.mxu0 %v1720
  %1960 = vmatprep.subr.mxu0 0.0
  %1961 = vmatpush1.msra.mxu0 %v1721
  %1962 = vmatprep.subr.mxu0 0.0
  %1963 = vmatpush1.msra.mxu0 %v1722
  %1964 = vmatprep.subr.mxu0 0.0
  %1965 = vmatpush1.msra.mxu0 %v1723
  %1966 = vmatprep.subr.mxu0 0.0
  %1967 = vmatpush1.msra.mxu0 %v1724
  %1968 = vmatprep.subr.mxu0 0.0
  %1969 = vmatpush1.msra.mxu0 %v1725
  %1970 = vmatprep.subr.mxu0 0.0
  %1971 = vmatpush1.msra.mxu0 %v1726
  %1972 = vmatprep.subr.mxu0 0.0
  %1973 = vmatpush1.msra.mxu0 %v1727
  %1974 = vmatprep.subr.mxu0 0.0
  %1975 = vmatpush1.msra.mxu0 %v1728
  %1976 = vmatprep.subr.mxu0 0.0
  %1977 = vmatpush1.msra.mxu0 %v1729
  %1978 = vmatprep.subr.mxu0 0.0
  %1979 = vmatpush1.msra.mxu0 %v1730
  %1980 = vmatprep.subr.mxu0 0.0
  %1981 = vmatpush1.msra.mxu0 %v1731
  %1982 = vmatprep.subr.mxu0 0.0
  %1983 = vmatpush1.msra.mxu0 %v1732
  %1984 = vmatprep.subr.mxu0 0.0
  %1985 = vmatpush1.msra.mxu0 %v1733
  %1986 = vmatprep.mubr.f32.mxu0 %v1634
  %1987 = vmatmul.mubr.f32.gmra.mrb[0].mxu0 %v1633
  %v1988 = vpop.f32.mrb[0].mxu0
  %v1989 = vadd.f32 %v1919, %v1988
  %v1990 = vpop.f32.mrb[0].mxu0
  %1991 = vdwg.mxu0
  %1992 = vmatprep.subr.mxu0 0.0
  %1993 = vmatpush1.msra.mxu0 %v1734
  %1994 = vmatprep.subr.mxu0 0.0
  %1995 = vmatpush1.msra.mxu0 %v1735
  %1996 = vmatprep.subr.mxu0 0.0
  %1997 = vmatpush1.msra.mxu0 %v1736
  %1998 = vmatprep.subr.mxu0 0.0
  %1999 = vmatpush1.msra.mxu0 %v1737
  %2000 = vmatprep.subr.mxu0 0.0
  %2001 = vmatpush1.msra.mxu0 %v1738
  %2002 = vmatprep.subr.mxu0 0.0
  %2003 = vmatpush1.msra.mxu0 %v1739
  %2004 = vmatprep.subr.mxu0 0.0
  %2005 = vmatpush1.msra.mxu0 %v1740
  %2006 = vmatprep.subr.mxu0 0.0
  %2007 = vmatpush1.msra.mxu0 %v1741
  %2008 = vmatprep.subr.mxu0 0.0
  %2009 = vmatpush1.msra.mxu0 %v1742
  %2010 = vmatprep.subr.mxu0 0.0
  %2011 = vmatpush1.msra.mxu0 %v1743
  %2012 = vmatprep.subr.mxu0 0.0
  %2013 = vmatpush1.msra.mxu0 %v1744
  %2014 = vmatprep.subr.mxu0 0.0
  %2015 = vmatpush1.msra.mxu0 %v1745
  %2016 = vmatprep.subr.mxu0 0.0
  %2017 = vmatpush1.msra.mxu0 %v1746
  %2018 = vmatprep.subr.mxu0 0.0
  %2019 = vmatpush1.msra.mxu0 %v1747
  %2020 = vmatprep.subr.mxu0 0.0
  %2021 = vmatpush1.msra.mxu0 %v1748
  %2022 = vmatprep.subr.mxu0 0.0
  %2023 = vmatpush1.msra.mxu0 %v1749
  %2024 = vmatprep.subr.mxu0 0.0
  %2025 = vmatpush1.msra.mxu0 %v1750
  %2026 = vmatprep.subr.mxu0 0.0
  %2027 = vmatpush1.msra.mxu0 %v1751
  %2028 = vmatprep.subr.mxu0 0.0
  %2029 = vmatpush1.msra.mxu0 %v1752
  %2030 = vmatprep.subr.mxu0 0.0
  %2031 = vmatpush1.msra.mxu0 %v1753
  %2032 = vmatprep.subr.mxu0 0.0
  %2033 = vmatpush1.msra.mxu0 %v1754
  %2034 = vmatprep.subr.mxu0 0.0
  %2035 = vmatpush1.msra.mxu0 %v1755
  %2036 = vmatprep.subr.mxu0 0.0
  %2037 = vmatpush1.msra.mxu0 %v1756
  %2038 = vmatprep.subr.mxu0 0.0
  %2039 = vmatpush1.msra.mxu0 %v1757
  %2040 = vmatprep.subr.mxu0 0.0
  %2041 = vmatpush1.msra.mxu0 %v1758
  %2042 = vmatprep.subr.mxu0 0.0
  %2043 = vmatpush1.msra.mxu0 %v1759
  %2044 = vmatprep.subr.mxu0 0.0
  %2045 = vmatpush1.msra.mxu0 %v1760
  %2046 = vmatprep.subr.mxu0 0.0
  %2047 = vmatpush1.msra.mxu0 %v1761
  %2048 = vmatprep.subr.mxu0 0.0
  %2049 = vmatpush1.msra.mxu0 %v1762
  %2050 = vmatprep.subr.mxu0 0.0
  %2051 = vmatpush1.msra.mxu0 %v1763
  %2052 = vmatprep.subr.mxu0 0.0
  %2053 = vmatpush1.msra.mxu0 %v1764
  %2054 = vmatprep.subr.mxu0 0.0
  %2055 = vmatpush1.msra.mxu0 %v1765
  %2056 = vmatprep.mubr.f32.mxu0 %v1636
  %2057 = vmatmul.mubr.f32.gmra.mrb[0].mxu0 %v1635
  %v2058 = vpop.f32.mrb[0].mxu0
  %v2059 = vadd.f32 %v1989, %v2058
  %v2060 = vpop.f32.mrb[0].mxu0
  %2061 = vdwg.mxu0
  %2062 = vmatprep.subr.mxu0 0.0
  %2063 = vmatpush1.msra.mxu0 %v1766
  %2064 = vmatprep.subr.mxu0 0.0
  %2065 = vmatpush1.msra.mxu0 %v1767
  %2066 = vmatprep.subr.mxu0 0.0
  %2067 = vmatpush1.msra.mxu0 %v1768
  %2068 = vmatprep.subr.mxu0 0.0
  %2069 = vmatpush1.msra.mxu0 %v1769
  %2070 = vmatprep.subr.mxu0 0.0
  %2071 = vmatpush1.msra.mxu0 %v1770
  %2072 = vmatprep.subr.mxu0 0.0
  %2073 = vmatpush1.msra.mxu0 %v1771
  %2074 = vmatprep.subr.mxu0 0.0
  %2075 = vmatpush1.msra.mxu0 %v1772
  %2076 = vmatprep.subr.mxu0 0.0
  %2077 = vmatpush1.msra.mxu0 %v1773
  %2078 = vmatprep.subr.mxu0 0.0
  %2079 = vmatpush1.msra.mxu0 %v1774
  %2080 = vmatprep.subr.mxu0 0.0
  %2081 = vmatpush1.msra.mxu0 %v1775
  %2082 = vmatprep.subr.mxu0 0.0
  %2083 = vmatpush1.msra.mxu0 %v1776
  %2084 = vmatprep.subr.mxu0 0.0
  %2085 = vmatpush1.msra.mxu0 %v1777
  %2086 = vmatprep.subr.mxu0 0.0
  %2087 = vmatpush1.msra.mxu0 %v1778
  %2088 = vmatprep.subr.mxu0 0.0
  %2089 = vmatpush1.msra.mxu0 %v1779
  %2090 = vmatprep.subr.mxu0 0.0
  %2091 = vmatpush1.msra.mxu0 %v1780
  %2092 = vmatprep.subr.mxu0 0.0
  %2093 = vmatpush1.msra.mxu0 %v1781
  %2094 = vmatprep.subr.mxu0 0.0
  %2095 = vmatpush1.msra.mxu0 0.0
  %2096 = vmatprep.subr.mxu0 0.0
  %2097 = vmatpush1.msra.mxu0 0.0
  %2098 = vmatprep.subr.mxu0 0.0
  %2099 = vmatpush1.msra.mxu0 0.0
  %2100 = vmatprep.subr.mxu0 0.0
  %2101 = vmatpush1.msra.mxu0 0.0
  %2102 = vmatprep.subr.mxu0 0.0
  %2103 = vmatpush1.msra.mxu0 0.0
  %2104 = vmatprep.subr.mxu0 0.0
  %2105 = vmatpush1.msra.mxu0 0.0
  %2106 = vmatprep.subr.mxu0 0.0
  %2107 = vmatpush1.msra.mxu0 0.0
  %2108 = vmatprep.subr.mxu0 0.0
  %2109 = vmatpush1.msra.mxu0 0.0
  %2110 = vmatprep.subr.mxu0 0.0
  %2111 = vmatpush1.msra.mxu0 0.0
  %2112 = vmatprep.subr.mxu0 0.0
  %2113 = vmatpush1.msra.mxu0 0.0
  %2114 = vmatprep.subr.mxu0 0.0
  %2115 = vmatpush1.msra.mxu0 0.0
  %2116 = vmatprep.subr.mxu0 0.0
  %2117 = vmatpush1.msra.mxu0 0.0
  %2118 = vmatprep.subr.mxu0 0.0
  %2119 = vmatpush1.msra.mxu0 0.0
  %2120 = vmatprep.subr.mxu0 0.0
  %2121 = vmatpush1.msra.mxu0 0.0
  %2122 = vmatprep.subr.mxu0 0.0
  %2123 = vmatpush1.msra.mxu0 0.0
  %2124 = vmatprep.subr.mxu0 0.0
  %2125 = vmatpush1.msra.mxu0 0.0
  %2126 = vmatprep.mubr.f32.mxu0 0.0
  %2127 = vmatmul.mubr.f32.gmra.mrb[0].mxu0 %v1637
  %v2128 = vpop.f32.mrb[0].mxu0
  %v2129 = vadd.f32 %v2059, %v2128
  %v2130 = vpop.f32.mrb[0].mxu0
  %2131 = vdwg.mxu0
  %2133 = vrot.lane.b32.xlu0 %v2129, 116
  %v2134 = vpop.permute.xlu0 %2133
  %v2136 = vmax.f32 %v2129, %v2134
  %2137 = vrot.lane.b32.xlu0 %v2129, 104
  %v2138 = vpop.permute.xlu0 %2137
  %v2140 = vmax.f32 %v2136, %v2138
  %2142 = vrot.lane.b32.xlu0 %v2140, 12
  %v2143 = vpop.permute.xlu0 %2142
  %2145 = vrot.lane.b32.xlu0 %v2140, 24
  %v2146 = vpop.permute.xlu0 %2145
  %vm2148 = vcmask 97280
  %v2149 = vsel %vm2148, %v2140, %v2143
  %v2150 = vsel %vm632, %v2149, %v2146
  %v2151 = vsub.f32 %v2129, %v2150
  %v2152 = vmul.f32 %v2151, 1.442695
  %v2153 = vpow.pop %v2152
  %2155 = vrot.lane.b32.xlu0 %v2153, 116
  %v2156 = vpop.permute.xlu0 %2155
  %v2158 = vadd.f32 %v2153, %v2156
  %2159 = vrot.lane.b32.xlu0 %v2153, 104
  %v2160 = vpop.permute.xlu0 %2159
  %v2162 = vadd.f32 %v2158, %v2160
  %v2163 = vrcp.pop %v2162
  %2165 = vrot.lane.b32.xlu0 %v2163, 12
  %v2166 = vpop.permute.xlu0 %2165
  %2168 = vrot.lane.b32.xlu0 %v2163, 24
  %v2169 = vpop.permute.xlu0 %2168
  %v2171 = vsel %vm2148, %v2163, %v2166
  %v2172 = vsel %vm632, %v2171, %v2169
  %v2173 = vmul.f32 %v2153, %v2172
  %v2174 = vld [vmem:[%s15] sm:$0xff]
  %v2175 = vld [vmem:[%s15 + $0x8] sm:$0xff]
  %v2176 = vld [vmem:[%s15 + $0x10] sm:$0xff]
  %v2177 = vld [vmem:[%s15 + $0x18] sm:$0xff]
  %v2178 = vld [vmem:[%s15 + $0x20] sm:$0xff]
  %v2179 = vld [vmem:[%s15 + $0x28] sm:$0xff]
  %v2180 = vld [vmem:[%s15 + $0x30] sm:$0xff]
  %v2181 = vld [vmem:[%s15 + $0x38] sm:$0xff]
  %v2182 = vld [vmem:[%s15 + $0x40] sm:$0xff]
  %v2183 = vld [vmem:[%s15 + $0x48] sm:$0xff]
  %v2184 = vld [vmem:[%s15 + $0x50] sm:$0xff]
  %v2185 = vld [vmem:[%s15 + $0x58] sm:$0xff]
  %v2186 = vld [vmem:[%s15 + $0x60] sm:$0xff]
  %v2187 = vld [vmem:[%s15 + $0x68] sm:$0xff]
  %v2188 = vld [vmem:[%s15 + $0x70] sm:$0xff]
  %v2189 = vld [vmem:[%s15 + $0x78] sm:$0xff]
  %v2190 = vld [vmem:[%s15 + $0x80] sm:$0xff]
  %v2191 = vld [vmem:[%s15 + $0x88] sm:$0xff]
  %v2192 = vld [vmem:[%s15 + $0x90] sm:$0xff]
  %v2193 = vld [vmem:[%s15 + $0x98] sm:$0xff]
  %v2194 = vld [vmem:[%s15 + $0xa0] sm:$0xff]
  %v2195 = vld [vmem:[%s15 + $0xa8] sm:$0xff]
  %v2196 = vld [vmem:[%s15 + $0xb0] sm:$0xff]
  %v2197 = vld [vmem:[%s15 + $0xb8] sm:$0xff]
  %v2198 = vld [vmem:[%s15 + $0xc0] sm:$0xff]
  %v2199 = vld [vmem:[%s15 + $0xc8] sm:$0xff]
  %v2200 = vld [vmem:[%s15 + $0xd0] sm:$0xff]
  %v2201 = vld [vmem:[%s15 + $0xd8] sm:$0xff]
  %v2202 = vld [vmem:[%s15 + $0xe0] sm:$0xff]
  %v2203 = vld [vmem:[%s15 + $0xe8] sm:$0xff]
  %v2204 = vld [vmem:[%s15 + $0xf0] sm:$0xff]
  %v2205 = vld [vmem:[%s15 + $0xf8] sm:$0xff]
  %v2206 = vld [vmem:[%s15 + $0x100] sm:$0xff]
  %v2207 = vld [vmem:[%s15 + $0x108] sm:$0xff]
  %v2208 = vld [vmem:[%s15 + $0x110] sm:$0xff]
  %v2209 = vld [vmem:[%s15 + $0x118] sm:$0xff]
  %v2210 = vld [vmem:[%s15 + $0x120] sm:$0xf]
  %v2211 = vld [vmem:[%s15 + $0x128] sm:$0xf]
  %v2212 = vld [vmem:[%s15 + $0x130] sm:$0xf]
  %v2213 = vld [vmem:[%s15 + $0x138] sm:$0xf]
  %v2214 = vld [vmem:[%s15 + $0x140] sm:$0xf]
  %v2215 = vld [vmem:[%s15 + $0x148] sm:$0xf]
  %v2216 = vld [vmem:[%s15 + $0x150] sm:$0xf]
  %v2217 = vld [vmem:[%s15 + $0x158] sm:$0xf]
  %v2218 = vld [vmem:[%s15 + $0x160] sm:$0xf]
  %vm2219 = vcmask 293888
  %v2221 = vsel %vm2219, %v2173, 0
  %vm2223 = vcmask 1043456
  %v2225 = vsel %vm2223, %v2210, 0
  %v2228 = vsel %vm2223, %v2211, 0
  %v2231 = vsel %vm2223, %v2212, 0
  %v2234 = vsel %vm2223, %v2213, 0
  %v2237 = vsel %vm2223, %v2214, 0
  %v2240 = vsel %vm2223, %v2215, 0
  %v2243 = vsel %vm2223, %v2216, 0
  %v2246 = vsel %vm2223, %v2217, 0
  %v2249 = vsel %vm2223, %v2218, 0
  %2251 = vmatprep.subr.mxu0 %v2175
  %2252 = vmatpush1.msra.mxu0 %v2174
  %2253 = vmatprep.subr.mxu0 %v2184
  %2254 = vmatpush1.msra.mxu0 %v2183
  %2255 = vmatprep.subr.mxu0 %v2193
  %2256 = vmatpush1.msra.mxu0 %v2192
  %2257 = vmatprep.subr.mxu0 %v2202
  %2258 = vmatpush1.msra.mxu0 %v2201
  %2259 = vmatprep.subr.mxu0 %v2228
  %2260 = vmatpush1.msra.mxu0 %v2225
  %2261 = vmatprep.subr.mxu0 0.0
  %2262 = vmatpush1.msra.mxu0 0.0
  %2263 = vmatprep.subr.mxu0 0.0
  %2264 = vmatpush1.msra.mxu0 0.0
  %2265 = vmatprep.subr.mxu0 0.0
  %2266 = vmatpush1.msra.mxu0 0.0
  %2267 = vmatprep.subr.mxu0 0.0
  %2268 = vmatpush1.msra.mxu0 0.0
  %2269 = vmatprep.subr.mxu0 0.0
  %2270 = vmatpush1.msra.mxu0 0.0
  %2271 = vmatprep.subr.mxu0 0.0
  %2272 = vmatpush1.msra.mxu0 0.0
  %2273 = vmatprep.subr.mxu0 0.0
  %2274 = vmatpush1.msra.mxu0 0.0
  %2275 = vmatprep.subr.mxu0 0.0
  %2276 = vmatpush1.msra.mxu0 0.0
  %2277 = vmatprep.subr.mxu0 0.0
  %2278 = vmatpush1.msra.mxu0 0.0
  %2279 = vmatprep.subr.mxu0 0.0
  %2280 = vmatpush1.msra.mxu0 0.0
  %2281 = vmatprep.subr.mxu0 0.0
  %2282 = vmatpush1.msra.mxu0 0.0
  %2283 = vmatprep.subr.mxu0 0.0
  %2284 = vmatpush1.msra.mxu0 0.0
  %2285 = vmatprep.subr.mxu0 0.0
  %2286 = vmatpush1.msra.mxu0 0.0
  %2287 = vmatprep.subr.mxu0 0.0
  %2288 = vmatpush1.msra.mxu0 0.0
  %2289 = vmatprep.subr.mxu0 0.0
  %2290 = vmatpush1.msra.mxu0 0.0
  %2291 = vmatprep.subr.mxu0 0.0
  %2292 = vmatpush1.msra.mxu0 0.0
  %2293 = vmatprep.subr.mxu0 0.0
  %2294 = vmatpush1.msra.mxu0 0.0
  %2295 = vmatprep.subr.mxu0 0.0
  %2296 = vmatpush1.msra.mxu0 0.0
  %2297 = vmatprep.subr.mxu0 0.0
  %2298 = vmatpush1.msra.mxu0 0.0
  %2299 = vmatprep.subr.mxu0 0.0
  %2300 = vmatpush1.msra.mxu0 0.0
  %2301 = vmatprep.subr.mxu0 0.0
  %2302 = vmatpush1.msra.mxu0 0.0
  %2303 = vmatprep.subr.mxu0 0.0
  %2304 = vmatpush1.msra.mxu0 0.0
  %2305 = vmatprep.subr.mxu0 0.0
  %2306 = vmatpush1.msra.mxu0 0.0
  %2307 = vmatprep.subr.mxu0 0.0
  %2308 = vmatpush1.msra.mxu0 0.0
  %2309 = vmatprep.subr.mxu0 0.0
  %2310 = vmatpush1.msra.mxu0 0.0
  %2311 = vmatprep.subr.mxu0 0.0
  %2312 = vmatpush1.msra.mxu0 0.0
  %2313 = vmatprep.subr.mxu0 0.0
  %2314 = vmatpush1.msra.mxu0 0.0
  %2315 = vmatprep.mubr.f32.mxu0 0.0
  %2316 = vmatmul.mubr.f32.gmra.mrb[0].mxu0 %v2221
  %v2317 = vpop.f32.mrb[0].mxu0
  %v2318 = vadd.f32 0.0, %v2317
  %v2319 = vpop.f32.mrb[0].mxu0
  %v2320 = vadd.f32 0.0, %v2319
  %2321 = vdwg.mxu0
  %2322 = vmatprep.subr.mxu0 %v2177
  %2323 = vmatpush1.msra.mxu0 %v2176
  %2324 = vmatprep.subr.mxu0 %v2186
  %2325 = vmatpush1.msra.mxu0 %v2185
  %2326 = vmatprep.subr.mxu0 %v2195
  %2327 = vmatpush1.msra.mxu0 %v2194
  %2328 = vmatprep.subr.mxu0 %v2204
  %2329 = vmatpush1.msra.mxu0 %v2203
  %2330 = vmatprep.subr.mxu0 %v2234
  %2331 = vmatpush1.msra.mxu0 %v2231
  %2332 = vmatprep.subr.mxu0 0.0
  %2333 = vmatpush1.msra.mxu0 0.0
  %2334 = vmatprep.subr.mxu0 0.0
  %2335 = vmatpush1.msra.mxu0 0.0
  %2336 = vmatprep.subr.mxu0 0.0
  %2337 = vmatpush1.msra.mxu0 0.0
  %2338 = vmatprep.subr.mxu0 0.0
  %2339 = vmatpush1.msra.mxu0 0.0
  %2340 = vmatprep.subr.mxu0 0.0
  %2341 = vmatpush1.msra.mxu0 0.0
  %2342 = vmatprep.subr.mxu0 0.0
  %2343 = vmatpush1.msra.mxu0 0.0
  %2344 = vmatprep.subr.mxu0 0.0
  %2345 = vmatpush1.msra.mxu0 0.0
  %2346 = vmatprep.subr.mxu0 0.0
  %2347 = vmatpush1.msra.mxu0 0.0
  %2348 = vmatprep.subr.mxu0 0.0
  %2349 = vmatpush1.msra.mxu0 0.0
  %2350 = vmatprep.subr.mxu0 0.0
  %2351 = vmatpush1.msra.mxu0 0.0
  %2352 = vmatprep.subr.mxu0 0.0
  %2353 = vmatpush1.msra.mxu0 0.0
  %2354 = vmatprep.subr.mxu0 0.0
  %2355 = vmatpush1.msra.mxu0 0.0
  %2356 = vmatprep.subr.mxu0 0.0
  %2357 = vmatpush1.msra.mxu0 0.0
  %2358 = vmatprep.subr.mxu0 0.0
  %2359 = vmatpush1.msra.mxu0 0.0
  %2360 = vmatprep.subr.mxu0 0.0
  %2361 = vmatpush1.msra.mxu0 0.0
  %2362 = vmatprep.subr.mxu0 0.0
  %2363 = vmatpush1.msra.mxu0 0.0
  %2364 = vmatprep.subr.mxu0 0.0
  %2365 = vmatpush1.msra.mxu0 0.0
  %2366 = vmatprep.subr.mxu0 0.0
  %2367 = vmatpush1.msra.mxu0 0.0
  %2368 = vmatprep.subr.mxu0 0.0
  %2369 = vmatpush1.msra.mxu0 0.0
  %2370 = vmatprep.subr.mxu0 0.0
  %2371 = vmatpush1.msra.mxu0 0.0
  %2372 = vmatprep.subr.mxu0 0.0
  %2373 = vmatpush1.msra.mxu0 0.0
  %2374 = vmatprep.subr.mxu0 0.0
  %2375 = vmatpush1.msra.mxu0 0.0
  %2376 = vmatprep.subr.mxu0 0.0
  %2377 = vmatpush1.msra.mxu0 0.0
  %2378 = vmatprep.subr.mxu0 0.0
  %2379 = vmatpush1.msra.mxu0 0.0
  %2380 = vmatprep.subr.mxu0 0.0
  %2381 = vmatpush1.msra.mxu0 0.0
  %2382 = vmatprep.subr.mxu0 0.0
  %2383 = vmatpush1.msra.mxu0 0.0
  %2384 = vmatprep.subr.mxu0 0.0
  %2385 = vmatpush1.msra.mxu0 0.0
  %2386 = vmatprep.mubr.f32.mxu0 0.0
  %2387 = vmatmul.mubr.f32.gmra.mrb[0].mxu0 %v2221
  %v2388 = vpop.f32.mrb[0].mxu0
  %v2389 = vadd.f32 0.0, %v2388
  %v2390 = vpop.f32.mrb[0].mxu0
  %v2391 = vadd.f32 0.0, %v2390
  %2392 = vdwg.mxu0
  %2393 = vmatprep.subr.mxu0 %v2179
  %2394 = vmatpush1.msra.mxu0 %v2178
  %2395 = vmatprep.subr.mxu0 %v2188
  %2396 = vmatpush1.msra.mxu0 %v2187
  %2397 = vmatprep.subr.mxu0 %v2197
  %2398 = vmatpush1.msra.mxu0 %v2196
  %2399 = vmatprep.subr.mxu0 %v2206
  %2400 = vmatpush1.msra.mxu0 %v2205
  %2401 = vmatprep.subr.mxu0 %v2240
  %2402 = vmatpush1.msra.mxu0 %v2237
  %2403 = vmatprep.subr.mxu0 0.0
  %2404 = vmatpush1.msra.mxu0 0.0
  %2405 = vmatprep.subr.mxu0 0.0
  %2406 = vmatpush1.msra.mxu0 0.0
  %2407 = vmatprep.subr.mxu0 0.0
  %2408 = vmatpush1.msra.mxu0 0.0
  %2409 = vmatprep.subr.mxu0 0.0
  %2410 = vmatpush1.msra.mxu0 0.0
  %2411 = vmatprep.subr.mxu0 0.0
  %2412 = vmatpush1.msra.mxu0 0.0
  %2413 = vmatprep.subr.mxu0 0.0
  %2414 = vmatpush1.msra.mxu0 0.0
  %2415 = vmatprep.subr.mxu0 0.0
  %2416 = vmatpush1.msra.mxu0 0.0
  %2417 = vmatprep.subr.mxu0 0.0
  %2418 = vmatpush1.msra.mxu0 0.0
  %2419 = vmatprep.subr.mxu0 0.0
  %2420 = vmatpush1.msra.mxu0 0.0
  %2421 = vmatprep.subr.mxu0 0.0
  %2422 = vmatpush1.msra.mxu0 0.0
  %2423 = vmatprep.subr.mxu0 0.0
  %2424 = vmatpush1.msra.mxu0 0.0
  %2425 = vmatprep.subr.mxu0 0.0
  %2426 = vmatpush1.msra.mxu0 0.0
  %2427 = vmatprep.subr.mxu0 0.0
  %2428 = vmatpush1.msra.mxu0 0.0
  %2429 = vmatprep.subr.mxu0 0.0
  %2430 = vmatpush1.msra.mxu0 0.0
  %2431 = vmatprep.subr.mxu0 0.0
  %2432 = vmatpush1.msra.mxu0 0.0
  %2433 = vmatprep.subr.mxu0 0.0
  %2434 = vmatpush1.msra.mxu0 0.0
  %2435 = vmatprep.subr.mxu0 0.0
  %2436 = vmatpush1.msra.mxu0 0.0
  %2437 = vmatprep.subr.mxu0 0.0
  %2438 = vmatpush1.msra.mxu0 0.0
  %2439 = vmatprep.subr.mxu0 0.0
  %2440 = vmatpush1.msra.mxu0 0.0
  %2441 = vmatprep.subr.mxu0 0.0
  %2442 = vmatpush1.msra.mxu0 0.0
  %2443 = vmatprep.subr.mxu0 0.0
  %2444 = vmatpush1.msra.mxu0 0.0
  %2445 = vmatprep.subr.mxu0 0.0
  %2446 = vmatpush1.msra.mxu0 0.0
  %2447 = vmatprep.subr.mxu0 0.0
  %2448 = vmatpush1.msra.mxu0 0.0
  %2449 = vmatprep.subr.mxu0 0.0
  %2450 = vmatpush1.msra.mxu0 0.0
  %2451 = vmatprep.subr.mxu0 0.0
  %2452 = vmatpush1.msra.mxu0 0.0
  %2453 = vmatprep.subr.mxu0 0.0
  %2454 = vmatpush1.msra.mxu0 0.0
  %2455 = vmatprep.subr.mxu0 0.0
  %2456 = vmatpush1.msra.mxu0 0.0
  %2457 = vmatprep.mubr.f32.mxu0 0.0
  %2458 = vmatmul.mubr.f32.gmra.mrb[0].mxu0 %v2221
  %v2459 = vpop.f32.mrb[0].mxu0
  %v2460 = vadd.f32 0.0, %v2459
  %v2461 = vpop.f32.mrb[0].mxu0
  %v2462 = vadd.f32 0.0, %v2461
  %2463 = vdwg.mxu0
  %2464 = vmatprep.subr.mxu0 %v2181
  %2465 = vmatpush1.msra.mxu0 %v2180
  %2466 = vmatprep.subr.mxu0 %v2190
  %2467 = vmatpush1.msra.mxu0 %v2189
  %2468 = vmatprep.subr.mxu0 %v2199
  %2469 = vmatpush1.msra.mxu0 %v2198
  %2470 = vmatprep.subr.mxu0 %v2208
  %2471 = vmatpush1.msra.mxu0 %v2207
  %2472 = vmatprep.subr.mxu0 %v2246
  %2473 = vmatpush1.msra.mxu0 %v2243
  %2474 = vmatprep.subr.mxu0 0.0
  %2475 = vmatpush1.msra.mxu0 0.0
  %2476 = vmatprep.subr.mxu0 0.0
  %2477 = vmatpush1.msra.mxu0 0.0
  %2478 = vmatprep.subr.mxu0 0.0
  %2479 = vmatpush1.msra.mxu0 0.0
  %2480 = vmatprep.subr.mxu0 0.0
  %2481 = vmatpush1.msra.mxu0 0.0
  %2482 = vmatprep.subr.mxu0 0.0
  %2483 = vmatpush1.msra.mxu0 0.0
  %2484 = vmatprep.subr.mxu0 0.0
  %2485 = vmatpush1.msra.mxu0 0.0
  %2486 = vmatprep.subr.mxu0 0.0
  %2487 = vmatpush1.msra.mxu0 0.0
  %2488 = vmatprep.subr.mxu0 0.0
  %2489 = vmatpush1.msra.mxu0 0.0
  %2490 = vmatprep.subr.mxu0 0.0
  %2491 = vmatpush1.msra.mxu0 0.0
  %2492 = vmatprep.subr.mxu0 0.0
  %2493 = vmatpush1.msra.mxu0 0.0
  %2494 = vmatprep.subr.mxu0 0.0
  %2495 = vmatpush1.msra.mxu0 0.0
  %2496 = vmatprep.subr.mxu0 0.0
  %2497 = vmatpush1.msra.mxu0 0.0
  %2498 = vmatprep.subr.mxu0 0.0
  %2499 = vmatpush1.msra.mxu0 0.0
  %2500 = vmatprep.subr.mxu0 0.0
  %2501 = vmatpush1.msra.mxu0 0.0
  %2502 = vmatprep.subr.mxu0 0.0
  %2503 = vmatpush1.msra.mxu0 0.0
  %2504 = vmatprep.subr.mxu0 0.0
  %2505 = vmatpush1.msra.mxu0 0.0
  %2506 = vmatprep.subr.mxu0 0.0
  %2507 = vmatpush1.msra.mxu0 0.0
  %2508 = vmatprep.subr.mxu0 0.0
  %2509 = vmatpush1.msra.mxu0 0.0
  %2510 = vmatprep.subr.mxu0 0.0
  %2511 = vmatpush1.msra.mxu0 0.0
  %2512 = vmatprep.subr.mxu0 0.0
  %2513 = vmatpush1.msra.mxu0 0.0
  %2514 = vmatprep.subr.mxu0 0.0
  %2515 = vmatpush1.msra.mxu0 0.0
  %2516 = vmatprep.subr.mxu0 0.0
  %2517 = vmatpush1.msra.mxu0 0.0
  %2518 = vmatprep.subr.mxu0 0.0
  %2519 = vmatpush1.msra.mxu0 0.0
  %2520 = vmatprep.subr.mxu0 0.0
  %2521 = vmatpush1.msra.mxu0 0.0
  %2522 = vmatprep.subr.mxu0 0.0
  %2523 = vmatpush1.msra.mxu0 0.0
  %2524 = vmatprep.subr.mxu0 0.0
  %2525 = vmatpush1.msra.mxu0 0.0
  %2526 = vmatprep.subr.mxu0 0.0
  %2527 = vmatpush1.msra.mxu0 0.0
  %2528 = vmatprep.mubr.f32.mxu0 0.0
  %2529 = vmatmul.mubr.f32.gmra.mrb[0].mxu0 %v2221
  %v2530 = vpop.f32.mrb[0].mxu0
  %v2531 = vadd.f32 0.0, %v2530
  %v2532 = vpop.f32.mrb[0].mxu0
  %v2533 = vadd.f32 0.0, %v2532
  %2534 = vdwg.mxu0
  %2535 = vmatprep.subr.mxu0 0.0
  %2536 = vmatpush1.msra.mxu0 %v2182
  %2537 = vmatprep.subr.mxu0 0.0
  %2538 = vmatpush1.msra.mxu0 %v2191
  %2539 = vmatprep.subr.mxu0 0.0
  %2540 = vmatpush1.msra.mxu0 %v2200
  %2541 = vmatprep.subr.mxu0 0.0
  %2542 = vmatpush1.msra.mxu0 %v2209
  %2543 = vmatprep.subr.mxu0 0.0
  %2544 = vmatpush1.msra.mxu0 %v2249
  %2545 = vmatprep.subr.mxu0 0.0
  %2546 = vmatpush1.msra.mxu0 0.0
  %2547 = vmatprep.subr.mxu0 0.0
  %2548 = vmatpush1.msra.mxu0 0.0
  %2549 = vmatprep.subr.mxu0 0.0
  %2550 = vmatpush1.msra.mxu0 0.0
  %2551 = vmatprep.subr.mxu0 0.0
  %2552 = vmatpush1.msra.mxu0 0.0
  %2553 = vmatprep.subr.mxu0 0.0
  %2554 = vmatpush1.msra.mxu0 0.0
  %2555 = vmatprep.subr.mxu0 0.0
  %2556 = vmatpush1.msra.mxu0 0.0
  %2557 = vmatprep.subr.mxu0 0.0
  %2558 = vmatpush1.msra.mxu0 0.0
  %2559 = vmatprep.subr.mxu0 0.0
  %2560 = vmatpush1.msra.mxu0 0.0
  %2561 = vmatprep.subr.mxu0 0.0
  %2562 = vmatpush1.msra.mxu0 0.0
  %2563 = vmatprep.subr.mxu0 0.0
  %2564 = vmatpush1.msra.mxu0 0.0
  %2565 = vmatprep.subr.mxu0 0.0
  %2566 = vmatpush1.msra.mxu0 0.0
  %2567 = vmatprep.subr.mxu0 0.0
  %2568 = vmatpush1.msra.mxu0 0.0
  %2569 = vmatprep.subr.mxu0 0.0
  %2570 = vmatpush1.msra.mxu0 0.0
  %2571 = vmatprep.subr.mxu0 0.0
  %2572 = vmatpush1.msra.mxu0 0.0
  %2573 = vmatprep.subr.mxu0 0.0
  %2574 = vmatpush1.msra.mxu0 0.0
  %2575 = vmatprep.subr.mxu0 0.0
  %2576 = vmatpush1.msra.mxu0 0.0
  %2577 = vmatprep.subr.mxu0 0.0
  %2578 = vmatpush1.msra.mxu0 0.0
  %2579 = vmatprep.subr.mxu0 0.0
  %2580 = vmatpush1.msra.mxu0 0.0
  %2581 = vmatprep.subr.mxu0 0.0
  %2582 = vmatpush1.msra.mxu0 0.0
  %2583 = vmatprep.subr.mxu0 0.0
  %2584 = vmatpush1.msra.mxu0 0.0
  %2585 = vmatprep.subr.mxu0 0.0
  %2586 = vmatpush1.msra.mxu0 0.0
  %2587 = vmatprep.subr.mxu0 0.0
  %2588 = vmatpush1.msra.mxu0 0.0
  %2589 = vmatprep.subr.mxu0 0.0
  %2590 = vmatpush1.msra.mxu0 0.0
  %2591 = vmatprep.subr.mxu0 0.0
  %2592 = vmatpush1.msra.mxu0 0.0
  %2593 = vmatprep.subr.mxu0 0.0
  %2594 = vmatpush1.msra.mxu0 0.0
  %2595 = vmatprep.subr.mxu0 0.0
  %2596 = vmatpush1.msra.mxu0 0.0
  %2597 = vmatprep.subr.mxu0 0.0
  %2598 = vmatpush1.msra.mxu0 0.0
  %2599 = vmatprep.mubr.f32.mxu0 0.0
  %2600 = vmatmul.mubr.f32.gmra.mrb[0].mxu0 %v2221
  %v2601 = vpop.f32.mrb[0].mxu0
  %v2602 = vadd.f32 0.0, %v2601
  %v2603 = vpop.f32.mrb[0].mxu0
  %2604 = vdwg.mxu0
  %v2605 = vmul.f32 %v2318, %v1342
  %v2606 = vmul.f32 %v2320, %v1344
  %v2607 = vmul.f32 %v2389, %v1413
  %v2608 = vmul.f32 %v2391, %v1415
  %v2609 = vmul.f32 %v2460, %v1484
  %v2610 = vmul.f32 %v2462, %v1486
  %v2611 = vmul.f32 %v2531, %v1555
  %v2612 = vmul.f32 %v2533, %v1557
  %v2613 = vmul.f32 %v2602, %v1626
  %v2614 = vadd.f32 %v2605, %v2608
  %v2615 = vadd.f32 %v2606, %v2609
  %v2616 = vadd.f32 %v2607, %v2610
  %v2617 = vadd.f32 %v2614, %v2611
  %v2618 = vadd.f32 %v2615, %v2612
  %v2619 = vadd.f32 %v2616, %v2613
  %v2620 = vld [vmem:[%s16] sm:$0xff]
  %v2621 = vld [vmem:[%s16 + $0x8] sm:$0xff]
  %v2622 = vld [vmem:[%s16 + $0x10] sm:$0xff]
  %v2623 = vld [vmem:[%s16 + $0x18] sm:$0xff]
  %v2624 = vld [vmem:[%s16 + $0x20] sm:$0xff]
  %v2625 = vld [vmem:[%s16 + $0x28] sm:$0xff]
  %v2626 = vld [vmem:[%s16 + $0x30] sm:$0xff]
  %v2627 = vld [vmem:[%s16 + $0x38] sm:$0xff]
  %v2628 = vld [vmem:[%s16 + $0x40] sm:$0xff]
  %v2629 = vld [vmem:[%s16 + $0x48] sm:$0xff]
  %v2630 = vld [vmem:[%s16 + $0x50] sm:$0xff]
  %v2631 = vld [vmem:[%s16 + $0x58] sm:$0xff]
  %v2632 = vld [vmem:[%s16 + $0x60] sm:$0xff]
  %v2633 = vld [vmem:[%s16 + $0x68] sm:$0xff]
  %v2634 = vld [vmem:[%s16 + $0x70] sm:$0xff]
  %v2635 = vld [vmem:[%s16 + $0x78] sm:$0xff]
  %v2636 = vld [vmem:[%s16 + $0x80] sm:$0xff]
  %v2637 = vld [vmem:[%s16 + $0x88] sm:$0xff]
  %v2638 = vld [vmem:[%s16 + $0x90] sm:$0xff]
  %v2639 = vld [vmem:[%s16 + $0x98] sm:$0xff]
  %v2640 = vld [vmem:[%s16 + $0xa0] sm:$0xff]
  %v2641 = vld [vmem:[%s16 + $0xa8] sm:$0xff]
  %v2642 = vld [vmem:[%s16 + $0xb0] sm:$0xff]
  %v2643 = vld [vmem:[%s16 + $0xb8] sm:$0xff]
  %v2644 = vld [vmem:[%s16 + $0xc0] sm:$0xff]
  %v2645 = vld [vmem:[%s16 + $0xc8] sm:$0xff]
  %v2646 = vld [vmem:[%s16 + $0xd0] sm:$0xff]
  %v2647 = vld [vmem:[%s16 + $0xd8] sm:$0xff]
  %v2648 = vld [vmem:[%s16 + $0xe0] sm:$0xff]
  %v2649 = vld [vmem:[%s16 + $0xe8] sm:$0xff]
  %v2650 = vld [vmem:[%s16 + $0xf0] sm:$0xff]
  %v2651 = vld [vmem:[%s16 + $0xf8] sm:$0xff]
  %v2652 = vld [vmem:[%s16 + $0x100] sm:$0xff]
  %v2653 = vld [vmem:[%s16 + $0x108] sm:$0xff]
  %v2654 = vld [vmem:[%s16 + $0x110] sm:$0xff]
  %v2655 = vld [vmem:[%s16 + $0x118] sm:$0xff]
  %v2656 = vld [vmem:[%s16 + $0x120] sm:$0xff]
  %v2657 = vld [vmem:[%s16 + $0x128] sm:$0xff]
  %v2658 = vld [vmem:[%s16 + $0x130] sm:$0xff]
  %v2659 = vld [vmem:[%s16 + $0x138] sm:$0xff]
  %v2660 = vld [vmem:[%s16 + $0x140] sm:$0xff]
  %v2661 = vld [vmem:[%s16 + $0x148] sm:$0xff]
  %v2662 = vld [vmem:[%s16 + $0x150] sm:$0xff]
  %v2663 = vld [vmem:[%s16 + $0x158] sm:$0xff]
  %v2664 = vld [vmem:[%s16 + $0x160] sm:$0xff]
  %v2665 = vld [vmem:[%s16 + $0x168] sm:$0xff]
  %v2666 = vld [vmem:[%s16 + $0x170] sm:$0xff]
  %v2667 = vld [vmem:[%s16 + $0x178] sm:$0xff]
  %2668 = vmatprep.subr.mxu0 0.0
  %2669 = vmatpush1.msra.mxu0 %v2620
  %2670 = vmatprep.subr.mxu0 0.0
  %2671 = vmatpush1.msra.mxu0 %v2621
  %2672 = vmatprep.subr.mxu0 0.0
  %2673 = vmatpush1.msra.mxu0 %v2622
  %2674 = vmatprep.subr.mxu0 0.0
  %2675 = vmatpush1.msra.mxu0 %v2623
  %2676 = vmatprep.subr.mxu0 0.0
  %2677 = vmatpush1.msra.mxu0 %v2624
  %2678 = vmatprep.subr.mxu0 0.0
  %2679 = vmatpush1.msra.mxu0 %v2625
  %2680 = vmatprep.subr.mxu0 0.0
  %2681 = vmatpush1.msra.mxu0 %v2626
  %2682 = vmatprep.subr.mxu0 0.0
  %2683 = vmatpush1.msra.mxu0 %v2627
  %2684 = vmatprep.subr.mxu0 0.0
  %2685 = vmatpush1.msra.mxu0 %v2628
  %2686 = vmatprep.subr.mxu0 0.0
  %2687 = vmatpush1.msra.mxu0 %v2629
  %2688 = vmatprep.subr.mxu0 0.0
  %2689 = vmatpush1.msra.mxu0 %v2630
  %2690 = vmatprep.subr.mxu0 0.0
  %2691 = vmatpush1.msra.mxu0 %v2631
  %2692 = vmatprep.subr.mxu0 0.0
  %2693 = vmatpush1.msra.mxu0 %v2632
  %2694 = vmatprep.subr.mxu0 0.0
  %2695 = vmatpush1.msra.mxu0 %v2633
  %2696 = vmatprep.subr.mxu0 0.0
  %2697 = vmatpush1.msra.mxu0 %v2634
  %2698 = vmatprep.subr.mxu0 0.0
  %2699 = vmatpush1.msra.mxu0 %v2635
  %2700 = vmatprep.subr.mxu0 0.0
  %2701 = vmatpush1.msra.mxu0 %v2636
  %2702 = vmatprep.subr.mxu0 0.0
  %2703 = vmatpush1.msra.mxu0 %v2637
  %2704 = vmatprep.subr.mxu0 0.0
  %2705 = vmatpush1.msra.mxu0 %v2638
  %2706 = vmatprep.subr.mxu0 0.0
  %2707 = vmatpush1.msra.mxu0 %v2639
  %2708 = vmatprep.subr.mxu0 0.0
  %2709 = vmatpush1.msra.mxu0 %v2640
  %2710 = vmatprep.subr.mxu0 0.0
  %2711 = vmatpush1.msra.mxu0 %v2641
  %2712 = vmatprep.subr.mxu0 0.0
  %2713 = vmatpush1.msra.mxu0 %v2642
  %2714 = vmatprep.subr.mxu0 0.0
  %2715 = vmatpush1.msra.mxu0 %v2643
  %2716 = vmatprep.subr.mxu0 0.0
  %2717 = vmatpush1.msra.mxu0 %v2644
  %2718 = vmatprep.subr.mxu0 0.0
  %2719 = vmatpush1.msra.mxu0 %v2645
  %2720 = vmatprep.subr.mxu0 0.0
  %2721 = vmatpush1.msra.mxu0 %v2646
  %2722 = vmatprep.subr.mxu0 0.0
  %2723 = vmatpush1.msra.mxu0 %v2647
  %2724 = vmatprep.subr.mxu0 0.0
  %2725 = vmatpush1.msra.mxu0 %v2648
  %2726 = vmatprep.subr.mxu0 0.0
  %2727 = vmatpush1.msra.mxu0 %v2649
  %2728 = vmatprep.subr.mxu0 0.0
  %2729 = vmatpush1.msra.mxu0 %v2650
  %2730 = vmatprep.subr.mxu0 0.0
  %2731 = vmatpush1.msra.mxu0 %v2651
  %2732 = vmatprep.mubr.f32.mxu0 %v2618
  %2733 = vmatmul.mubr.f32.gmra.mrb[0].mxu0 %v2617
  %v2734 = vpop.f32.mrb[0].mxu0
  %v2735 = vadd.f32 %v550, %v2734
  %v2736 = vpop.f32.mrb[0].mxu0
  %2737 = vdwg.mxu0
  %2738 = vmatprep.subr.mxu0 0.0
  %2739 = vmatpush1.msra.mxu0 %v2652
  %2740 = vmatprep.subr.mxu0 0.0
  %2741 = vmatpush1.msra.mxu0 %v2653
  %2742 = vmatprep.subr.mxu0 0.0
  %2743 = vmatpush1.msra.mxu0 %v2654
  %2744 = vmatprep.subr.mxu0 0.0
  %2745 = vmatpush1.msra.mxu0 %v2655
  %2746 = vmatprep.subr.mxu0 0.0
  %2747 = vmatpush1.msra.mxu0 %v2656
  %2748 = vmatprep.subr.mxu0 0.0
  %2749 = vmatpush1.msra.mxu0 %v2657
  %2750 = vmatprep.subr.mxu0 0.0
  %2751 = vmatpush1.msra.mxu0 %v2658
  %2752 = vmatprep.subr.mxu0 0.0
  %2753 = vmatpush1.msra.mxu0 %v2659
  %2754 = vmatprep.subr.mxu0 0.0
  %2755 = vmatpush1.msra.mxu0 %v2660
  %2756 = vmatprep.subr.mxu0 0.0
  %2757 = vmatpush1.msra.mxu0 %v2661
  %2758 = vmatprep.subr.mxu0 0.0
  %2759 = vmatpush1.msra.mxu0 %v2662
  %2760 = vmatprep.subr.mxu0 0.0
  %2761 = vmatpush1.msra.mxu0 %v2663
  %2762 = vmatprep.subr.mxu0 0.0
  %2763 = vmatpush1.msra.mxu0 %v2664
  %2764 = vmatprep.subr.mxu0 0.0
  %2765 = vmatpush1.msra.mxu0 %v2665
  %2766 = vmatprep.subr.mxu0 0.0
  %2767 = vmatpush1.msra.mxu0 %v2666
  %2768 = vmatprep.subr.mxu0 0.0
  %2769 = vmatpush1.msra.mxu0 %v2667
  %2770 = vmatprep.subr.mxu0 0.0
  %2771 = vmatpush1.msra.mxu0 0.0
  %2772 = vmatprep.subr.mxu0 0.0
  %2773 = vmatpush1.msra.mxu0 0.0
  %2774 = vmatprep.subr.mxu0 0.0
  %2775 = vmatpush1.msra.mxu0 0.0
  %2776 = vmatprep.subr.mxu0 0.0
  %2777 = vmatpush1.msra.mxu0 0.0
  %2778 = vmatprep.subr.mxu0 0.0
  %2779 = vmatpush1.msra.mxu0 0.0
  %2780 = vmatprep.subr.mxu0 0.0
  %2781 = vmatpush1.msra.mxu0 0.0
  %2782 = vmatprep.subr.mxu0 0.0
  %2783 = vmatpush1.msra.mxu0 0.0
  %2784 = vmatprep.subr.mxu0 0.0
  %2785 = vmatpush1.msra.mxu0 0.0
  %2786 = vmatprep.subr.mxu0 0.0
  %2787 = vmatpush1.msra.mxu0 0.0
  %2788 = vmatprep.subr.mxu0 0.0
  %2789 = vmatpush1.msra.mxu0 0.0
  %2790 = vmatprep.subr.mxu0 0.0
  %2791 = vmatpush1.msra.mxu0 0.0
  %2792 = vmatprep.subr.mxu0 0.0
  %2793 = vmatpush1.msra.mxu0 0.0
  %2794 = vmatprep.subr.mxu0 0.0
  %2795 = vmatpush1.msra.mxu0 0.0
  %2796 = vmatprep.subr.mxu0 0.0
  %2797 = vmatpush1.msra.mxu0 0.0
  %2798 = vmatprep.subr.mxu0 0.0
  %2799 = vmatpush1.msra.mxu0 0.0
  %2800 = vmatprep.subr.mxu0 0.0
  %2801 = vmatpush1.msra.mxu0 0.0
  %2802 = vmatprep.mubr.f32.mxu0 0.0
  %2803 = vmatmul.mubr.f32.gmra.mrb[0].mxu0 %v2619
  %v2804 = vpop.f32.mrb[0].mxu0
  %v2805 = vadd.f32 %v2735, %v2804
  %v2806 = vpop.f32.mrb[0].mxu0
  %2807 = vdwg.mxu0
  %v2808 = vld [vmem:[%s17] sm:$0xff]
  %v2809 = vld [vmem:[%s17 + $0x8] sm:$0xff]
  %v2810 = vld [vmem:[%s17 + $0x10] sm:$0xff]
  %v2812 = vsel %vm632, %v2805, 0
  %2814 = vmatprep.subr.mxu0 0.0
  %2815 = vmatpush1.msra.mxu0 %v2808
  %2816 = vmatprep.subr.mxu0 0.0
  %2817 = vmatpush1.msra.mxu0 %v2809
  %2818 = vmatprep.subr.mxu0 0.0
  %2819 = vmatpush1.msra.mxu0 %v2810
  %2820 = vmatprep.subr.mxu0 0.0
  %2821 = vmatpush1.msra.mxu0 0.0
  %2822 = vmatprep.subr.mxu0 0.0
  %2823 = vmatpush1.msra.mxu0 0.0
  %2824 = vmatprep.subr.mxu0 0.0
  %2825 = vmatpush1.msra.mxu0 0.0
  %2826 = vmatprep.subr.mxu0 0.0
  %2827 = vmatpush1.msra.mxu0 0.0
  %2828 = vmatprep.subr.mxu0 0.0
  %2829 = vmatpush1.msra.mxu0 0.0
  %2830 = vmatprep.subr.mxu0 0.0
  %2831 = vmatpush1.msra.mxu0 0.0
  %2832 = vmatprep.subr.mxu0 0.0
  %2833 = vmatpush1.msra.mxu0 0.0
  %2834 = vmatprep.subr.mxu0 0.0
  %2835 = vmatpush1.msra.mxu0 0.0
  %2836 = vmatprep.subr.mxu0 0.0
  %2837 = vmatpush1.msra.mxu0 0.0
  %2838 = vmatprep.subr.mxu0 0.0
  %2839 = vmatpush1.msra.mxu0 0.0
  %2840 = vmatprep.subr.mxu0 0.0
  %2841 = vmatpush1.msra.mxu0 0.0
  %2842 = vmatprep.subr.mxu0 0.0
  %2843 = vmatpush1.msra.mxu0 0.0
  %2844 = vmatprep.subr.mxu0 0.0
  %2845 = vmatpush1.msra.mxu0 0.0
  %2846 = vmatprep.subr.mxu0 0.0
  %2847 = vmatpush1.msra.mxu0 0.0
  %2848 = vmatprep.subr.mxu0 0.0
  %2849 = vmatpush1.msra.mxu0 0.0
  %2850 = vmatprep.subr.mxu0 0.0
  %2851 = vmatpush1.msra.mxu0 0.0
  %2852 = vmatprep.subr.mxu0 0.0
  %2853 = vmatpush1.msra.mxu0 0.0
  %2854 = vmatprep.subr.mxu0 0.0
  %2855 = vmatpush1.msra.mxu0 0.0
  %2856 = vmatprep.subr.mxu0 0.0
  %2857 = vmatpush1.msra.mxu0 0.0
  %2858 = vmatprep.subr.mxu0 0.0
  %2859 = vmatpush1.msra.mxu0 0.0
  %2860 = vmatprep.subr.mxu0 0.0
  %2861 = vmatpush1.msra.mxu0 0.0
  %2862 = vmatprep.subr.mxu0 0.0
  %2863 = vmatpush1.msra.mxu0 0.0
  %2864 = vmatprep.subr.mxu0 0.0
  %2865 = vmatpush1.msra.mxu0 0.0
  %2866 = vmatprep.subr.mxu0 0.0
  %2867 = vmatpush1.msra.mxu0 0.0
  %2868 = vmatprep.subr.mxu0 0.0
  %2869 = vmatpush1.msra.mxu0 0.0
  %2870 = vmatprep.subr.mxu0 0.0
  %2871 = vmatpush1.msra.mxu0 0.0
  %2872 = vmatprep.subr.mxu0 0.0
  %2873 = vmatpush1.msra.mxu0 0.0
  %2874 = vmatprep.subr.mxu0 0.0
  %2875 = vmatpush1.msra.mxu0 0.0
  %2876 = vmatprep.subr.mxu0 0.0
  %2877 = vmatpush1.msra.mxu0 0.0
  %2878 = vmatprep.mubr.f32.mxu0 0.0
  %2879 = vmatmul.mubr.f32.gmra.mrb[0].mxu0 %v2812
  %v2880 = vpop.f32.mrb[0].mxu0
  %v2881 = vadd.f32 0.0, %v2880
  %v2882 = vpop.f32.mrb[0].mxu0
  %2883 = vdwg.mxu0
  %v2884 = vsub.f32 %v2805, %v2881
  %v2885 = vmul.f32 %v2884, %v2884
  %v2887 = vsel %vm632, %v2885, 0
  %2889 = vmatprep.subr.mxu0 0.0
  %2890 = vmatpush1.msra.mxu0 %v2808
  %2891 = vmatprep.subr.mxu0 0.0
  %2892 = vmatpush1.msra.mxu0 %v2809
  %2893 = vmatprep.subr.mxu0 0.0
  %2894 = vmatpush1.msra.mxu0 %v2810
  %2895 = vmatprep.subr.mxu0 0.0
  %2896 = vmatpush1.msra.mxu0 0.0
  %2897 = vmatprep.subr.mxu0 0.0
  %2898 = vmatpush1.msra.mxu0 0.0
  %2899 = vmatprep.subr.mxu0 0.0
  %2900 = vmatpush1.msra.mxu0 0.0
  %2901 = vmatprep.subr.mxu0 0.0
  %2902 = vmatpush1.msra.mxu0 0.0
  %2903 = vmatprep.subr.mxu0 0.0
  %2904 = vmatpush1.msra.mxu0 0.0
  %2905 = vmatprep.subr.mxu0 0.0
  %2906 = vmatpush1.msra.mxu0 0.0
  %2907 = vmatprep.subr.mxu0 0.0
  %2908 = vmatpush1.msra.mxu0 0.0
  %2909 = vmatprep.subr.mxu0 0.0
  %2910 = vmatpush1.msra.mxu0 0.0
  %2911 = vmatprep.subr.mxu0 0.0
  %2912 = vmatpush1.msra.mxu0 0.0
  %2913 = vmatprep.subr.mxu0 0.0
  %2914 = vmatpush1.msra.mxu0 0.0
  %2915 = vmatprep.subr.mxu0 0.0
  %2916 = vmatpush1.msra.mxu0 0.0
  %2917 = vmatprep.subr.mxu0 0.0
  %2918 = vmatpush1.msra.mxu0 0.0
  %2919 = vmatprep.subr.mxu0 0.0
  %2920 = vmatpush1.msra.mxu0 0.0
  %2921 = vmatprep.subr.mxu0 0.0
  %2922 = vmatpush1.msra.mxu0 0.0
  %2923 = vmatprep.subr.mxu0 0.0
  %2924 = vmatpush1.msra.mxu0 0.0
  %2925 = vmatprep.subr.mxu0 0.0
  %2926 = vmatpush1.msra.mxu0 0.0
  %2927 = vmatprep.subr.mxu0 0.0
  %2928 = vmatpush1.msra.mxu0 0.0
  %2929 = vmatprep.subr.mxu0 0.0
  %2930 = vmatpush1.msra.mxu0 0.0
  %2931 = vmatprep.subr.mxu0 0.0
  %2932 = vmatpush1.msra.mxu0 0.0
  %2933 = vmatprep.subr.mxu0 0.0
  %2934 = vmatpush1.msra.mxu0 0.0
  %2935 = vmatprep.subr.mxu0 0.0
  %2936 = vmatpush1.msra.mxu0 0.0
  %2937 = vmatprep.subr.mxu0 0.0
  %2938 = vmatpush1.msra.mxu0 0.0
  %2939 = vmatprep.subr.mxu0 0.0
  %2940 = vmatpush1.msra.mxu0 0.0
  %2941 = vmatprep.subr.mxu0 0.0
  %2942 = vmatpush1.msra.mxu0 0.0
  %2943 = vmatprep.subr.mxu0 0.0
  %2944 = vmatpush1.msra.mxu0 0.0
  %2945 = vmatprep.subr.mxu0 0.0
  %2946 = vmatpush1.msra.mxu0 0.0
  %2947 = vmatprep.subr.mxu0 0.0
  %2948 = vmatpush1.msra.mxu0 0.0
  %2949 = vmatprep.subr.mxu0 0.0
  %2950 = vmatpush1.msra.mxu0 0.0
  %2951 = vmatprep.subr.mxu0 0.0
  %2952 = vmatpush1.msra.mxu0 0.0
  %2953 = vmatprep.mubr.f32.mxu0 0.0
  %2954 = vmatmul.mubr.f32.gmra.mrb[0].mxu0 %v2887
  %v2955 = vpop.f32.mrb[0].mxu0
  %v2956 = vadd.f32 1e-06, %v2955
  %v2957 = vpop.f32.mrb[0].mxu0
  %2958 = vdwg.mxu0
  %v2959 = vrsqrt.pop %v2956
  %v2960 = vmul.f32 %v2884, %v2959
  %v2961 = vld [vmem:[%s18] sm:$0x1]
  %v2963 = vlaneseq
  %v2964 = vshrl.u32 %v2963, 7
  %v2965 = vsub.s32 0, %v2964
  %v2966 = vrot.slane %v2961, %v2965
  %v2968 = vmul.f32 %v2960, %v2966
  %v2969 = vld [vmem:[%s19] sm:$0x1]
  %v2971 = vlaneseq
  %v2972 = vshrl.u32 %v2971, 7
  %v2973 = vsub.s32 0, %v2972
  %v2974 = vrot.slane %v2969, %v2973
  %v2976 = vadd.f32 %v2968, %v2974
  %v2977 = vld [vmem:[%s20] sm:$0xff]
  %v2978 = vld [vmem:[%s20 + $0x8] sm:$0xff]
  %v2979 = vld [vmem:[%s20 + $0x10] sm:$0xff]
  %v2981 = vsel %vm632, %v2976, 0
  %2983 = vmatprep.subr.mxu0 0.0
  %2984 = vmatpush1.msra.mxu0 %v2977
  %2985 = vmatprep.subr.mxu0 0.0
  %2986 = vmatpush1.msra.mxu0 %v2978
  %2987 = vmatprep.subr.mxu0 0.0
  %2988 = vmatpush1.msra.mxu0 %v2979
  %2989 = vmatprep.subr.mxu0 0.0
  %2990 = vmatpush1.msra.mxu0 0.0
  %2991 = vmatprep.subr.mxu0 0.0
  %2992 = vmatpush1.msra.mxu0 0.0
  %2993 = vmatprep.subr.mxu0 0.0
  %2994 = vmatpush1.msra.mxu0 0.0
  %2995 = vmatprep.subr.mxu0 0.0
  %2996 = vmatpush1.msra.mxu0 0.0
  %2997 = vmatprep.subr.mxu0 0.0
  %2998 = vmatpush1.msra.mxu0 0.0
  %2999 = vmatprep.subr.mxu0 0.0
  %3000 = vmatpush1.msra.mxu0 0.0
  %3001 = vmatprep.subr.mxu0 0.0
  %3002 = vmatpush1.msra.mxu0 0.0
  %3003 = vmatprep.subr.mxu0 0.0
  %3004 = vmatpush1.msra.mxu0 0.0
  %3005 = vmatprep.subr.mxu0 0.0
  %3006 = vmatpush1.msra.mxu0 0.0
  %3007 = vmatprep.subr.mxu0 0.0
  %3008 = vmatpush1.msra.mxu0 0.0
  %3009 = vmatprep.subr.mxu0 0.0
  %3010 = vmatpush1.msra.mxu0 0.0
  %3011 = vmatprep.subr.mxu0 0.0
  %3012 = vmatpush1.msra.mxu0 0.0
  %3013 = vmatprep.subr.mxu0 0.0
  %3014 = vmatpush1.msra.mxu0 0.0
  %3015 = vmatprep.subr.mxu0 0.0
  %3016 = vmatpush1.msra.mxu0 0.0
  %3017 = vmatprep.subr.mxu0 0.0
  %3018 = vmatpush1.msra.mxu0 0.0
  %3019 = vmatprep.subr.mxu0 0.0
  %3020 = vmatpush1.msra.mxu0 0.0
  %3021 = vmatprep.subr.mxu0 0.0
  %3022 = vmatpush1.msra.mxu0 0.0
  %3023 = vmatprep.subr.mxu0 0.0
  %3024 = vmatpush1.msra.mxu0 0.0
  %3025 = vmatprep.subr.mxu0 0.0
  %3026 = vmatpush1.msra.mxu0 0.0
  %3027 = vmatprep.subr.mxu0 0.0
  %3028 = vmatpush1.msra.mxu0 0.0
  %3029 = vmatprep.subr.mxu0 0.0
  %3030 = vmatpush1.msra.mxu0 0.0
  %3031 = vmatprep.subr.mxu0 0.0
  %3032 = vmatpush1.msra.mxu0 0.0
  %3033 = vmatprep.subr.mxu0 0.0
  %3034 = vmatpush1.msra.mxu0 0.0
  %3035 = vmatprep.subr.mxu0 0.0
  %3036 = vmatpush1.msra.mxu0 0.0
  %3037 = vmatprep.subr.mxu0 0.0
  %3038 = vmatpush1.msra.mxu0 0.0
  %3039 = vmatprep.subr.mxu0 0.0
  %3040 = vmatpush1.msra.mxu0 0.0
  %3041 = vmatprep.subr.mxu0 0.0
  %3042 = vmatpush1.msra.mxu0 0.0
  %3043 = vmatprep.subr.mxu0 0.0
  %3044 = vmatpush1.msra.mxu0 0.0
  %3045 = vmatprep.subr.mxu0 0.0
  %3046 = vmatpush1.msra.mxu0 0.0
  %3047 = vmatprep.mubr.f32.mxu0 0.0
  %3048 = vmatmul.mubr.f32.gmra.mrb[0].mxu0 %v2981
  %v3049 = vpop.f32.mrb[0].mxu0
  %v3050 = vadd.f32 0.0, %v3049
  %v3051 = vpop.f32.mrb[0].mxu0
  %3052 = vdwg.mxu0
  %3054 = vrot.lane.b32.xlu0 %v3050, 32
  %v3055 = vpop.permute.xlu0 %3054
  %v3057 = vadd.f32 %v446, %v3055
  %v3058 = vld [vmem:[%s21] sm:$0x1]
  %v3060 = vlaneseq
  %v3061 = vshrl.u32 %v3060, 7
  %v3062 = vsub.s32 0, %v3061
  %v3063 = vrot.slane %v3058, %v3062
  %3064 = vrot.lane.b32.xlu0 %v3063, 32
  %v3065 = vpop.permute.xlu0 %3064
  %v3067 = vadd.f32 %v3057, %v3065
  %v3069 = vsel %vm176, %v376, %v3067
  %vm3070 = vcmask 302080
  %v3071 = vsel %vm3070, %v3069, 0.0
  %3072 = vst [vmem:[%s24] sm:$0x3f] %v3071
  %3074 = vrot.lane.b32.xlu0 %v446, 59
  %v3075 = vpop.permute.xlu0 %3074
  %v3077 = vrot.slane %v446, 2
  %3078 = vrot.lane.b32.xlu0 %v3077, 91
  %v3079 = vpop.permute.xlu0 %3078
  %v3081 = vrot.slane %v446, 4
  %3082 = vrot.lane.b32.xlu0 %v3081, 123
  %v3083 = vpop.permute.xlu0 %3082
  %v3085 = vsel %vm176, %v3075, %v3079
  %vm3086 = vcmask 523264
  %v3087 = vsel %vm3086, %v3085, %v3083
  %3088 = vrot.lane.b32.xlu0 %v446, 91
  %v3089 = vpop.permute.xlu0 %3088
  %3091 = vrot.lane.b32.xlu0 %v446, 123
  %v3092 = vpop.permute.xlu0 %3091
  %3094 = vrot.lane.b32.xlu0 %v446, 27
  %v3095 = vpop.permute.xlu0 %3094
  %v3097 = vsel %vm176, %v3089, %v3092
  %v3098 = vsel %vm3086, %v3097, %v3095
  %v3100 = vrot.slane %v3087, 6
  %v3102 = vrot.slane %v3087, 4
  %vm3104 = vcmask 1041408
  %v3105 = vsel %vm3104, %v3087, %v3100
  %v3106 = vsel %vm2223, %v3105, %v3102
  %v3107 = vadd.f32 %v3098, %v3106
  %vm3108 = vcmp.gt.f32.partialorder %v3107, 0.0
  %v3109 = vmul.f32 %v3107, 0.01
  %v3110 = vsel %vm3108, %v3107, %v3109
  %v3111 = vld [vmem:[%s22] sm:$0xff]
  %v3112 = vld [vmem:[%s22 + $0x8] sm:$0xff]
  %v3113 = vld [vmem:[%s22 + $0x10] sm:$0xff]
  %v3114 = vld [vmem:[%s22 + $0x18] sm:$0xff]
  %v3115 = vld [vmem:[%s22 + $0x20] sm:$0xff]
  %v3116 = vld [vmem:[%s22 + $0x28] sm:$0xff]
  %v3117 = vld [vmem:[%s22 + $0x30] sm:$0xff]
  %v3118 = vld [vmem:[%s22 + $0x38] sm:$0xff]
  %v3119 = vld [vmem:[%s22 + $0x40] sm:$0xff]
  %v3120 = vld [vmem:[%s22 + $0x48] sm:$0xff]
  %v3121 = vld [vmem:[%s22 + $0x50] sm:$0xff]
  %v3122 = vld [vmem:[%s22 + $0x58] sm:$0xff]
  %v3123 = vld [vmem:[%s23] sm:$0x1]
  %v3125 = vlaneseq
  %v3126 = vshrl.u32 %v3125, 7
  %v3127 = vsub.s32 0, %v3126
  %v3128 = vrot.slane %v3123, %v3127
  %vm3130 = vcmask 785408
  %v3132 = vsel %vm3130, %v3110, 0
  %3134 = vmatprep.subr.mxu0 0.0
  %3135 = vmatpush1.msra.mxu0 %v3111
  %3136 = vmatprep.subr.mxu0 0.0
  %3137 = vmatpush1.msra.mxu0 %v3112
  %3138 = vmatprep.subr.mxu0 0.0
  %3139 = vmatpush1.msra.mxu0 %v3113
  %3140 = vmatprep.subr.mxu0 0.0
  %3141 = vmatpush1.msra.mxu0 %v3114
  %3142 = vmatprep.subr.mxu0 0.0
  %3143 = vmatpush1.msra.mxu0 %v3115
  %3144 = vmatprep.subr.mxu0 0.0
  %3145 = vmatpush1.msra.mxu0 %v3116
  %3146 = vmatprep.subr.mxu0 0.0
  %3147 = vmatpush1.msra.mxu0 %v3117
  %3148 = vmatprep.subr.mxu0 0.0
  %3149 = vmatpush1.msra.mxu0 %v3118
  %3150 = vmatprep.subr.mxu0 0.0
  %3151 = vmatpush1.msra.mxu0 %v3119
  %3152 = vmatprep.subr.mxu0 0.0
  %3153 = vmatpush1.msra.mxu0 %v3120
  %3154 = vmatprep.subr.mxu0 0.0
  %3155 = vmatpush1.msra.mxu0 %v3121
  %3156 = vmatprep.subr.mxu0 0.0
  %3157 = vmatpush1.msra.mxu0 %v3122
  %3158 = vmatprep.subr.mxu0 0.0
  %3159 = vmatpush1.msra.mxu0 0.0
  %3160 = vmatprep.subr.mxu0 0.0
  %3161 = vmatpush1.msra.mxu0 0.0
  %3162 = vmatprep.subr.mxu0 0.0
  %3163 = vmatpush1.msra.mxu0 0.0
  %3164 = vmatprep.subr.mxu0 0.0
  %3165 = vmatpush1.msra.mxu0 0.0
  %3166 = vmatprep.subr.mxu0 0.0
  %3167 = vmatpush1.msra.mxu0 0.0
  %3168 = vmatprep.subr.mxu0 0.0
  %3169 = vmatpush1.msra.mxu0 0.0
  %3170 = vmatprep.subr.mxu0 0.0
  %3171 = vmatpush1.msra.mxu0 0.0
  %3172 = vmatprep.subr.mxu0 0.0
  %3173 = vmatpush1.msra.mxu0 0.0
  %3174 = vmatprep.subr.mxu0 0.0
  %3175 = vmatpush1.msra.mxu0 0.0
  %3176 = vmatprep.subr.mxu0 0.0
  %3177 = vmatpush1.msra.mxu0 0.0
  %3178 = vmatprep.subr.mxu0 0.0
  %3179 = vmatpush1.msra.mxu0 0.0
  %3180 = vmatprep.subr.mxu0 0.0
  %3181 = vmatpush1.msra.mxu0 0.0
  %3182 = vmatprep.subr.mxu0 0.0
  %3183 = vmatpush1.msra.mxu0 0.0
  %3184 = vmatprep.subr.mxu0 0.0
  %3185 = vmatpush1.msra.mxu0 0.0
  %3186 = vmatprep.subr.mxu0 0.0
  %3187 = vmatpush1.msra.mxu0 0.0
  %3188 = vmatprep.subr.mxu0 0.0
  %3189 = vmatpush1.msra.mxu0 0.0
  %3190 = vmatprep.subr.mxu0 0.0
  %3191 = vmatpush1.msra.mxu0 0.0
  %3192 = vmatprep.subr.mxu0 0.0
  %3193 = vmatpush1.msra.mxu0 0.0
  %3194 = vmatprep.subr.mxu0 0.0
  %3195 = vmatpush1.msra.mxu0 0.0
  %3196 = vmatprep.subr.mxu0 0.0
  %3197 = vmatpush1.msra.mxu0 0.0
  %3198 = vmatprep.mubr.f32.mxu0 0.0
  %3199 = vmatmul.mubr.f32.gmra.mrb[0].mxu0 %v3132
  %v3200 = vpop.f32.mrb[0].mxu0
  %v3201 = vadd.f32 %v3128, %v3200
  %v3202 = vpop.f32.mrb[0].mxu0
  %3203 = vdwg.mxu0
  %v3204 = vmax.f32 %v3201, -6.214608
  %v3205 = vmul.f32 %v539, %v539
  %v3206 = vsub.f32 %v3204, %v536
  %v3207 = vmul.f32 %v3206, 0.5
  %v3208 = vsub.f32 %v533, %v3201
  %v3209 = vmul.f32 %v3208, %v3208
  %3211 = vrot.lane.b32.xlu0 %v3209, 24
  %v3212 = vpop.permute.xlu0 %3211
  %v3214 = vadd.f32 %v3205, %v3212
  %v3215 = vmul.f32 %v3214, 0.5
  %v3216 = vsub.f32 0.0, %v3204
  %v3217 = vmul.f32 %v3216, 1.442695
  %v3218 = vpow.pop %v3217
  %v3219 = vmul.f32 %v3215, %v3218
  %v3220 = vadd.f32 %v3207, %v3219
  %v3221 = vsub.f32 %v3220, 0.5
  %v3223 = vrot.slane %v3221, 2
  %v3225 = vadd.f32 %v3221, %v3223
  %v3226 = vrot.slane %v3221, 4
  %v3228 = vadd.f32 %v3225, %v3226
  %3230 = vrot.lane.b32.xlu0 %v3228, 104
  %v3231 = vpop.permute.xlu0 %3230
  %vm3233 = vcmask 189440
  %v3234 = vsel %vm3233, %v3231, 0.0
  %3235 = vadd.xlane.f32.xlu0 %v3234
  %v3236 = vpop.xlane.xlu0 %3235
  %v3237 = vmul.f32 %v3236, 0.013888889
  %3238 = vst [vmem:[%s25] sm:$0x3] %v3237
  // Predicated region
  $region98: #{linda_atten_forward.1} parent=0 // pred_check
    _
  $region99: #{linda_atten_forward.1} parent=0 // pred_check_branch
    %3240 = sbr.rel (0) target = $region101
  $region100: #{linda_atten_forward.1} parent=0 // pred_region
    _
  $region101: #{linda_atten_forward.1} parent=0 // pred_fallthru
    _
  // Predicated region
  $region102: #{linda_atten_forward.1} parent=0 // pred_check
    _
  $region103: #{linda_atten_forward.1} parent=0 // pred_check_branch
    %3242 = sbr.rel (0) target = $region105
  $region104: #{linda_atten_forward.1} parent=0 // pred_region
    _
  $region105: #{linda_atten_forward.1} parent=0 // pred_fallthru
    _
  // Predicated region
  $region106: #{linda_atten_forward.1} parent=0 // pred_check
    _
  $region107: #{linda_atten_forward.1} parent=0 // pred_check_branch
    %3244 = sbr.rel (0) target = $region109
  $region108: #{linda_atten_forward.1} parent=0 // pred_region
    _
  $region109: #{linda_atten_forward.1} parent=0 // pred_fallthru
    _
  // Predicated region
  $region110: #{linda_atten_forward.1} parent=0 // pred_check
    _
  $region111: #{linda_atten_forward.1} parent=0 // pred_check_branch
    %3246 = sbr.rel (0) target = $region113
  $region112: #{linda_atten_forward.1} parent=0 // pred_region
    _
  $region113: #{linda_atten_forward.1} parent=0 // pred_fallthru
    _

</llo_original>
